<compile_context>
chip_gen: v5e
topology: v5e:2x2
jax: 0.10.0
libtpu: 0.0.40
codegen_flags: <defaults>
</compile_context>

<pallas_src>
import functools

import jax
import jax.numpy as jnp
import numpy as np
from jax.experimental import pallas as pl
from jax.experimental.pallas import tpu as pltpu


# ------------------------------ Pallas kernel ------------------------------ #

def _fusion_kernel(x_ref, rmask_ref, cmask_ref,
                   w1_ref, dw1_ref, b1_ref, wf1_ref, bf1_ref,
                   w2_ref, dw2_ref, b2_ref, wf2_ref, bf2_ref,
                   o_ref, *, W, taps1, taps2):
    x = x_ref[...]                          # (C, L) f32, lane-dense
    L = x.shape[1]
    n_acc = 4 if L <= 512 else 2            # ILP vs. vreg pressure

    def mm(w_ref, a):
        # 1x1 conv == MXU matmul; bf16 operands (single-pass), f32 accumulate.
        return jnp.dot(w_ref[...].astype(jnp.bfloat16),
                       a.astype(jnp.bfloat16),
                       preferred_element_type=jnp.float32)

    def dw_conv(y, wd_ref, bias_ref, taps, relu):
        """Merged depthwise conv (BN scale pre-folded into wd) + bias (+ReLU).

        taps: static tuple of (dy, row_mask_idx, ((dx, col_mask_idx, col), ...)).
        Shifted views come from pltpu.roll on the flattened lane axis; the
        precomputed 0/1 float edge masks zero the out-of-image contributions
        (row mask applied once per dy BEFORE the dx roll, column mask after).
        """
        wd = wd_ref[...]                    # (C, T)
        accs = [jnp.zeros_like(y) for _ in range(n_acc)]
        t = 0
        for dy, rmi, cols in taps:          # outer: row offsets
            yr = y if dy == 0 else pltpu.roll(y, (-(dy * W)) % L, axis=1)
            if rmi >= 0:
                yr = yr * rmask_ref[rmi]
            for dx, cmi, col in cols:       # inner: column offsets
                v = yr if dx == 0 else pltpu.roll(yr, (-dx) % L, axis=1)
                if cmi >= 0:
                    v = v * cmask_ref[cmi]
                accs[t % n_acc] = accs[t % n_acc] + v * wd[:, col:col + 1]
                t += 1
        acc = accs[0]
        for a in accs[1:]:
            acc = acc + a
        z = acc + bias_ref[...]
        return jnp.maximum(z, 0.0) if relu else z

    # ---- stage 1: four DwConv branches (k=3/5/7/11) + fuse1 + residual ----
    d1 = dw_conv(mm(w1_ref, x), dw1_ref, b1_ref, taps1, relu=True)
    xm = x + jnp.maximum(mm(wf1_ref, d1) + bf1_ref[...], 0.0)

    # ---- stage 2: four dilated 3x3 DwConv branches + fuse + residual ----
    d2 = dw_conv(mm(w2_ref, xm), dw2_ref, b2_ref, taps2, relu=True)
    o_ref[...] = xm + (mm(wf2_ref, d2) + bf2_ref[...])


# ------------------------------ host wrapper ------------------------------- #

def _build_edge_masks(dys, dxs, L, H, W, C):
    """0/1 float tables: rmask[(i)] kills rows shifted in from outside the
    image for row offset dys[i]; cmask likewise for column offsets."""
    HW = H * W
    lane = np.arange(L)
    hh = (lane % HW) // W
    ww = lane % W

    def table(offsets, pos, limit):
        n = max(len(offsets), 1)
        t = np.ones((n, C, L), np.float32)
        for i, d in enumerate(offsets):
            valid = ((pos + d) >= 0) & ((pos + d) < limit)
            t[i, :, :] = valid.astype(np.float32)[None, :]
        return jnp.asarray(t)

    return table(dys, hh, H), table(dxs, ww, W)


def fusion_forward(x_nchw, packed):
    """Fused Fusion block.  x_nchw: (N, C, H, W) float32 (PyTorch layout)."""
    N, C, H, W = x_nchw.shape
    HW = H * W
    assert HW % 128 == 0, "lane-dense (C, N*H*W) layout wants H*W % 128 == 0"

    # Fold batch into the lane axis: (C, N*HW); channels -> sublanes.
    x_cl = jnp.transpose(x_nchw.reshape(N, C, HW), (1, 0, 2)).reshape(C, N * HW)

    # 2 balanced "parallel" blocks when the batch splits evenly (v7x: 2 TCs,
    # each block holds whole images so rolls never cross a block boundary);
    # otherwise one wide slab to amortize per-grid-step overhead.
    G = 2 if (N % 2 == 0 and N >= 2) else 1
    Lb = (N // G) * HW

    rmask, cmask = _build_edge_masks(packed["mask_dys"], packed["mask_dxs"],
                                     Lb, H, W, C)

    kern = functools.partial(_fusion_kernel, W=W,
                             taps1=packed["taps1"], taps2=packed["taps2"])

    wnames = ("w1", "dw1", "b1", "wf1", "bf1", "w2", "dw2", "b2", "wf2", "bf2")
    consts = [rmask, cmask] + [packed[n] for n in wnames]
    const_specs = [pl.BlockSpec(a.shape, lambda i, r=a.ndim: (0,) * r)
                   for a in consts]

    out = pl.pallas_call(
        kern,
        out_shape=jax.ShapeDtypeStruct((C, N * HW), jnp.float32),
        grid=(G,),
        in_specs=[pl.BlockSpec((C, Lb), lambda i: (0, i))] + const_specs,
        out_specs=pl.BlockSpec((C, Lb), lambda i: (0, i)),
        compiler_params=pltpu.CompilerParams(
            dimension_semantics=("parallel",),
            vmem_limit_bytes=32 * 1024 * 1024),
    )(x_cl, *consts)
    return jnp.transpose(out.reshape(C, N, HW), (1, 0, 2)).reshape(N, C, H, W)


# ------------------------- parameters & packing ---------------------------- #

def _init_dwconv_params(key, in_c, out_c, k):
    # Deterministic synthetic parameters.  All convs are bias-free (matches the
    # PyTorch module); BatchNorm is eval-mode (running stats) -> scale/shift.
    ks = jax.random.split(key, 6)
    w1 = 0.1 * jax.random.normal(ks[0], (out_c, in_c), jnp.float32)
    wd = 0.1 * jax.random.normal(ks[1], (out_c, k, k), jnp.float32)
    gamma = 1.0 + 0.1 * jax.random.normal(ks[2], (out_c,), jnp.float32)
    beta = 0.1 * jax.random.normal(ks[3], (out_c,), jnp.float32)
    mean = 0.1 * jax.random.normal(ks[4], (out_c,), jnp.float32)
    var = 1.0 + 0.1 * jnp.abs(jax.random.normal(ks[5], (out_c,), jnp.float32))
    scale = gamma / jnp.sqrt(var + 1e-5)
    return dict(w1=w1, wd=wd, scale=scale, shift=beta - mean * scale, k=k)


def init_fusion_params(key, in_channels, out_channels):
    assert in_channels % 4 == 0 and out_channels % 4 == 0
    assert in_channels == out_channels, "residual adds require in == out"
    h1, h2 = in_channels // 4, out_channels // 4
    ks = jax.random.split(key, 10)
    return {
        "dw3":   _init_dwconv_params(ks[0], in_channels, h1, 3),
        "dw5":   _init_dwconv_params(ks[1], in_channels, h1, 5),
        # NOTE: the reference module's "dw_conv9x9" is kernel_size=7, padding=3.
        "dw7":   _init_dwconv_params(ks[2], in_channels, h1, 7),
        "dw11":  _init_dwconv_params(ks[3], in_channels, h1, 11),
        "fuse1": _init_dwconv_params(ks[4], in_channels, out_channels, 1),
        "r1":    _init_dwconv_params(ks[5], out_channels, h2, 3),
        "r3":    _init_dwconv_params(ks[6], out_channels, h2, 3),
        "r7":    _init_dwconv_params(ks[7], out_channels, h2, 3),
        "r11":   _init_dwconv_params(ks[8], out_channels, h2, 3),
        "fuse":  _init_dwconv_params(ks[9], out_channels, out_channels, 1),
    }


_DILS2 = (1, 3, 7, 11)      # stage-2 3x3 dilations (padding == dilation)


def _add_branch_taps(tapdict, prm, c_off, c_total, dil):
    """Accumulate one depthwise branch's BN-scale-folded taps into tapdict."""
    wd = np.asarray(prm["wd"]) * np.asarray(prm["scale"])[:, None, None]
    c, k, _ = wd.shape
    r = k // 2
    for ky in range(k):
        for kx in range(k):
            key = ((ky - r) * dil, (kx - r) * dil)
            col = tapdict.setdefault(key, np.zeros((c_total,), np.float32))
            col[c_off:c_off + c] += wd[:, ky, kx]
    return c_off + c


def _build_tap_tables(tapdict, c_total, dy_idx, dx_idx):
    keys = sorted(tapdict.keys())
    wd = np.zeros((c_total, len(keys)), np.float32)
    by_dy = {}
    for col, (dy, dx) in enumerate(keys):
        wd[:, col] = tapdict[(dy, dx)]
        by_dy.setdefault(dy, []).append((dx, dx_idx.get(dx, -1), col))
    taps = tuple((dy, dy_idx.get(dy, -1), tuple(v))
                 for dy, v in sorted(by_dy.items()))
    return jnp.asarray(wd), taps


def _fold_1x1_dwconv(prm):
    # DwConv with kernel_size=1: depthwise 1x1 == per-channel scale -> fold
    # (wd * bn_scale) into the 1x1 weight rows; bias is the BN shift.
    g = np.asarray(prm["wd"]).reshape(-1) * np.asarray(prm["scale"])
    return jnp.asarray(np.asarray(prm["w1"]) * g[:, None]), prm["shift"][:, None]


def pack_fusion_params(p):
    packed = {}
    # ---- stage 1: batch the four branch 1x1s; merge k=3/5/7/11 taps ----
    br1 = [p["dw3"], p["dw5"], p["dw7"], p["dw11"]]
    c1 = sum(int(b["wd"].shape[0]) for b in br1)
    packed["w1"] = jnp.concatenate([b["w1"] for b in br1], axis=0)
    packed["b1"] = jnp.concatenate([b["shift"] for b in br1])[:, None]
    taps1, off = {}, 0
    for b in br1:
        off = _add_branch_taps(taps1, b, off, c1, dil=1)

    # ---- stage 2: four dilated 3x3 branches; merge taps per (dy, dx) ----
    br2 = [p["r1"], p["r3"], p["r7"], p["r11"]]
    c2 = sum(int(b["wd"].shape[0]) for b in br2)
    packed["w2"] = jnp.concatenate([b["w1"] for b in br2], axis=0)
    packed["b2"] = jnp.concatenate([b["shift"] for b in br2])[:, None]
    taps2, off = {}, 0
    for b, d in zip(br2, _DILS2):
        off = _add_branch_taps(taps2, b, off, c2, dil=d)

    # global edge-mask row indices shared by both stages
    dys = sorted({dy for td in (taps1, taps2) for (dy, _dx) in td if dy != 0})
    dxs = sorted({dx for td in (taps1, taps2) for (_dy, dx) in td if dx != 0})
    dy_idx = {v: i for i, v in enumerate(dys)}
    dx_idx = {v: i for i, v in enumerate(dxs)}
    packed["mask_dys"], packed["mask_dxs"] = tuple(dys), tuple(dxs)

    packed["dw1"], packed["taps1"] = _build_tap_tables(taps1, c1, dy_idx, dx_idx)
    packed["dw2"], packed["taps2"] = _build_tap_tables(taps2, c2, dy_idx, dx_idx)

    packed["wf1"], packed["bf1"] = _fold_1x1_dwconv(p["fuse1"])
    packed["wf2"], packed["bf2"] = _fold_1x1_dwconv(p["fuse"])
    return packed


# ------------------------ pure-JAX reference (XLA) -------------------------- #

def _ref_dwconv(x, prm, pad, dil, act):
    y = jnp.einsum("oi,nihw->nohw", prm["w1"], x)
    y = jax.lax.conv_general_dilated(
        y, prm["wd"][:, None, :, :], window_strides=(1, 1),
        padding=[(pad, pad), (pad, pad)], rhs_dilation=(dil, dil),
        dimension_numbers=("NCHW", "OIHW", "NCHW"),
        feature_group_count=y.shape[1])
    y = y * prm["scale"][None, :, None, None] + prm["shift"][None, :, None, None]
    return jnp.maximum(y, 0.0) if act else y


def fusion_reference(x, p):
    x1 = _ref_dwconv(x, p["dw3"], 1, 1, True)
    x2 = _ref_dwconv(x, p["dw5"], 2, 1, True)
    x3 = _ref_dwconv(x, p["dw7"], 3, 1, True)
    x4 = _ref_dwconv(x, p["dw11"], 5, 1, True)
    x = x + _ref_dwconv(jnp.concatenate([x1, x2, x3, x4], axis=1),
                        p["fuse1"], 0, 1, True)
    x5 = _ref_dwconv(x, p["r1"], 1, 1, True)
    x6 = _ref_dwconv(x, p["r3"], 3, 3, True)
    x7 = _ref_dwconv(x, p["r7"], 7, 7, True)
    x8 = _ref_dwconv(x, p["r11"], 11, 11, True)
    return x + _ref_dwconv(jnp.concatenate([x5, x6, x7, x8], axis=1),
                           p["fuse"], 0, 1, False)


if __name__ == "__main__":
    key = jax.random.PRNGKey(0)
    k_x, k_p = jax.random.split(key)
    # Residual adds in Fusion require in_channels == out_channels.
    N, C, H, W = 2, 8, 16, 16
    x = jax.random.normal(k_x, (N, C, H, W), jnp.float32)   # NCHW, PyTorch layout

    raw = init_fusion_params(k_p, C, C)
    packed = pack_fusion_params(raw)

    out = jax.block_until_ready(fusion_forward(x, packed))
    assert out.shape == (N, C, H, W)
    assert bool(jnp.all(jnp.isfinite(out)))

    # Correctness check against a pure-JAX/XLA reference of the PyTorch forward
    # (tolerance covers bf16-class MXU matmul precision on TPU).
    ref = jax.block_until_ready(fusion_reference(x, raw))
    np.testing.assert_allclose(np.asarray(out), np.asarray(ref),
                               rtol=2e-2, atol=2e-2)
    print("KERNEL_OK")
</pallas_src>

<mosaic_0001>
module attributes {stable_mosaic.version = 11 : i64} {
  func.func @_fusion_kernel(%arg0: i32, %arg1: memref<8x256xf32, #tpu.memory_space<vmem>>, %arg2: memref<14x8x256xf32, #tpu.memory_space<vmem>>, %arg3: memref<14x8x256xf32, #tpu.memory_space<vmem>>, %arg4: memref<8x8xf32, #tpu.memory_space<vmem>>, %arg5: memref<8x121xf32, #tpu.memory_space<vmem>>, %arg6: memref<8x1xf32, #tpu.memory_space<vmem>>, %arg7: memref<8x8xf32, #tpu.memory_space<vmem>>, %arg8: memref<8x1xf32, #tpu.memory_space<vmem>>, %arg9: memref<8x8xf32, #tpu.memory_space<vmem>>, %arg10: memref<8x33xf32, #tpu.memory_space<vmem>>, %arg11: memref<8x1xf32, #tpu.memory_space<vmem>>, %arg12: memref<8x8xf32, #tpu.memory_space<vmem>>, %arg13: memref<8x1xf32, #tpu.memory_space<vmem>>, %arg14: memref<8x256xf32, #tpu.memory_space<vmem>>) attributes {dimension_semantics = [#tpu.dimension_semantics<parallel>], iteration_bounds = array<i64: 2>, scalar_prefetch = 0 : i64, scratch_operands = 0 : i64, tpu.core_type = #tpu.core_type<tc>, window_params = [{transform_indices = @transform_0, window_bounds = array<i64: 8, 256>}, {pipeline_mode = #tpu.pipeline_mode<synchronous>, transform_indices = @transform_1, window_bounds = array<i64: 14, 8, 256>}, {pipeline_mode = #tpu.pipeline_mode<synchronous>, transform_indices = @transform_2, window_bounds = array<i64: 14, 8, 256>}, {pipeline_mode = #tpu.pipeline_mode<synchronous>, transform_indices = @transform_3, window_bounds = array<i64: 8, 8>}, {pipeline_mode = #tpu.pipeline_mode<synchronous>, transform_indices = @transform_4, window_bounds = array<i64: 8, 121>}, {pipeline_mode = #tpu.pipeline_mode<synchronous>, transform_indices = @transform_5, window_bounds = array<i64: 8, 1>}, {pipeline_mode = #tpu.pipeline_mode<synchronous>, transform_indices = @transform_6, window_bounds = array<i64: 8, 8>}, {pipeline_mode = #tpu.pipeline_mode<synchronous>, transform_indices = @transform_7, window_bounds = array<i64: 8, 1>}, {pipeline_mode = #tpu.pipeline_mode<synchronous>, transform_indices = @transform_8, window_bounds = array<i64: 8, 8>}, {pipeline_mode = #tpu.pipeline_mode<synchronous>, transform_indices = @transform_9, window_bounds = array<i64: 8, 33>}, {pipeline_mode = #tpu.pipeline_mode<synchronous>, transform_indices = @transform_10, window_bounds = array<i64: 8, 1>}, {pipeline_mode = #tpu.pipeline_mode<synchronous>, transform_indices = @transform_11, window_bounds = array<i64: 8, 8>}, {pipeline_mode = #tpu.pipeline_mode<synchronous>, transform_indices = @transform_12, window_bounds = array<i64: 8, 1>}, {transform_indices = @transform_13, window_bounds = array<i64: 8, 256>}]} {
    %c0 = arith.constant 0 : index
    %c0_0 = arith.constant 0 : index
    %0 = vector.load %arg1[%c0, %c0_0] : memref<8x256xf32, #tpu.memory_space<vmem>>, vector<8x256xf32>
    %c0_1 = arith.constant 0 : index
    %c0_2 = arith.constant 0 : index
    %1 = vector.load %arg4[%c0_1, %c0_2] : memref<8x8xf32, #tpu.memory_space<vmem>>, vector<8x8xf32>
    %2 = arith.truncf %1 : vector<8x8xf32> to vector<8x8xbf16>
    %3 = arith.truncf %0 : vector<8x256xf32> to vector<8x256xbf16>
    %cst = arith.constant dense<0.000000e+00> : vector<8x256xf32>
    %4 = tpu.matmul %2, %3, %cst {dimension_numbers = #tpu.dot_dimension_numbers<[1], [0], [0], [1], [0, 0, 1, 1], [], []>} : vector<8x8xbf16>, vector<8x256xbf16>, vector<8x256xf32> -> vector<8x256xf32>
    %c0_3 = arith.constant 0 : index
    %c0_4 = arith.constant 0 : index
    %5 = vector.load %arg5[%c0_3, %c0_4] : memref<8x121xf32, #tpu.memory_space<vmem>>, vector<8x121xf32>
    %cst_5 = arith.constant 0.000000e+00 : f32
    %6 = vector.broadcast %cst_5 : f32 to vector<8x256xf32>
    %cst_6 = arith.constant 0.000000e+00 : f32
    %7 = vector.broadcast %cst_6 : f32 to vector<8x256xf32>
    %cst_7 = arith.constant 0.000000e+00 : f32
    %8 = vector.broadcast %cst_7 : f32 to vector<8x256xf32>
    %cst_8 = arith.constant 0.000000e+00 : f32
    %9 = vector.broadcast %cst_8 : f32 to vector<8x256xf32>
    %c80_i32 = arith.constant 80 : i32
    %10 = tpu.dynamic_rotate %4 by %c80_i32 dim 1 : vector<8x256xf32>, i32 -> vector<8x256xf32>
    %c2 = arith.constant 2 : index
    %c0_9 = arith.constant 0 : index
    %c0_10 = arith.constant 0 : index
    %11 = vector.load %arg2[%c2, %c0_9, %c0_10] : memref<14x8x256xf32, #tpu.memory_space<vmem>>, vector<1x8x256xf32>
    %12 = vector.shape_cast %11 : vector<1x8x256xf32> to vector<8x256xf32>
    %13 = arith.mulf %10, %12 : vector<8x256xf32>
    %c5_i32 = arith.constant 5 : i32
    %14 = tpu.dynamic_rotate %13 by %c5_i32 dim 1 : vector<8x256xf32>, i32 -> vector<8x256xf32>
    %c2_11 = arith.constant 2 : index
    %c0_12 = arith.constant 0 : index
    %c0_13 = arith.constant 0 : index
    %15 = vector.load %arg3[%c2_11, %c0_12, %c0_13] : memref<14x8x256xf32, #tpu.memory_space<vmem>>, vector<1x8x256xf32>
    %16 = vector.shape_cast %15 : vector<1x8x256xf32> to vector<8x256xf32>
    %17 = arith.mulf %14, %16 : vector<8x256xf32>
    %18 = vector.extract_strided_slice %5 {offsets = [0, 0], sizes = [8, 1], strides = [1, 1]} : vector<8x121xf32> to vector<8x1xf32>
    %19 = vector.broadcast %18 : vector<8x1xf32> to vector<8x256xf32>
    %20 = arith.mulf %17, %19 : vector<8x256xf32>
    %21 = arith.addf %6, %20 : vector<8x256xf32>
    %c4_i32 = arith.constant 4 : i32
    %22 = tpu.dynamic_rotate %13 by %c4_i32 dim 1 : vector<8x256xf32>, i32 -> vector<8x256xf32>
    %c3 = arith.constant 3 : index
    %c0_14 = arith.constant 0 : index
    %c0_15 = arith.constant 0 : index
    %23 = vector.load %arg3[%c3, %c0_14, %c0_15] : memref<14x8x256xf32, #tpu.memory_space<vmem>>, vector<1x8x256xf32>
    %24 = vector.shape_cast %23 : vector<1x8x256xf32> to vector<8x256xf32>
    %25 = arith.mulf %22, %24 : vector<8x256xf32>
    %26 = vector.extract_strided_slice %5 {offsets = [0, 1], sizes = [8, 1], strides = [1, 1]} : vector<8x121xf32> to vector<8x1xf32>
    %27 = vector.broadcast %26 : vector<8x1xf32> to vector<8x256xf32>
    %28 = arith.mulf %25, %27 : vector<8x256xf32>
    %29 = arith.addf %7, %28 : vector<8x256xf32>
    %c3_i32 = arith.constant 3 : i32
    %30 = tpu.dynamic_rotate %13 by %c3_i32 dim 1 : vector<8x256xf32>, i32 -> vector<8x256xf32>
    %c4 = arith.constant 4 : index
    %c0_16 = arith.constant 0 : index
    %c0_17 = arith.constant 0 : index
    %31 = vector.load %arg3[%c4, %c0_16, %c0_17] : memref<14x8x256xf32, #tpu.memory_space<vmem>>, vector<1x8x256xf32>
    %32 = vector.shape_cast %31 : vector<1x8x256xf32> to vector<8x256xf32>
    %33 = arith.mulf %30, %32 : vector<8x256xf32>
    %34 = vector.extract_strided_slice %5 {offsets = [0, 2], sizes = [8, 1], strides = [1, 1]} : vector<8x121xf32> to vector<8x1xf32>
    %35 = vector.broadcast %34 : vector<8x1xf32> to vector<8x256xf32>
    %36 = arith.mulf %33, %35 : vector<8x256xf32>
    %37 = arith.addf %8, %36 : vector<8x256xf32>
    %c2_i32 = arith.constant 2 : i32
    %38 = tpu.dynamic_rotate %13 by %c2_i32 dim 1 : vector<8x256xf32>, i32 -> vector<8x256xf32>
    %c5 = arith.constant 5 : index
    %c0_18 = arith.constant 0 : index
    %c0_19 = arith.constant 0 : index
    %39 = vector.load %arg3[%c5, %c0_18, %c0_19] : memref<14x8x256xf32, #tpu.memory_space<vmem>>, vector<1x8x256xf32>
    %40 = vector.shape_cast %39 : vector<1x8x256xf32> to vector<8x256xf32>
    %41 = arith.mulf %38, %40 : vector<8x256xf32>
    %42 = vector.extract_strided_slice %5 {offsets = [0, 3], sizes = [8, 1], strides = [1, 1]} : vector<8x121xf32> to vector<8x1xf32>
    %43 = vector.broadcast %42 : vector<8x1xf32> to vector<8x256xf32>
    %44 = arith.mulf %41, %43 : vector<8x256xf32>
    %45 = arith.addf %9, %44 : vector<8x256xf32>
    %c1_i32 = arith.constant 1 : i32
    %46 = tpu.dynamic_rotate %13 by %c1_i32 dim 1 : vector<8x256xf32>, i32 -> vector<8x256xf32>
    %c6 = arith.constant 6 : index
    %c0_20 = arith.constant 0 : index
    %c0_21 = arith.constant 0 : index
    %47 = vector.load %arg3[%c6, %c0_20, %c0_21] : memref<14x8x256xf32, #tpu.memory_space<vmem>>, vector<1x8x256xf32>
    %48 = vector.shape_cast %47 : vector<1x8x256xf32> to vector<8x256xf32>
    %49 = arith.mulf %46, %48 : vector<8x256xf32>
    %50 = vector.extract_strided_slice %5 {offsets = [0, 4], sizes = [8, 1], strides = [1, 1]} : vector<8x121xf32> to vector<8x1xf32>
    %51 = vector.broadcast %50 : vector<8x1xf32> to vector<8x256xf32>
    %52 = arith.mulf %49, %51 : vector<8x256xf32>
    %53 = arith.addf %21, %52 : vector<8x256xf32>
    %54 = vector.extract_strided_slice %5 {offsets = [0, 5], sizes = [8, 1], strides = [1, 1]} : vector<8x121xf32> to vector<8x1xf32>
    %55 = vector.broadcast %54 : vector<8x1xf32> to vector<8x256xf32>
    %56 = arith.mulf %13, %55 : vector<8x256xf32>
    %57 = arith.addf %29, %56 : vector<8x256xf32>
    %c255_i32 = arith.constant 255 : i32
    %58 = tpu.dynamic_rotate %13 by %c255_i32 dim 1 : vector<8x256xf32>, i32 -> vector<8x256xf32>
    %c7 = arith.constant 7 : index
    %c0_22 = arith.constant 0 : index
    %c0_23 = arith.constant 0 : index
    %59 = vector.load %arg3[%c7, %c0_22, %c0_23] : memref<14x8x256xf32, #tpu.memory_space<vmem>>, vector<1x8x256xf32>
    %60 = vector.shape_cast %59 : vector<1x8x256xf32> to vector<8x256xf32>
    %61 = arith.mulf %58, %60 : vector<8x256xf32>
    %62 = vector.extract_strided_slice %5 {offsets = [0, 6], sizes = [8, 1], strides = [1, 1]} : vector<8x121xf32> to vector<8x1xf32>
    %63 = vector.broadcast %62 : vector<8x1xf32> to vector<8x256xf32>
    %64 = arith.mulf %61, %63 : vector<8x256xf32>
    %65 = arith.addf %37, %64 : vector<8x256xf32>
    %c254_i32 = arith.constant 254 : i32
    %66 = tpu.dynamic_rotate %13 by %c254_i32 dim 1 : vector<8x256xf32>, i32 -> vector<8x256xf32>
    %c8 = arith.constant 8 : index
    %c0_24 = arith.constant 0 : index
    %c0_25 = arith.constant 0 : index
    %67 = vector.load %arg3[%c8, %c0_24, %c0_25] : memref<14x8x256xf32, #tpu.memory_space<vmem>>, vector<1x8x256xf32>
    %68 = vector.shape_cast %67 : vector<1x8x256xf32> to vector<8x256xf32>
    %69 = arith.mulf %66, %68 : vector<8x256xf32>
    %70 = vector.extract_strided_slice %5 {offsets = [0, 7], sizes = [8, 1], strides = [1, 1]} : vector<8x121xf32> to vector<8x1xf32>
    %71 = vector.broadcast %70 : vector<8x1xf32> to vector<8x256xf32>
    %72 = arith.mulf %69, %71 : vector<8x256xf32>
    %73 = arith.addf %45, %72 : vector<8x256xf32>
    %c253_i32 = arith.constant 253 : i32
    %74 = tpu.dynamic_rotate %13 by %c253_i32 dim 1 : vector<8x256xf32>, i32 -> vector<8x256xf32>
    %c9 = arith.constant 9 : index
    %c0_26 = arith.constant 0 : index
    %c0_27 = arith.constant 0 : index
    %75 = vector.load %arg3[%c9, %c0_26, %c0_27] : memref<14x8x256xf32, #tpu.memory_space<vmem>>, vector<1x8x256xf32>
    %76 = vector.shape_cast %75 : vector<1x8x256xf32> to vector<8x256xf32>
    %77 = arith.mulf %74, %76 : vector<8x256xf32>
    %78 = vector.extract_strided_slice %5 {offsets = [0, 8], sizes = [8, 1], strides = [1, 1]} : vector<8x121xf32> to vector<8x1xf32>
    %79 = vector.broadcast %78 : vector<8x1xf32> to vector<8x256xf32>
    %80 = arith.mulf %77, %79 : vector<8x256xf32>
    %81 = arith.addf %53, %80 : vector<8x256xf32>
    %c252_i32 = arith.constant 252 : i32
    %82 = tpu.dynamic_rotate %13 by %c252_i32 dim 1 : vector<8x256xf32>, i32 -> vector<8x256xf32>
    %c10 = arith.constant 10 : index
    %c0_28 = arith.constant 0 : index
    %c0_29 = arith.constant 0 : index
    %83 = vector.load %arg3[%c10, %c0_28, %c0_29] : memref<14x8x256xf32, #tpu.memory_space<vmem>>, vector<1x8x256xf32>
    %84 = vector.shape_cast %83 : vector<1x8x256xf32> to vector<8x256xf32>
    %85 = arith.mulf %82, %84 : vector<8x256xf32>
    %86 = vector.extract_strided_slice %5 {offsets = [0, 9], sizes = [8, 1], strides = [1, 1]} : vector<8x121xf32> to vector<8x1xf32>
    %87 = vector.broadcast %86 : vector<8x1xf32> to vector<8x256xf32>
    %88 = arith.mulf %85, %87 : vector<8x256xf32>
    %89 = arith.addf %57, %88 : vector<8x256xf32>
    %c251_i32 = arith.constant 251 : i32
    %90 = tpu.dynamic_rotate %13 by %c251_i32 dim 1 : vector<8x256xf32>, i32 -> vector<8x256xf32>
    %c11 = arith.constant 11 : index
    %c0_30 = arith.constant 0 : index
    %c0_31 = arith.constant 0 : index
    %91 = vector.load %arg3[%c11, %c0_30, %c0_31] : memref<14x8x256xf32, #tpu.memory_space<vmem>>, vector<1x8x256xf32>
    %92 = vector.shape_cast %91 : vector<1x8x256xf32> to vector<8x256xf32>
    %93 = arith.mulf %90, %92 : vector<8x256xf32>
    %94 = vector.extract_strided_slice %5 {offsets = [0, 10], sizes = [8, 1], strides = [1, 1]} : vector<8x121xf32> to vector<8x1xf32>
    %95 = vector.broadcast %94 : vector<8x1xf32> to vector<8x256xf32>
    %96 = arith.mulf %93, %95 : vector<8x256xf32>
    %97 = arith.addf %65, %96 : vector<8x256xf32>
    %c64_i32 = arith.constant 64 : i32
    %98 = tpu.dynamic_rotate %4 by %c64_i32 dim 1 : vector<8x256xf32>, i32 -> vector<8x256xf32>
    %c3_32 = arith.constant 3 : index
    %c0_33 = arith.constant 0 : index
    %c0_34 = arith.constant 0 : index
    %99 = vector.load %arg2[%c3_32, %c0_33, %c0_34] : memref<14x8x256xf32, #tpu.memory_space<vmem>>, vector<1x8x256xf32>
    %100 = vector.shape_cast %99 : vector<1x8x256xf32> to vector<8x256xf32>
    %101 = arith.mulf %98, %100 : vector<8x256xf32>
    %c5_i32_35 = arith.constant 5 : i32
    %102 = tpu.dynamic_rotate %101 by %c5_i32_35 dim 1 : vector<8x256xf32>, i32 -> vector<8x256xf32>
    %c2_36 = arith.constant 2 : index
    %c0_37 = arith.constant 0 : index
    %c0_38 = arith.constant 0 : index
    %103 = vector.load %arg3[%c2_36, %c0_37, %c0_38] : memref<14x8x256xf32, #tpu.memory_space<vmem>>, vector<1x8x256xf32>
    %104 = vector.shape_cast %103 : vector<1x8x256xf32> to vector<8x256xf32>
    %105 = arith.mulf %102, %104 : vector<8x256xf32>
    %106 = vector.extract_strided_slice %5 {offsets = [0, 11], sizes = [8, 1], strides = [1, 1]} : vector<8x121xf32> to vector<8x1xf32>
    %107 = vector.broadcast %106 : vector<8x1xf32> to vector<8x256xf32>
    %108 = arith.mulf %105, %107 : vector<8x256xf32>
    %109 = arith.addf %73, %108 : vector<8x256xf32>
    %c4_i32_39 = arith.constant 4 : i32
    %110 = tpu.dynamic_rotate %101 by %c4_i32_39 dim 1 : vector<8x256xf32>, i32 -> vector<8x256xf32>
    %c3_40 = arith.constant 3 : index
    %c0_41 = arith.constant 0 : index
    %c0_42 = arith.constant 0 : index
    %111 = vector.load %arg3[%c3_40, %c0_41, %c0_42] : memref<14x8x256xf32, #tpu.memory_space<vmem>>, vector<1x8x256xf32>
    %112 = vector.shape_cast %111 : vector<1x8x256xf32> to vector<8x256xf32>
    %113 = arith.mulf %110, %112 : vector<8x256xf32>
    %114 = vector.extract_strided_slice %5 {offsets = [0, 12], sizes = [8, 1], strides = [1, 1]} : vector<8x121xf32> to vector<8x1xf32>
    %115 = vector.broadcast %114 : vector<8x1xf32> to vector<8x256xf32>
    %116 = arith.mulf %113, %115 : vector<8x256xf32>
    %117 = arith.addf %81, %116 : vector<8x256xf32>
    %c3_i32_43 = arith.constant 3 : i32
    %118 = tpu.dynamic_rotate %101 by %c3_i32_43 dim 1 : vector<8x256xf32>, i32 -> vector<8x256xf32>
    %c4_44 = arith.constant 4 : index
    %c0_45 = arith.constant 0 : index
    %c0_46 = arith.constant 0 : index
    %119 = vector.load %arg3[%c4_44, %c0_45, %c0_46] : memref<14x8x256xf32, #tpu.memory_space<vmem>>, vector<1x8x256xf32>
    %120 = vector.shape_cast %119 : vector<1x8x256xf32> to vector<8x256xf32>
    %121 = arith.mulf %118, %120 : vector<8x256xf32>
    %122 = vector.extract_strided_slice %5 {offsets = [0, 13], sizes = [8, 1], strides = [1, 1]} : vector<8x121xf32> to vector<8x1xf32>
    %123 = vector.broadcast %122 : vector<8x1xf32> to vector<8x256xf32>
    %124 = arith.mulf %121, %123 : vector<8x256xf32>
    %125 = arith.addf %89, %124 : vector<8x256xf32>
    %c2_i32_47 = arith.constant 2 : i32
    %126 = tpu.dynamic_rotate %101 by %c2_i32_47 dim 1 : vector<8x256xf32>, i32 -> vector<8x256xf32>
    %c5_48 = arith.constant 5 : index
    %c0_49 = arith.constant 0 : index
    %c0_50 = arith.constant 0 : index
    %127 = vector.load %arg3[%c5_48, %c0_49, %c0_50] : memref<14x8x256xf32, #tpu.memory_space<vmem>>, vector<1x8x256xf32>
    %128 = vector.shape_cast %127 : vector<1x8x256xf32> to vector<8x256xf32>
    %129 = arith.mulf %126, %128 : vector<8x256xf32>
    %130 = vector.extract_strided_slice %5 {offsets = [0, 14], sizes = [8, 1], strides = [1, 1]} : vector<8x121xf32> to vector<8x1xf32>
    %131 = vector.broadcast %130 : vector<8x1xf32> to vector<8x256xf32>
    %132 = arith.mulf %129, %131 : vector<8x256xf32>
    %133 = arith.addf %97, %132 : vector<8x256xf32>
    %c1_i32_51 = arith.constant 1 : i32
    %134 = tpu.dynamic_rotate %101 by %c1_i32_51 dim 1 : vector<8x256xf32>, i32 -> vector<8x256xf32>
    %c6_52 = arith.constant 6 : index
    %c0_53 = arith.constant 0 : index
    %c0_54 = arith.constant 0 : index
    %135 = vector.load %arg3[%c6_52, %c0_53, %c0_54] : memref<14x8x256xf32, #tpu.memory_space<vmem>>, vector<1x8x256xf32>
    %136 = vector.shape_cast %135 : vector<1x8x256xf32> to vector<8x256xf32>
    %137 = arith.mulf %134, %136 : vector<8x256xf32>
    %138 = vector.extract_strided_slice %5 {offsets = [0, 15], sizes = [8, 1], strides = [1, 1]} : vector<8x121xf32> to vector<8x1xf32>
    %139 = vector.broadcast %138 : vector<8x1xf32> to vector<8x256xf32>
    %140 = arith.mulf %137, %139 : vector<8x256xf32>
    %141 = arith.addf %109, %140 : vector<8x256xf32>
    %142 = vector.extract_strided_slice %5 {offsets = [0, 16], sizes = [8, 1], strides = [1, 1]} : vector<8x121xf32> to vector<8x1xf32>
    %143 = vector.broadcast %142 : vector<8x1xf32> to vector<8x256xf32>
    %144 = arith.mulf %101, %143 : vector<8x256xf32>
    %145 = arith.addf %117, %144 : vector<8x256xf32>
    %c255_i32_55 = arith.constant 255 : i32
    %146 = tpu.dynamic_rotate %101 by %c255_i32_55 dim 1 : vector<8x256xf32>, i32 -> vector<8x256xf32>
    %c7_56 = arith.constant 7 : index
    %c0_57 = arith.constant 0 : index
    %c0_58 = arith.constant 0 : index
    %147 = vector.load %arg3[%c7_56, %c0_57, %c0_58] : memref<14x8x256xf32, #tpu.memory_space<vmem>>, vector<1x8x256xf32>
    %148 = vector.shape_cast %147 : vector<1x8x256xf32> to vector<8x256xf32>
    %149 = arith.mulf %146, %148 : vector<8x256xf32>
    %150 = vector.extract_strided_slice %5 {offsets = [0, 17], sizes = [8, 1], strides = [1, 1]} : vector<8x121xf32> to vector<8x1xf32>
    %151 = vector.broadcast %150 : vector<8x1xf32> to vector<8x256xf32>
    %152 = arith.mulf %149, %151 : vector<8x256xf32>
    %153 = arith.addf %125, %152 : vector<8x256xf32>
    %c254_i32_59 = arith.constant 254 : i32
    %154 = tpu.dynamic_rotate %101 by %c254_i32_59 dim 1 : vector<8x256xf32>, i32 -> vector<8x256xf32>
    %c8_60 = arith.constant 8 : index
    %c0_61 = arith.constant 0 : index
    %c0_62 = arith.constant 0 : index
    %155 = vector.load %arg3[%c8_60, %c0_61, %c0_62] : memref<14x8x256xf32, #tpu.memory_space<vmem>>, vector<1x8x256xf32>
    %156 = vector.shape_cast %155 : vector<1x8x256xf32> to vector<8x256xf32>
    %157 = arith.mulf %154, %156 : vector<8x256xf32>
    %158 = vector.extract_strided_slice %5 {offsets = [0, 18], sizes = [8, 1], strides = [1, 1]} : vector<8x121xf32> to vector<8x1xf32>
    %159 = vector.broadcast %158 : vector<8x1xf32> to vector<8x256xf32>
    %160 = arith.mulf %157, %159 : vector<8x256xf32>
    %161 = arith.addf %133, %160 : vector<8x256xf32>
    %c253_i32_63 = arith.constant 253 : i32
    %162 = tpu.dynamic_rotate %101 by %c253_i32_63 dim 1 : vector<8x256xf32>, i32 -> vector<8x256xf32>
    %c9_64 = arith.constant 9 : index
    %c0_65 = arith.constant 0 : index
    %c0_66 = arith.constant 0 : index
    %163 = vector.load %arg3[%c9_64, %c0_65, %c0_66] : memref<14x8x256xf32, #tpu.memory_space<vmem>>, vector<1x8x256xf32>
    %164 = vector.shape_cast %163 : vector<1x8x256xf32> to vector<8x256xf32>
    %165 = arith.mulf %162, %164 : vector<8x256xf32>
    %166 = vector.extract_strided_slice %5 {offsets = [0, 19], sizes = [8, 1], strides = [1, 1]} : vector<8x121xf32> to vector<8x1xf32>
    %167 = vector.broadcast %166 : vector<8x1xf32> to vector<8x256xf32>
    %168 = arith.mulf %165, %167 : vector<8x256xf32>
    %169 = arith.addf %141, %168 : vector<8x256xf32>
    %c252_i32_67 = arith.constant 252 : i32
    %170 = tpu.dynamic_rotate %101 by %c252_i32_67 dim 1 : vector<8x256xf32>, i32 -> vector<8x256xf32>
    %c10_68 = arith.constant 10 : index
    %c0_69 = arith.constant 0 : index
    %c0_70 = arith.constant 0 : index
    %171 = vector.load %arg3[%c10_68, %c0_69, %c0_70] : memref<14x8x256xf32, #tpu.memory_space<vmem>>, vector<1x8x256xf32>
    %172 = vector.shape_cast %171 : vector<1x8x256xf32> to vector<8x256xf32>
    %173 = arith.mulf %170, %172 : vector<8x256xf32>
    %174 = vector.extract_strided_slice %5 {offsets = [0, 20], sizes = [8, 1], strides = [1, 1]} : vector<8x121xf32> to vector<8x1xf32>
    %175 = vector.broadcast %174 : vector<8x1xf32> to vector<8x256xf32>
    %176 = arith.mulf %173, %175 : vector<8x256xf32>
    %177 = arith.addf %145, %176 : vector<8x256xf32>
    %c251_i32_71 = arith.constant 251 : i32
    %178 = tpu.dynamic_rotate %101 by %c251_i32_71 dim 1 : vector<8x256xf32>, i32 -> vector<8x256xf32>
    %c11_72 = arith.constant 11 : index
    %c0_73 = arith.constant 0 : index
    %c0_74 = arith.constant 0 : index
    %179 = vector.load %arg3[%c11_72, %c0_73, %c0_74] : memref<14x8x256xf32, #tpu.memory_space<vmem>>, vector<1x8x256xf32>
    %180 = vector.shape_cast %179 : vector<1x8x256xf32> to vector<8x256xf32>
    %181 = arith.mulf %178, %180 : vector<8x256xf32>
    %182 = vector.extract_strided_slice %5 {offsets = [0, 21], sizes = [8, 1], strides = [1, 1]} : vector<8x121xf32> to vector<8x1xf32>
    %183 = vector.broadcast %182 : vector<8x1xf32> to vector<8x256xf32>
    %184 = arith.mulf %181, %183 : vector<8x256xf32>
    %185 = arith.addf %153, %184 : vector<8x256xf32>
    %c48_i32 = arith.constant 48 : i32
    %186 = tpu.dynamic_rotate %4 by %c48_i32 dim 1 : vector<8x256xf32>, i32 -> vector<8x256xf32>
    %c4_75 = arith.constant 4 : index
    %c0_76 = arith.constant 0 : index
    %c0_77 = arith.constant 0 : index
    %187 = vector.load %arg2[%c4_75, %c0_76, %c0_77] : memref<14x8x256xf32, #tpu.memory_space<vmem>>, vector<1x8x256xf32>
    %188 = vector.shape_cast %187 : vector<1x8x256xf32> to vector<8x256xf32>
    %189 = arith.mulf %186, %188 : vector<8x256xf32>
    %c5_i32_78 = arith.constant 5 : i32
    %190 = tpu.dynamic_rotate %189 by %c5_i32_78 dim 1 : vector<8x256xf32>, i32 -> vector<8x256xf32>
    %c2_79 = arith.constant 2 : index
    %c0_80 = arith.constant 0 : index
    %c0_81 = arith.constant 0 : index
    %191 = vector.load %arg3[%c2_79, %c0_80, %c0_81] : memref<14x8x256xf32, #tpu.memory_space<vmem>>, vector<1x8x256xf32>
    %192 = vector.shape_cast %191 : vector<1x8x256xf32> to vector<8x256xf32>
    %193 = arith.mulf %190, %192 : vector<8x256xf32>
    %194 = vector.extract_strided_slice %5 {offsets = [0, 22], sizes = [8, 1], strides = [1, 1]} : vector<8x121xf32> to vector<8x1xf32>
    %195 = vector.broadcast %194 : vector<8x1xf32> to vector<8x256xf32>
    %196 = arith.mulf %193, %195 : vector<8x256xf32>
    %197 = arith.addf %161, %196 : vector<8x256xf32>
    %c4_i32_82 = arith.constant 4 : i32
    %198 = tpu.dynamic_rotate %189 by %c4_i32_82 dim 1 : vector<8x256xf32>, i32 -> vector<8x256xf32>
    %c3_83 = arith.constant 3 : index
    %c0_84 = arith.constant 0 : index
    %c0_85 = arith.constant 0 : index
    %199 = vector.load %arg3[%c3_83, %c0_84, %c0_85] : memref<14x8x256xf32, #tpu.memory_space<vmem>>, vector<1x8x256xf32>
    %200 = vector.shape_cast %199 : vector<1x8x256xf32> to vector<8x256xf32>
    %201 = arith.mulf %198, %200 : vector<8x256xf32>
    %202 = vector.extract_strided_slice %5 {offsets = [0, 23], sizes = [8, 1], strides = [1, 1]} : vector<8x121xf32> to vector<8x1xf32>
    %203 = vector.broadcast %202 : vector<8x1xf32> to vector<8x256xf32>
    %204 = arith.mulf %201, %203 : vector<8x256xf32>
    %205 = arith.addf %169, %204 : vector<8x256xf32>
    %c3_i32_86 = arith.constant 3 : i32
    %206 = tpu.dynamic_rotate %189 by %c3_i32_86 dim 1 : vector<8x256xf32>, i32 -> vector<8x256xf32>
    %c4_87 = arith.constant 4 : index
    %c0_88 = arith.constant 0 : index
    %c0_89 = arith.constant 0 : index
    %207 = vector.load %arg3[%c4_87, %c0_88, %c0_89] : memref<14x8x256xf32, #tpu.memory_space<vmem>>, vector<1x8x256xf32>
    %208 = vector.shape_cast %207 : vector<1x8x256xf32> to vector<8x256xf32>
    %209 = arith.mulf %206, %208 : vector<8x256xf32>
    %210 = vector.extract_strided_slice %5 {offsets = [0, 24], sizes = [8, 1], strides = [1, 1]} : vector<8x121xf32> to vector<8x1xf32>
    %211 = vector.broadcast %210 : vector<8x1xf32> to vector<8x256xf32>
    %212 = arith.mulf %209, %211 : vector<8x256xf32>
    %213 = arith.addf %177, %212 : vector<8x256xf32>
    %c2_i32_90 = arith.constant 2 : i32
    %214 = tpu.dynamic_rotate %189 by %c2_i32_90 dim 1 : vector<8x256xf32>, i32 -> vector<8x256xf32>
    %c5_91 = arith.constant 5 : index
    %c0_92 = arith.constant 0 : index
    %c0_93 = arith.constant 0 : index
    %215 = vector.load %arg3[%c5_91, %c0_92, %c0_93] : memref<14x8x256xf32, #tpu.memory_space<vmem>>, vector<1x8x256xf32>
    %216 = vector.shape_cast %215 : vector<1x8x256xf32> to vector<8x256xf32>
    %217 = arith.mulf %214, %216 : vector<8x256xf32>
    %218 = vector.extract_strided_slice %5 {offsets = [0, 25], sizes = [8, 1], strides = [1, 1]} : vector<8x121xf32> to vector<8x1xf32>
    %219 = vector.broadcast %218 : vector<8x1xf32> to vector<8x256xf32>
    %220 = arith.mulf %217, %219 : vector<8x256xf32>
    %221 = arith.addf %185, %220 : vector<8x256xf32>
    %c1_i32_94 = arith.constant 1 : i32
    %222 = tpu.dynamic_rotate %189 by %c1_i32_94 dim 1 : vector<8x256xf32>, i32 -> vector<8x256xf32>
    %c6_95 = arith.constant 6 : index
    %c0_96 = arith.constant 0 : index
    %c0_97 = arith.constant 0 : index
    %223 = vector.load %arg3[%c6_95, %c0_96, %c0_97] : memref<14x8x256xf32, #tpu.memory_space<vmem>>, vector<1x8x256xf32>
    %224 = vector.shape_cast %223 : vector<1x8x256xf32> to vector<8x256xf32>
    %225 = arith.mulf %222, %224 : vector<8x256xf32>
    %226 = vector.extract_strided_slice %5 {offsets = [0, 26], sizes = [8, 1], strides = [1, 1]} : vector<8x121xf32> to vector<8x1xf32>
    %227 = vector.broadcast %226 : vector<8x1xf32> to vector<8x256xf32>
    %228 = arith.mulf %225, %227 : vector<8x256xf32>
    %229 = arith.addf %197, %228 : vector<8x256xf32>
    %230 = vector.extract_strided_slice %5 {offsets = [0, 27], sizes = [8, 1], strides = [1, 1]} : vector<8x121xf32> to vector<8x1xf32>
    %231 = vector.broadcast %230 : vector<8x1xf32> to vector<8x256xf32>
    %232 = arith.mulf %189, %231 : vector<8x256xf32>
    %233 = arith.addf %205, %232 : vector<8x256xf32>
    %c255_i32_98 = arith.constant 255 : i32
    %234 = tpu.dynamic_rotate %189 by %c255_i32_98 dim 1 : vector<8x256xf32>, i32 -> vector<8x256xf32>
    %c7_99 = arith.constant 7 : index
    %c0_100 = arith.constant 0 : index
    %c0_101 = arith.constant 0 : index
    %235 = vector.load %arg3[%c7_99, %c0_100, %c0_101] : memref<14x8x256xf32, #tpu.memory_space<vmem>>, vector<1x8x256xf32>
    %236 = vector.shape_cast %235 : vector<1x8x256xf32> to vector<8x256xf32>
    %237 = arith.mulf %234, %236 : vector<8x256xf32>
    %238 = vector.extract_strided_slice %5 {offsets = [0, 28], sizes = [8, 1], strides = [1, 1]} : vector<8x121xf32> to vector<8x1xf32>
    %239 = vector.broadcast %238 : vector<8x1xf32> to vector<8x256xf32>
    %240 = arith.mulf %237, %239 : vector<8x256xf32>
    %241 = arith.addf %213, %240 : vector<8x256xf32>
    %c254_i32_102 = arith.constant 254 : i32
    %242 = tpu.dynamic_rotate %189 by %c254_i32_102 dim 1 : vector<8x256xf32>, i32 -> vector<8x256xf32>
    %c8_103 = arith.constant 8 : index
    %c0_104 = arith.constant 0 : index
    %c0_105 = arith.constant 0 : index
    %243 = vector.load %arg3[%c8_103, %c0_104, %c0_105] : memref<14x8x256xf32, #tpu.memory_space<vmem>>, vector<1x8x256xf32>
    %244 = vector.shape_cast %243 : vector<1x8x256xf32> to vector<8x256xf32>
    %245 = arith.mulf %242, %244 : vector<8x256xf32>
    %246 = vector.extract_strided_slice %5 {offsets = [0, 29], sizes = [8, 1], strides = [1, 1]} : vector<8x121xf32> to vector<8x1xf32>
    %247 = vector.broadcast %246 : vector<8x1xf32> to vector<8x256xf32>
    %248 = arith.mulf %245, %247 : vector<8x256xf32>
    %249 = arith.addf %221, %248 : vector<8x256xf32>
    %c253_i32_106 = arith.constant 253 : i32
    %250 = tpu.dynamic_rotate %189 by %c253_i32_106 dim 1 : vector<8x256xf32>, i32 -> vector<8x256xf32>
    %c9_107 = arith.constant 9 : index
    %c0_108 = arith.constant 0 : index
    %c0_109 = arith.constant 0 : index
    %251 = vector.load %arg3[%c9_107, %c0_108, %c0_109] : memref<14x8x256xf32, #tpu.memory_space<vmem>>, vector<1x8x256xf32>
    %252 = vector.shape_cast %251 : vector<1x8x256xf32> to vector<8x256xf32>
    %253 = arith.mulf %250, %252 : vector<8x256xf32>
    %254 = vector.extract_strided_slice %5 {offsets = [0, 30], sizes = [8, 1], strides = [1, 1]} : vector<8x121xf32> to vector<8x1xf32>
    %255 = vector.broadcast %254 : vector<8x1xf32> to vector<8x256xf32>
    %256 = arith.mulf %253, %255 : vector<8x256xf32>
    %257 = arith.addf %229, %256 : vector<8x256xf32>
    %c252_i32_110 = arith.constant 252 : i32
    %258 = tpu.dynamic_rotate %189 by %c252_i32_110 dim 1 : vector<8x256xf32>, i32 -> vector<8x256xf32>
    %c10_111 = arith.constant 10 : index
    %c0_112 = arith.constant 0 : index
    %c0_113 = arith.constant 0 : index
    %259 = vector.load %arg3[%c10_111, %c0_112, %c0_113] : memref<14x8x256xf32, #tpu.memory_space<vmem>>, vector<1x8x256xf32>
    %260 = vector.shape_cast %259 : vector<1x8x256xf32> to vector<8x256xf32>
    %261 = arith.mulf %258, %260 : vector<8x256xf32>
    %262 = vector.extract_strided_slice %5 {offsets = [0, 31], sizes = [8, 1], strides = [1, 1]} : vector<8x121xf32> to vector<8x1xf32>
    %263 = vector.broadcast %262 : vector<8x1xf32> to vector<8x256xf32>
    %264 = arith.mulf %261, %263 : vector<8x256xf32>
    %265 = arith.addf %233, %264 : vector<8x256xf32>
    %c251_i32_114 = arith.constant 251 : i32
    %266 = tpu.dynamic_rotate %189 by %c251_i32_114 dim 1 : vector<8x256xf32>, i32 -> vector<8x256xf32>
    %c11_115 = arith.constant 11 : index
    %c0_116 = arith.constant 0 : index
    %c0_117 = arith.constant 0 : index
    %267 = vector.load %arg3[%c11_115, %c0_116, %c0_117] : memref<14x8x256xf32, #tpu.memory_space<vmem>>, vector<1x8x256xf32>
    %268 = vector.shape_cast %267 : vector<1x8x256xf32> to vector<8x256xf32>
    %269 = arith.mulf %266, %268 : vector<8x256xf32>
    %270 = vector.extract_strided_slice %5 {offsets = [0, 32], sizes = [8, 1], strides = [1, 1]} : vector<8x121xf32> to vector<8x1xf32>
    %271 = vector.broadcast %270 : vector<8x1xf32> to vector<8x256xf32>
    %272 = arith.mulf %269, %271 : vector<8x256xf32>
    %273 = arith.addf %241, %272 : vector<8x256xf32>
    %c32_i32 = arith.constant 32 : i32
    %274 = tpu.dynamic_rotate %4 by %c32_i32 dim 1 : vector<8x256xf32>, i32 -> vector<8x256xf32>
    %c5_118 = arith.constant 5 : index
    %c0_119 = arith.constant 0 : index
    %c0_120 = arith.constant 0 : index
    %275 = vector.load %arg2[%c5_118, %c0_119, %c0_120] : memref<14x8x256xf32, #tpu.memory_space<vmem>>, vector<1x8x256xf32>
    %276 = vector.shape_cast %275 : vector<1x8x256xf32> to vector<8x256xf32>
    %277 = arith.mulf %274, %276 : vector<8x256xf32>
    %c5_i32_121 = arith.constant 5 : i32
    %278 = tpu.dynamic_rotate %277 by %c5_i32_121 dim 1 : vector<8x256xf32>, i32 -> vector<8x256xf32>
    %c2_122 = arith.constant 2 : index
    %c0_123 = arith.constant 0 : index
    %c0_124 = arith.constant 0 : index
    %279 = vector.load %arg3[%c2_122, %c0_123, %c0_124] : memref<14x8x256xf32, #tpu.memory_space<vmem>>, vector<1x8x256xf32>
    %280 = vector.shape_cast %279 : vector<1x8x256xf32> to vector<8x256xf32>
    %281 = arith.mulf %278, %280 : vector<8x256xf32>
    %282 = vector.extract_strided_slice %5 {offsets = [0, 33], sizes = [8, 1], strides = [1, 1]} : vector<8x121xf32> to vector<8x1xf32>
    %283 = vector.broadcast %282 : vector<8x1xf32> to vector<8x256xf32>
    %284 = arith.mulf %281, %283 : vector<8x256xf32>
    %285 = arith.addf %249, %284 : vector<8x256xf32>
    %c4_i32_125 = arith.constant 4 : i32
    %286 = tpu.dynamic_rotate %277 by %c4_i32_125 dim 1 : vector<8x256xf32>, i32 -> vector<8x256xf32>
    %c3_126 = arith.constant 3 : index
    %c0_127 = arith.constant 0 : index
    %c0_128 = arith.constant 0 : index
    %287 = vector.load %arg3[%c3_126, %c0_127, %c0_128] : memref<14x8x256xf32, #tpu.memory_space<vmem>>, vector<1x8x256xf32>
    %288 = vector.shape_cast %287 : vector<1x8x256xf32> to vector<8x256xf32>
    %289 = arith.mulf %286, %288 : vector<8x256xf32>
    %290 = vector.extract_strided_slice %5 {offsets = [0, 34], sizes = [8, 1], strides = [1, 1]} : vector<8x121xf32> to vector<8x1xf32>
    %291 = vector.broadcast %290 : vector<8x1xf32> to vector<8x256xf32>
    %292 = arith.mulf %289, %291 : vector<8x256xf32>
    %293 = arith.addf %257, %292 : vector<8x256xf32>
    %c3_i32_129 = arith.constant 3 : i32
    %294 = tpu.dynamic_rotate %277 by %c3_i32_129 dim 1 : vector<8x256xf32>, i32 -> vector<8x256xf32>
    %c4_130 = arith.constant 4 : index
    %c0_131 = arith.constant 0 : index
    %c0_132 = arith.constant 0 : index
    %295 = vector.load %arg3[%c4_130, %c0_131, %c0_132] : memref<14x8x256xf32, #tpu.memory_space<vmem>>, vector<1x8x256xf32>
    %296 = vector.shape_cast %295 : vector<1x8x256xf32> to vector<8x256xf32>
    %297 = arith.mulf %294, %296 : vector<8x256xf32>
    %298 = vector.extract_strided_slice %5 {offsets = [0, 35], sizes = [8, 1], strides = [1, 1]} : vector<8x121xf32> to vector<8x1xf32>
    %299 = vector.broadcast %298 : vector<8x1xf32> to vector<8x256xf32>
    %300 = arith.mulf %297, %299 : vector<8x256xf32>
    %301 = arith.addf %265, %300 : vector<8x256xf32>
    %c2_i32_133 = arith.constant 2 : i32
    %302 = tpu.dynamic_rotate %277 by %c2_i32_133 dim 1 : vector<8x256xf32>, i32 -> vector<8x256xf32>
    %c5_134 = arith.constant 5 : index
    %c0_135 = arith.constant 0 : index
    %c0_136 = arith.constant 0 : index
    %303 = vector.load %arg3[%c5_134, %c0_135, %c0_136] : memref<14x8x256xf32, #tpu.memory_space<vmem>>, vector<1x8x256xf32>
    %304 = vector.shape_cast %303 : vector<1x8x256xf32> to vector<8x256xf32>
    %305 = arith.mulf %302, %304 : vector<8x256xf32>
    %306 = vector.extract_strided_slice %5 {offsets = [0, 36], sizes = [8, 1], strides = [1, 1]} : vector<8x121xf32> to vector<8x1xf32>
    %307 = vector.broadcast %306 : vector<8x1xf32> to vector<8x256xf32>
    %308 = arith.mulf %305, %307 : vector<8x256xf32>
    %309 = arith.addf %273, %308 : vector<8x256xf32>
    %c1_i32_137 = arith.constant 1 : i32
    %310 = tpu.dynamic_rotate %277 by %c1_i32_137 dim 1 : vector<8x256xf32>, i32 -> vector<8x256xf32>
    %c6_138 = arith.constant 6 : index
    %c0_139 = arith.constant 0 : index
    %c0_140 = arith.constant 0 : index
    %311 = vector.load %arg3[%c6_138, %c0_139, %c0_140] : memref<14x8x256xf32, #tpu.memory_space<vmem>>, vector<1x8x256xf32>
    %312 = vector.shape_cast %311 : vector<1x8x256xf32> to vector<8x256xf32>
    %313 = arith.mulf %310, %312 : vector<8x256xf32>
    %314 = vector.extract_strided_slice %5 {offsets = [0, 37], sizes = [8, 1], strides = [1, 1]} : vector<8x121xf32> to vector<8x1xf32>
    %315 = vector.broadcast %314 : vector<8x1xf32> to vector<8x256xf32>
    %316 = arith.mulf %313, %315 : vector<8x256xf32>
    %317 = arith.addf %285, %316 : vector<8x256xf32>
    %318 = vector.extract_strided_slice %5 {offsets = [0, 38], sizes = [8, 1], strides = [1, 1]} : vector<8x121xf32> to vector<8x1xf32>
    %319 = vector.broadcast %318 : vector<8x1xf32> to vector<8x256xf32>
    %320 = arith.mulf %277, %319 : vector<8x256xf32>
    %321 = arith.addf %293, %320 : vector<8x256xf32>
    %c255_i32_141 = arith.constant 255 : i32
    %322 = tpu.dynamic_rotate %277 by %c255_i32_141 dim 1 : vector<8x256xf32>, i32 -> vector<8x256xf32>
    %c7_142 = arith.constant 7 : index
    %c0_143 = arith.constant 0 : index
    %c0_144 = arith.constant 0 : index
    %323 = vector.load %arg3[%c7_142, %c0_143, %c0_144] : memref<14x8x256xf32, #tpu.memory_space<vmem>>, vector<1x8x256xf32>
    %324 = vector.shape_cast %323 : vector<1x8x256xf32> to vector<8x256xf32>
    %325 = arith.mulf %322, %324 : vector<8x256xf32>
    %326 = vector.extract_strided_slice %5 {offsets = [0, 39], sizes = [8, 1], strides = [1, 1]} : vector<8x121xf32> to vector<8x1xf32>
    %327 = vector.broadcast %326 : vector<8x1xf32> to vector<8x256xf32>
    %328 = arith.mulf %325, %327 : vector<8x256xf32>
    %329 = arith.addf %301, %328 : vector<8x256xf32>
    %c254_i32_145 = arith.constant 254 : i32
    %330 = tpu.dynamic_rotate %277 by %c254_i32_145 dim 1 : vector<8x256xf32>, i32 -> vector<8x256xf32>
    %c8_146 = arith.constant 8 : index
    %c0_147 = arith.constant 0 : index
    %c0_148 = arith.constant 0 : index
    %331 = vector.load %arg3[%c8_146, %c0_147, %c0_148] : memref<14x8x256xf32, #tpu.memory_space<vmem>>, vector<1x8x256xf32>
    %332 = vector.shape_cast %331 : vector<1x8x256xf32> to vector<8x256xf32>
    %333 = arith.mulf %330, %332 : vector<8x256xf32>
    %334 = vector.extract_strided_slice %5 {offsets = [0, 40], sizes = [8, 1], strides = [1, 1]} : vector<8x121xf32> to vector<8x1xf32>
    %335 = vector.broadcast %334 : vector<8x1xf32> to vector<8x256xf32>
    %336 = arith.mulf %333, %335 : vector<8x256xf32>
    %337 = arith.addf %309, %336 : vector<8x256xf32>
    %c253_i32_149 = arith.constant 253 : i32
    %338 = tpu.dynamic_rotate %277 by %c253_i32_149 dim 1 : vector<8x256xf32>, i32 -> vector<8x256xf32>
    %c9_150 = arith.constant 9 : index
    %c0_151 = arith.constant 0 : index
    %c0_152 = arith.constant 0 : index
    %339 = vector.load %arg3[%c9_150, %c0_151, %c0_152] : memref<14x8x256xf32, #tpu.memory_space<vmem>>, vector<1x8x256xf32>
    %340 = vector.shape_cast %339 : vector<1x8x256xf32> to vector<8x256xf32>
    %341 = arith.mulf %338, %340 : vector<8x256xf32>
    %342 = vector.extract_strided_slice %5 {offsets = [0, 41], sizes = [8, 1], strides = [1, 1]} : vector<8x121xf32> to vector<8x1xf32>
    %343 = vector.broadcast %342 : vector<8x1xf32> to vector<8x256xf32>
    %344 = arith.mulf %341, %343 : vector<8x256xf32>
    %345 = arith.addf %317, %344 : vector<8x256xf32>
    %c252_i32_153 = arith.constant 252 : i32
    %346 = tpu.dynamic_rotate %277 by %c252_i32_153 dim 1 : vector<8x256xf32>, i32 -> vector<8x256xf32>
    %c10_154 = arith.constant 10 : index
    %c0_155 = arith.constant 0 : index
    %c0_156 = arith.constant 0 : index
    %347 = vector.load %arg3[%c10_154, %c0_155, %c0_156] : memref<14x8x256xf32, #tpu.memory_space<vmem>>, vector<1x8x256xf32>
    %348 = vector.shape_cast %347 : vector<1x8x256xf32> to vector<8x256xf32>
    %349 = arith.mulf %346, %348 : vector<8x256xf32>
    %350 = vector.extract_strided_slice %5 {offsets = [0, 42], sizes = [8, 1], strides = [1, 1]} : vector<8x121xf32> to vector<8x1xf32>
    %351 = vector.broadcast %350 : vector<8x1xf32> to vector<8x256xf32>
    %352 = arith.mulf %349, %351 : vector<8x256xf32>
    %353 = arith.addf %321, %352 : vector<8x256xf32>
    %c251_i32_157 = arith.constant 251 : i32
    %354 = tpu.dynamic_rotate %277 by %c251_i32_157 dim 1 : vector<8x256xf32>, i32 -> vector<8x256xf32>
    %c11_158 = arith.constant 11 : index
    %c0_159 = arith.constant 0 : index
    %c0_160 = arith.constant 0 : index
    %355 = vector.load %arg3[%c11_158, %c0_159, %c0_160] : memref<14x8x256xf32, #tpu.memory_space<vmem>>, vector<1x8x256xf32>
    %356 = vector.shape_cast %355 : vector<1x8x256xf32> to vector<8x256xf32>
    %357 = arith.mulf %354, %356 : vector<8x256xf32>
    %358 = vector.extract_strided_slice %5 {offsets = [0, 43], sizes = [8, 1], strides = [1, 1]} : vector<8x121xf32> to vector<8x1xf32>
    %359 = vector.broadcast %358 : vector<8x1xf32> to vector<8x256xf32>
    %360 = arith.mulf %357, %359 : vector<8x256xf32>
    %361 = arith.addf %329, %360 : vector<8x256xf32>
    %c16_i32 = arith.constant 16 : i32
    %362 = tpu.dynamic_rotate %4 by %c16_i32 dim 1 : vector<8x256xf32>, i32 -> vector<8x256xf32>
    %c6_161 = arith.constant 6 : index
    %c0_162 = arith.constant 0 : index
    %c0_163 = arith.constant 0 : index
    %363 = vector.load %arg2[%c6_161, %c0_162, %c0_163] : memref<14x8x256xf32, #tpu.memory_space<vmem>>, vector<1x8x256xf32>
    %364 = vector.shape_cast %363 : vector<1x8x256xf32> to vector<8x256xf32>
    %365 = arith.mulf %362, %364 : vector<8x256xf32>
    %c5_i32_164 = arith.constant 5 : i32
    %366 = tpu.dynamic_rotate %365 by %c5_i32_164 dim 1 : vector<8x256xf32>, i32 -> vector<8x256xf32>
    %c2_165 = arith.constant 2 : index
    %c0_166 = arith.constant 0 : index
    %c0_167 = arith.constant 0 : index
    %367 = vector.load %arg3[%c2_165, %c0_166, %c0_167] : memref<14x8x256xf32, #tpu.memory_space<vmem>>, vector<1x8x256xf32>
    %368 = vector.shape_cast %367 : vector<1x8x256xf32> to vector<8x256xf32>
    %369 = arith.mulf %366, %368 : vector<8x256xf32>
    %370 = vector.extract_strided_slice %5 {offsets = [0, 44], sizes = [8, 1], strides = [1, 1]} : vector<8x121xf32> to vector<8x1xf32>
    %371 = vector.broadcast %370 : vector<8x1xf32> to vector<8x256xf32>
    %372 = arith.mulf %369, %371 : vector<8x256xf32>
    %373 = arith.addf %337, %372 : vector<8x256xf32>
    %c4_i32_168 = arith.constant 4 : i32
    %374 = tpu.dynamic_rotate %365 by %c4_i32_168 dim 1 : vector<8x256xf32>, i32 -> vector<8x256xf32>
    %c3_169 = arith.constant 3 : index
    %c0_170 = arith.constant 0 : index
    %c0_171 = arith.constant 0 : index
    %375 = vector.load %arg3[%c3_169, %c0_170, %c0_171] : memref<14x8x256xf32, #tpu.memory_space<vmem>>, vector<1x8x256xf32>
    %376 = vector.shape_cast %375 : vector<1x8x256xf32> to vector<8x256xf32>
    %377 = arith.mulf %374, %376 : vector<8x256xf32>
    %378 = vector.extract_strided_slice %5 {offsets = [0, 45], sizes = [8, 1], strides = [1, 1]} : vector<8x121xf32> to vector<8x1xf32>
    %379 = vector.broadcast %378 : vector<8x1xf32> to vector<8x256xf32>
    %380 = arith.mulf %377, %379 : vector<8x256xf32>
    %381 = arith.addf %345, %380 : vector<8x256xf32>
    %c3_i32_172 = arith.constant 3 : i32
    %382 = tpu.dynamic_rotate %365 by %c3_i32_172 dim 1 : vector<8x256xf32>, i32 -> vector<8x256xf32>
    %c4_173 = arith.constant 4 : index
    %c0_174 = arith.constant 0 : index
    %c0_175 = arith.constant 0 : index
    %383 = vector.load %arg3[%c4_173, %c0_174, %c0_175] : memref<14x8x256xf32, #tpu.memory_space<vmem>>, vector<1x8x256xf32>
    %384 = vector.shape_cast %383 : vector<1x8x256xf32> to vector<8x256xf32>
    %385 = arith.mulf %382, %384 : vector<8x256xf32>
    %386 = vector.extract_strided_slice %5 {offsets = [0, 46], sizes = [8, 1], strides = [1, 1]} : vector<8x121xf32> to vector<8x1xf32>
    %387 = vector.broadcast %386 : vector<8x1xf32> to vector<8x256xf32>
    %388 = arith.mulf %385, %387 : vector<8x256xf32>
    %389 = arith.addf %353, %388 : vector<8x256xf32>
    %c2_i32_176 = arith.constant 2 : i32
    %390 = tpu.dynamic_rotate %365 by %c2_i32_176 dim 1 : vector<8x256xf32>, i32 -> vector<8x256xf32>
    %c5_177 = arith.constant 5 : index
    %c0_178 = arith.constant 0 : index
    %c0_179 = arith.constant 0 : index
    %391 = vector.load %arg3[%c5_177, %c0_178, %c0_179] : memref<14x8x256xf32, #tpu.memory_space<vmem>>, vector<1x8x256xf32>
    %392 = vector.shape_cast %391 : vector<1x8x256xf32> to vector<8x256xf32>
    %393 = arith.mulf %390, %392 : vector<8x256xf32>
    %394 = vector.extract_strided_slice %5 {offsets = [0, 47], sizes = [8, 1], strides = [1, 1]} : vector<8x121xf32> to vector<8x1xf32>
    %395 = vector.broadcast %394 : vector<8x1xf32> to vector<8x256xf32>
    %396 = arith.mulf %393, %395 : vector<8x256xf32>
    %397 = arith.addf %361, %396 : vector<8x256xf32>
    %c1_i32_180 = arith.constant 1 : i32
    %398 = tpu.dynamic_rotate %365 by %c1_i32_180 dim 1 : vector<8x256xf32>, i32 -> vector<8x256xf32>
    %c6_181 = arith.constant 6 : index
    %c0_182 = arith.constant 0 : index
    %c0_183 = arith.constant 0 : index
    %399 = vector.load %arg3[%c6_181, %c0_182, %c0_183] : memref<14x8x256xf32, #tpu.memory_space<vmem>>, vector<1x8x256xf32>
    %400 = vector.shape_cast %399 : vector<1x8x256xf32> to vector<8x256xf32>
    %401 = arith.mulf %398, %400 : vector<8x256xf32>
    %402 = vector.extract_strided_slice %5 {offsets = [0, 48], sizes = [8, 1], strides = [1, 1]} : vector<8x121xf32> to vector<8x1xf32>
    %403 = vector.broadcast %402 : vector<8x1xf32> to vector<8x256xf32>
    %404 = arith.mulf %401, %403 : vector<8x256xf32>
    %405 = arith.addf %373, %404 : vector<8x256xf32>
    %406 = vector.extract_strided_slice %5 {offsets = [0, 49], sizes = [8, 1], strides = [1, 1]} : vector<8x121xf32> to vector<8x1xf32>
    %407 = vector.broadcast %406 : vector<8x1xf32> to vector<8x256xf32>
    %408 = arith.mulf %365, %407 : vector<8x256xf32>
    %409 = arith.addf %381, %408 : vector<8x256xf32>
    %c255_i32_184 = arith.constant 255 : i32
    %410 = tpu.dynamic_rotate %365 by %c255_i32_184 dim 1 : vector<8x256xf32>, i32 -> vector<8x256xf32>
    %c7_185 = arith.constant 7 : index
    %c0_186 = arith.constant 0 : index
    %c0_187 = arith.constant 0 : index
    %411 = vector.load %arg3[%c7_185, %c0_186, %c0_187] : memref<14x8x256xf32, #tpu.memory_space<vmem>>, vector<1x8x256xf32>
    %412 = vector.shape_cast %411 : vector<1x8x256xf32> to vector<8x256xf32>
    %413 = arith.mulf %410, %412 : vector<8x256xf32>
    %414 = vector.extract_strided_slice %5 {offsets = [0, 50], sizes = [8, 1], strides = [1, 1]} : vector<8x121xf32> to vector<8x1xf32>
    %415 = vector.broadcast %414 : vector<8x1xf32> to vector<8x256xf32>
    %416 = arith.mulf %413, %415 : vector<8x256xf32>
    %417 = arith.addf %389, %416 : vector<8x256xf32>
    %c254_i32_188 = arith.constant 254 : i32
    %418 = tpu.dynamic_rotate %365 by %c254_i32_188 dim 1 : vector<8x256xf32>, i32 -> vector<8x256xf32>
    %c8_189 = arith.constant 8 : index
    %c0_190 = arith.constant 0 : index
    %c0_191 = arith.constant 0 : index
    %419 = vector.load %arg3[%c8_189, %c0_190, %c0_191] : memref<14x8x256xf32, #tpu.memory_space<vmem>>, vector<1x8x256xf32>
    %420 = vector.shape_cast %419 : vector<1x8x256xf32> to vector<8x256xf32>
    %421 = arith.mulf %418, %420 : vector<8x256xf32>
    %422 = vector.extract_strided_slice %5 {offsets = [0, 51], sizes = [8, 1], strides = [1, 1]} : vector<8x121xf32> to vector<8x1xf32>
    %423 = vector.broadcast %422 : vector<8x1xf32> to vector<8x256xf32>
    %424 = arith.mulf %421, %423 : vector<8x256xf32>
    %425 = arith.addf %397, %424 : vector<8x256xf32>
    %c253_i32_192 = arith.constant 253 : i32
    %426 = tpu.dynamic_rotate %365 by %c253_i32_192 dim 1 : vector<8x256xf32>, i32 -> vector<8x256xf32>
    %c9_193 = arith.constant 9 : index
    %c0_194 = arith.constant 0 : index
    %c0_195 = arith.constant 0 : index
    %427 = vector.load %arg3[%c9_193, %c0_194, %c0_195] : memref<14x8x256xf32, #tpu.memory_space<vmem>>, vector<1x8x256xf32>
    %428 = vector.shape_cast %427 : vector<1x8x256xf32> to vector<8x256xf32>
    %429 = arith.mulf %426, %428 : vector<8x256xf32>
    %430 = vector.extract_strided_slice %5 {offsets = [0, 52], sizes = [8, 1], strides = [1, 1]} : vector<8x121xf32> to vector<8x1xf32>
    %431 = vector.broadcast %430 : vector<8x1xf32> to vector<8x256xf32>
    %432 = arith.mulf %429, %431 : vector<8x256xf32>
    %433 = arith.addf %405, %432 : vector<8x256xf32>
    %c252_i32_196 = arith.constant 252 : i32
    %434 = tpu.dynamic_rotate %365 by %c252_i32_196 dim 1 : vector<8x256xf32>, i32 -> vector<8x256xf32>
    %c10_197 = arith.constant 10 : index
    %c0_198 = arith.constant 0 : index
    %c0_199 = arith.constant 0 : index
    %435 = vector.load %arg3[%c10_197, %c0_198, %c0_199] : memref<14x8x256xf32, #tpu.memory_space<vmem>>, vector<1x8x256xf32>
    %436 = vector.shape_cast %435 : vector<1x8x256xf32> to vector<8x256xf32>
    %437 = arith.mulf %434, %436 : vector<8x256xf32>
    %438 = vector.extract_strided_slice %5 {offsets = [0, 53], sizes = [8, 1], strides = [1, 1]} : vector<8x121xf32> to vector<8x1xf32>
    %439 = vector.broadcast %438 : vector<8x1xf32> to vector<8x256xf32>
    %440 = arith.mulf %437, %439 : vector<8x256xf32>
    %441 = arith.addf %409, %440 : vector<8x256xf32>
    %c251_i32_200 = arith.constant 251 : i32
    %442 = tpu.dynamic_rotate %365 by %c251_i32_200 dim 1 : vector<8x256xf32>, i32 -> vector<8x256xf32>
    %c11_201 = arith.constant 11 : index
    %c0_202 = arith.constant 0 : index
    %c0_203 = arith.constant 0 : index
    %443 = vector.load %arg3[%c11_201, %c0_202, %c0_203] : memref<14x8x256xf32, #tpu.memory_space<vmem>>, vector<1x8x256xf32>
    %444 = vector.shape_cast %443 : vector<1x8x256xf32> to vector<8x256xf32>
    %445 = arith.mulf %442, %444 : vector<8x256xf32>
    %446 = vector.extract_strided_slice %5 {offsets = [0, 54], sizes = [8, 1], strides = [1, 1]} : vector<8x121xf32> to vector<8x1xf32>
    %447 = vector.broadcast %446 : vector<8x1xf32> to vector<8x256xf32>
    %448 = arith.mulf %445, %447 : vector<8x256xf32>
    %449 = arith.addf %417, %448 : vector<8x256xf32>
    %c5_i32_204 = arith.constant 5 : i32
    %450 = tpu.dynamic_rotate %4 by %c5_i32_204 dim 1 : vector<8x256xf32>, i32 -> vector<8x256xf32>
    %c2_205 = arith.constant 2 : index
    %c0_206 = arith.constant 0 : index
    %c0_207 = arith.constant 0 : index
    %451 = vector.load %arg3[%c2_205, %c0_206, %c0_207] : memref<14x8x256xf32, #tpu.memory_space<vmem>>, vector<1x8x256xf32>
    %452 = vector.shape_cast %451 : vector<1x8x256xf32> to vector<8x256xf32>
    %453 = arith.mulf %450, %452 : vector<8x256xf32>
    %454 = vector.extract_strided_slice %5 {offsets = [0, 55], sizes = [8, 1], strides = [1, 1]} : vector<8x121xf32> to vector<8x1xf32>
    %455 = vector.broadcast %454 : vector<8x1xf32> to vector<8x256xf32>
    %456 = arith.mulf %453, %455 : vector<8x256xf32>
    %457 = arith.addf %425, %456 : vector<8x256xf32>
    %c4_i32_208 = arith.constant 4 : i32
    %458 = tpu.dynamic_rotate %4 by %c4_i32_208 dim 1 : vector<8x256xf32>, i32 -> vector<8x256xf32>
    %c3_209 = arith.constant 3 : index
    %c0_210 = arith.constant 0 : index
    %c0_211 = arith.constant 0 : index
    %459 = vector.load %arg3[%c3_209, %c0_210, %c0_211] : memref<14x8x256xf32, #tpu.memory_space<vmem>>, vector<1x8x256xf32>
    %460 = vector.shape_cast %459 : vector<1x8x256xf32> to vector<8x256xf32>
    %461 = arith.mulf %458, %460 : vector<8x256xf32>
    %462 = vector.extract_strided_slice %5 {offsets = [0, 56], sizes = [8, 1], strides = [1, 1]} : vector<8x121xf32> to vector<8x1xf32>
    %463 = vector.broadcast %462 : vector<8x1xf32> to vector<8x256xf32>
    %464 = arith.mulf %461, %463 : vector<8x256xf32>
    %465 = arith.addf %433, %464 : vector<8x256xf32>
    %c3_i32_212 = arith.constant 3 : i32
    %466 = tpu.dynamic_rotate %4 by %c3_i32_212 dim 1 : vector<8x256xf32>, i32 -> vector<8x256xf32>
    %c4_213 = arith.constant 4 : index
    %c0_214 = arith.constant 0 : index
    %c0_215 = arith.constant 0 : index
    %467 = vector.load %arg3[%c4_213, %c0_214, %c0_215] : memref<14x8x256xf32, #tpu.memory_space<vmem>>, vector<1x8x256xf32>
    %468 = vector.shape_cast %467 : vector<1x8x256xf32> to vector<8x256xf32>
    %469 = arith.mulf %466, %468 : vector<8x256xf32>
    %470 = vector.extract_strided_slice %5 {offsets = [0, 57], sizes = [8, 1], strides = [1, 1]} : vector<8x121xf32> to vector<8x1xf32>
    %471 = vector.broadcast %470 : vector<8x1xf32> to vector<8x256xf32>
    %472 = arith.mulf %469, %471 : vector<8x256xf32>
    %473 = arith.addf %441, %472 : vector<8x256xf32>
    %c2_i32_216 = arith.constant 2 : i32
    %474 = tpu.dynamic_rotate %4 by %c2_i32_216 dim 1 : vector<8x256xf32>, i32 -> vector<8x256xf32>
    %c5_217 = arith.constant 5 : index
    %c0_218 = arith.constant 0 : index
    %c0_219 = arith.constant 0 : index
    %475 = vector.load %arg3[%c5_217, %c0_218, %c0_219] : memref<14x8x256xf32, #tpu.memory_space<vmem>>, vector<1x8x256xf32>
    %476 = vector.shape_cast %475 : vector<1x8x256xf32> to vector<8x256xf32>
    %477 = arith.mulf %474, %476 : vector<8x256xf32>
    %478 = vector.extract_strided_slice %5 {offsets = [0, 58], sizes = [8, 1], strides = [1, 1]} : vector<8x121xf32> to vector<8x1xf32>
    %479 = vector.broadcast %478 : vector<8x1xf32> to vector<8x256xf32>
    %480 = arith.mulf %477, %479 : vector<8x256xf32>
    %481 = arith.addf %449, %480 : vector<8x256xf32>
    %c1_i32_220 = arith.constant 1 : i32
    %482 = tpu.dynamic_rotate %4 by %c1_i32_220 dim 1 : vector<8x256xf32>, i32 -> vector<8x256xf32>
    %c6_221 = arith.constant 6 : index
    %c0_222 = arith.constant 0 : index
    %c0_223 = arith.constant 0 : index
    %483 = vector.load %arg3[%c6_221, %c0_222, %c0_223] : memref<14x8x256xf32, #tpu.memory_space<vmem>>, vector<1x8x256xf32>
    %484 = vector.shape_cast %483 : vector<1x8x256xf32> to vector<8x256xf32>
    %485 = arith.mulf %482, %484 : vector<8x256xf32>
    %486 = vector.extract_strided_slice %5 {offsets = [0, 59], sizes = [8, 1], strides = [1, 1]} : vector<8x121xf32> to vector<8x1xf32>
    %487 = vector.broadcast %486 : vector<8x1xf32> to vector<8x256xf32>
    %488 = arith.mulf %485, %487 : vector<8x256xf32>
    %489 = arith.addf %457, %488 : vector<8x256xf32>
    %490 = vector.extract_strided_slice %5 {offsets = [0, 60], sizes = [8, 1], strides = [1, 1]} : vector<8x121xf32> to vector<8x1xf32>
    %491 = vector.broadcast %490 : vector<8x1xf32> to vector<8x256xf32>
    %492 = arith.mulf %4, %491 : vector<8x256xf32>
    %493 = arith.addf %465, %492 : vector<8x256xf32>
    %c255_i32_224 = arith.constant 255 : i32
    %494 = tpu.dynamic_rotate %4 by %c255_i32_224 dim 1 : vector<8x256xf32>, i32 -> vector<8x256xf32>
    %c7_225 = arith.constant 7 : index
    %c0_226 = arith.constant 0 : index
    %c0_227 = arith.constant 0 : index
    %495 = vector.load %arg3[%c7_225, %c0_226, %c0_227] : memref<14x8x256xf32, #tpu.memory_space<vmem>>, vector<1x8x256xf32>
    %496 = vector.shape_cast %495 : vector<1x8x256xf32> to vector<8x256xf32>
    %497 = arith.mulf %494, %496 : vector<8x256xf32>
    %498 = vector.extract_strided_slice %5 {offsets = [0, 61], sizes = [8, 1], strides = [1, 1]} : vector<8x121xf32> to vector<8x1xf32>
    %499 = vector.broadcast %498 : vector<8x1xf32> to vector<8x256xf32>
    %500 = arith.mulf %497, %499 : vector<8x256xf32>
    %501 = arith.addf %473, %500 : vector<8x256xf32>
    %c254_i32_228 = arith.constant 254 : i32
    %502 = tpu.dynamic_rotate %4 by %c254_i32_228 dim 1 : vector<8x256xf32>, i32 -> vector<8x256xf32>
    %c8_229 = arith.constant 8 : index
    %c0_230 = arith.constant 0 : index
    %c0_231 = arith.constant 0 : index
    %503 = vector.load %arg3[%c8_229, %c0_230, %c0_231] : memref<14x8x256xf32, #tpu.memory_space<vmem>>, vector<1x8x256xf32>
    %504 = vector.shape_cast %503 : vector<1x8x256xf32> to vector<8x256xf32>
    %505 = arith.mulf %502, %504 : vector<8x256xf32>
    %506 = vector.extract_strided_slice %5 {offsets = [0, 62], sizes = [8, 1], strides = [1, 1]} : vector<8x121xf32> to vector<8x1xf32>
    %507 = vector.broadcast %506 : vector<8x1xf32> to vector<8x256xf32>
    %508 = arith.mulf %505, %507 : vector<8x256xf32>
    %509 = arith.addf %481, %508 : vector<8x256xf32>
    %c253_i32_232 = arith.constant 253 : i32
    %510 = tpu.dynamic_rotate %4 by %c253_i32_232 dim 1 : vector<8x256xf32>, i32 -> vector<8x256xf32>
    %c9_233 = arith.constant 9 : index
    %c0_234 = arith.constant 0 : index
    %c0_235 = arith.constant 0 : index
    %511 = vector.load %arg3[%c9_233, %c0_234, %c0_235] : memref<14x8x256xf32, #tpu.memory_space<vmem>>, vector<1x8x256xf32>
    %512 = vector.shape_cast %511 : vector<1x8x256xf32> to vector<8x256xf32>
    %513 = arith.mulf %510, %512 : vector<8x256xf32>
    %514 = vector.extract_strided_slice %5 {offsets = [0, 63], sizes = [8, 1], strides = [1, 1]} : vector<8x121xf32> to vector<8x1xf32>
    %515 = vector.broadcast %514 : vector<8x1xf32> to vector<8x256xf32>
    %516 = arith.mulf %513, %515 : vector<8x256xf32>
    %517 = arith.addf %489, %516 : vector<8x256xf32>
    %c252_i32_236 = arith.constant 252 : i32
    %518 = tpu.dynamic_rotate %4 by %c252_i32_236 dim 1 : vector<8x256xf32>, i32 -> vector<8x256xf32>
    %c10_237 = arith.constant 10 : index
    %c0_238 = arith.constant 0 : index
    %c0_239 = arith.constant 0 : index
    %519 = vector.load %arg3[%c10_237, %c0_238, %c0_239] : memref<14x8x256xf32, #tpu.memory_space<vmem>>, vector<1x8x256xf32>
    %520 = vector.shape_cast %519 : vector<1x8x256xf32> to vector<8x256xf32>
    %521 = arith.mulf %518, %520 : vector<8x256xf32>
    %522 = vector.extract_strided_slice %5 {offsets = [0, 64], sizes = [8, 1], strides = [1, 1]} : vector<8x121xf32> to vector<8x1xf32>
    %523 = vector.broadcast %522 : vector<8x1xf32> to vector<8x256xf32>
    %524 = arith.mulf %521, %523 : vector<8x256xf32>
    %525 = arith.addf %493, %524 : vector<8x256xf32>
    %c251_i32_240 = arith.constant 251 : i32
    %526 = tpu.dynamic_rotate %4 by %c251_i32_240 dim 1 : vector<8x256xf32>, i32 -> vector<8x256xf32>
    %c11_241 = arith.constant 11 : index
    %c0_242 = arith.constant 0 : index
    %c0_243 = arith.constant 0 : index
    %527 = vector.load %arg3[%c11_241, %c0_242, %c0_243] : memref<14x8x256xf32, #tpu.memory_space<vmem>>, vector<1x8x256xf32>
    %528 = vector.shape_cast %527 : vector<1x8x256xf32> to vector<8x256xf32>
    %529 = arith.mulf %526, %528 : vector<8x256xf32>
    %530 = vector.extract_strided_slice %5 {offsets = [0, 65], sizes = [8, 1], strides = [1, 1]} : vector<8x121xf32> to vector<8x1xf32>
    %531 = vector.broadcast %530 : vector<8x1xf32> to vector<8x256xf32>
    %532 = arith.mulf %529, %531 : vector<8x256xf32>
    %533 = arith.addf %501, %532 : vector<8x256xf32>
    %c240_i32 = arith.constant 240 : i32
    %534 = tpu.dynamic_rotate %4 by %c240_i32 dim 1 : vector<8x256xf32>, i32 -> vector<8x256xf32>
    %c7_244 = arith.constant 7 : index
    %c0_245 = arith.constant 0 : index
    %c0_246 = arith.constant 0 : index
    %535 = vector.load %arg2[%c7_244, %c0_245, %c0_246] : memref<14x8x256xf32, #tpu.memory_space<vmem>>, vector<1x8x256xf32>
    %536 = vector.shape_cast %535 : vector<1x8x256xf32> to vector<8x256xf32>
    %537 = arith.mulf %534, %536 : vector<8x256xf32>
    %c5_i32_247 = arith.constant 5 : i32
    %538 = tpu.dynamic_rotate %537 by %c5_i32_247 dim 1 : vector<8x256xf32>, i32 -> vector<8x256xf32>
    %c2_248 = arith.constant 2 : index
    %c0_249 = arith.constant 0 : index
    %c0_250 = arith.constant 0 : index
    %539 = vector.load %arg3[%c2_248, %c0_249, %c0_250] : memref<14x8x256xf32, #tpu.memory_space<vmem>>, vector<1x8x256xf32>
    %540 = vector.shape_cast %539 : vector<1x8x256xf32> to vector<8x256xf32>
    %541 = arith.mulf %538, %540 : vector<8x256xf32>
    %542 = vector.extract_strided_slice %5 {offsets = [0, 66], sizes = [8, 1], strides = [1, 1]} : vector<8x121xf32> to vector<8x1xf32>
    %543 = vector.broadcast %542 : vector<8x1xf32> to vector<8x256xf32>
    %544 = arith.mulf %541, %543 : vector<8x256xf32>
    %545 = arith.addf %509, %544 : vector<8x256xf32>
    %c4_i32_251 = arith.constant 4 : i32
    %546 = tpu.dynamic_rotate %537 by %c4_i32_251 dim 1 : vector<8x256xf32>, i32 -> vector<8x256xf32>
    %c3_252 = arith.constant 3 : index
    %c0_253 = arith.constant 0 : index
    %c0_254 = arith.constant 0 : index
    %547 = vector.load %arg3[%c3_252, %c0_253, %c0_254] : memref<14x8x256xf32, #tpu.memory_space<vmem>>, vector<1x8x256xf32>
    %548 = vector.shape_cast %547 : vector<1x8x256xf32> to vector<8x256xf32>
    %549 = arith.mulf %546, %548 : vector<8x256xf32>
    %550 = vector.extract_strided_slice %5 {offsets = [0, 67], sizes = [8, 1], strides = [1, 1]} : vector<8x121xf32> to vector<8x1xf32>
    %551 = vector.broadcast %550 : vector<8x1xf32> to vector<8x256xf32>
    %552 = arith.mulf %549, %551 : vector<8x256xf32>
    %553 = arith.addf %517, %552 : vector<8x256xf32>
    %c3_i32_255 = arith.constant 3 : i32
    %554 = tpu.dynamic_rotate %537 by %c3_i32_255 dim 1 : vector<8x256xf32>, i32 -> vector<8x256xf32>
    %c4_256 = arith.constant 4 : index
    %c0_257 = arith.constant 0 : index
    %c0_258 = arith.constant 0 : index
    %555 = vector.load %arg3[%c4_256, %c0_257, %c0_258] : memref<14x8x256xf32, #tpu.memory_space<vmem>>, vector<1x8x256xf32>
    %556 = vector.shape_cast %555 : vector<1x8x256xf32> to vector<8x256xf32>
    %557 = arith.mulf %554, %556 : vector<8x256xf32>
    %558 = vector.extract_strided_slice %5 {offsets = [0, 68], sizes = [8, 1], strides = [1, 1]} : vector<8x121xf32> to vector<8x1xf32>
    %559 = vector.broadcast %558 : vector<8x1xf32> to vector<8x256xf32>
    %560 = arith.mulf %557, %559 : vector<8x256xf32>
    %561 = arith.addf %525, %560 : vector<8x256xf32>
    %c2_i32_259 = arith.constant 2 : i32
    %562 = tpu.dynamic_rotate %537 by %c2_i32_259 dim 1 : vector<8x256xf32>, i32 -> vector<8x256xf32>
    %c5_260 = arith.constant 5 : index
    %c0_261 = arith.constant 0 : index
    %c0_262 = arith.constant 0 : index
    %563 = vector.load %arg3[%c5_260, %c0_261, %c0_262] : memref<14x8x256xf32, #tpu.memory_space<vmem>>, vector<1x8x256xf32>
    %564 = vector.shape_cast %563 : vector<1x8x256xf32> to vector<8x256xf32>
    %565 = arith.mulf %562, %564 : vector<8x256xf32>
    %566 = vector.extract_strided_slice %5 {offsets = [0, 69], sizes = [8, 1], strides = [1, 1]} : vector<8x121xf32> to vector<8x1xf32>
    %567 = vector.broadcast %566 : vector<8x1xf32> to vector<8x256xf32>
    %568 = arith.mulf %565, %567 : vector<8x256xf32>
    %569 = arith.addf %533, %568 : vector<8x256xf32>
    %c1_i32_263 = arith.constant 1 : i32
    %570 = tpu.dynamic_rotate %537 by %c1_i32_263 dim 1 : vector<8x256xf32>, i32 -> vector<8x256xf32>
    %c6_264 = arith.constant 6 : index
    %c0_265 = arith.constant 0 : index
    %c0_266 = arith.constant 0 : index
    %571 = vector.load %arg3[%c6_264, %c0_265, %c0_266] : memref<14x8x256xf32, #tpu.memory_space<vmem>>, vector<1x8x256xf32>
    %572 = vector.shape_cast %571 : vector<1x8x256xf32> to vector<8x256xf32>
    %573 = arith.mulf %570, %572 : vector<8x256xf32>
    %574 = vector.extract_strided_slice %5 {offsets = [0, 70], sizes = [8, 1], strides = [1, 1]} : vector<8x121xf32> to vector<8x1xf32>
    %575 = vector.broadcast %574 : vector<8x1xf32> to vector<8x256xf32>
    %576 = arith.mulf %573, %575 : vector<8x256xf32>
    %577 = arith.addf %545, %576 : vector<8x256xf32>
    %578 = vector.extract_strided_slice %5 {offsets = [0, 71], sizes = [8, 1], strides = [1, 1]} : vector<8x121xf32> to vector<8x1xf32>
    %579 = vector.broadcast %578 : vector<8x1xf32> to vector<8x256xf32>
    %580 = arith.mulf %537, %579 : vector<8x256xf32>
    %581 = arith.addf %553, %580 : vector<8x256xf32>
    %c255_i32_267 = arith.constant 255 : i32
    %582 = tpu.dynamic_rotate %537 by %c255_i32_267 dim 1 : vector<8x256xf32>, i32 -> vector<8x256xf32>
    %c7_268 = arith.constant 7 : index
    %c0_269 = arith.constant 0 : index
    %c0_270 = arith.constant 0 : index
    %583 = vector.load %arg3[%c7_268, %c0_269, %c0_270] : memref<14x8x256xf32, #tpu.memory_space<vmem>>, vector<1x8x256xf32>
    %584 = vector.shape_cast %583 : vector<1x8x256xf32> to vector<8x256xf32>
    %585 = arith.mulf %582, %584 : vector<8x256xf32>
    %586 = vector.extract_strided_slice %5 {offsets = [0, 72], sizes = [8, 1], strides = [1, 1]} : vector<8x121xf32> to vector<8x1xf32>
    %587 = vector.broadcast %586 : vector<8x1xf32> to vector<8x256xf32>
    %588 = arith.mulf %585, %587 : vector<8x256xf32>
    %589 = arith.addf %561, %588 : vector<8x256xf32>
    %c254_i32_271 = arith.constant 254 : i32
    %590 = tpu.dynamic_rotate %537 by %c254_i32_271 dim 1 : vector<8x256xf32>, i32 -> vector<8x256xf32>
    %c8_272 = arith.constant 8 : index
    %c0_273 = arith.constant 0 : index
    %c0_274 = arith.constant 0 : index
    %591 = vector.load %arg3[%c8_272, %c0_273, %c0_274] : memref<14x8x256xf32, #tpu.memory_space<vmem>>, vector<1x8x256xf32>
    %592 = vector.shape_cast %591 : vector<1x8x256xf32> to vector<8x256xf32>
    %593 = arith.mulf %590, %592 : vector<8x256xf32>
    %594 = vector.extract_strided_slice %5 {offsets = [0, 73], sizes = [8, 1], strides = [1, 1]} : vector<8x121xf32> to vector<8x1xf32>
    %595 = vector.broadcast %594 : vector<8x1xf32> to vector<8x256xf32>
    %596 = arith.mulf %593, %595 : vector<8x256xf32>
    %597 = arith.addf %569, %596 : vector<8x256xf32>
    %c253_i32_275 = arith.constant 253 : i32
    %598 = tpu.dynamic_rotate %537 by %c253_i32_275 dim 1 : vector<8x256xf32>, i32 -> vector<8x256xf32>
    %c9_276 = arith.constant 9 : index
    %c0_277 = arith.constant 0 : index
    %c0_278 = arith.constant 0 : index
    %599 = vector.load %arg3[%c9_276, %c0_277, %c0_278] : memref<14x8x256xf32, #tpu.memory_space<vmem>>, vector<1x8x256xf32>
    %600 = vector.shape_cast %599 : vector<1x8x256xf32> to vector<8x256xf32>
    %601 = arith.mulf %598, %600 : vector<8x256xf32>
    %602 = vector.extract_strided_slice %5 {offsets = [0, 74], sizes = [8, 1], strides = [1, 1]} : vector<8x121xf32> to vector<8x1xf32>
    %603 = vector.broadcast %602 : vector<8x1xf32> to vector<8x256xf32>
    %604 = arith.mulf %601, %603 : vector<8x256xf32>
    %605 = arith.addf %577, %604 : vector<8x256xf32>
    %c252_i32_279 = arith.constant 252 : i32
    %606 = tpu.dynamic_rotate %537 by %c252_i32_279 dim 1 : vector<8x256xf32>, i32 -> vector<8x256xf32>
    %c10_280 = arith.constant 10 : index
    %c0_281 = arith.constant 0 : index
    %c0_282 = arith.constant 0 : index
    %607 = vector.load %arg3[%c10_280, %c0_281, %c0_282] : memref<14x8x256xf32, #tpu.memory_space<vmem>>, vector<1x8x256xf32>
    %608 = vector.shape_cast %607 : vector<1x8x256xf32> to vector<8x256xf32>
    %609 = arith.mulf %606, %608 : vector<8x256xf32>
    %610 = vector.extract_strided_slice %5 {offsets = [0, 75], sizes = [8, 1], strides = [1, 1]} : vector<8x121xf32> to vector<8x1xf32>
    %611 = vector.broadcast %610 : vector<8x1xf32> to vector<8x256xf32>
    %612 = arith.mulf %609, %611 : vector<8x256xf32>
    %613 = arith.addf %581, %612 : vector<8x256xf32>
    %c251_i32_283 = arith.constant 251 : i32
    %614 = tpu.dynamic_rotate %537 by %c251_i32_283 dim 1 : vector<8x256xf32>, i32 -> vector<8x256xf32>
    %c11_284 = arith.constant 11 : index
    %c0_285 = arith.constant 0 : index
    %c0_286 = arith.constant 0 : index
    %615 = vector.load %arg3[%c11_284, %c0_285, %c0_286] : memref<14x8x256xf32, #tpu.memory_space<vmem>>, vector<1x8x256xf32>
    %616 = vector.shape_cast %615 : vector<1x8x256xf32> to vector<8x256xf32>
    %617 = arith.mulf %614, %616 : vector<8x256xf32>
    %618 = vector.extract_strided_slice %5 {offsets = [0, 76], sizes = [8, 1], strides = [1, 1]} : vector<8x121xf32> to vector<8x1xf32>
    %619 = vector.broadcast %618 : vector<8x1xf32> to vector<8x256xf32>
    %620 = arith.mulf %617, %619 : vector<8x256xf32>
    %621 = arith.addf %589, %620 : vector<8x256xf32>
    %c224_i32 = arith.constant 224 : i32
    %622 = tpu.dynamic_rotate %4 by %c224_i32 dim 1 : vector<8x256xf32>, i32 -> vector<8x256xf32>
    %c8_287 = arith.constant 8 : index
    %c0_288 = arith.constant 0 : index
    %c0_289 = arith.constant 0 : index
    %623 = vector.load %arg2[%c8_287, %c0_288, %c0_289] : memref<14x8x256xf32, #tpu.memory_space<vmem>>, vector<1x8x256xf32>
    %624 = vector.shape_cast %623 : vector<1x8x256xf32> to vector<8x256xf32>
    %625 = arith.mulf %622, %624 : vector<8x256xf32>
    %c5_i32_290 = arith.constant 5 : i32
    %626 = tpu.dynamic_rotate %625 by %c5_i32_290 dim 1 : vector<8x256xf32>, i32 -> vector<8x256xf32>
    %c2_291 = arith.constant 2 : index
    %c0_292 = arith.constant 0 : index
    %c0_293 = arith.constant 0 : index
    %627 = vector.load %arg3[%c2_291, %c0_292, %c0_293] : memref<14x8x256xf32, #tpu.memory_space<vmem>>, vector<1x8x256xf32>
    %628 = vector.shape_cast %627 : vector<1x8x256xf32> to vector<8x256xf32>
    %629 = arith.mulf %626, %628 : vector<8x256xf32>
    %630 = vector.extract_strided_slice %5 {offsets = [0, 77], sizes = [8, 1], strides = [1, 1]} : vector<8x121xf32> to vector<8x1xf32>
    %631 = vector.broadcast %630 : vector<8x1xf32> to vector<8x256xf32>
    %632 = arith.mulf %629, %631 : vector<8x256xf32>
    %633 = arith.addf %597, %632 : vector<8x256xf32>
    %c4_i32_294 = arith.constant 4 : i32
    %634 = tpu.dynamic_rotate %625 by %c4_i32_294 dim 1 : vector<8x256xf32>, i32 -> vector<8x256xf32>
    %c3_295 = arith.constant 3 : index
    %c0_296 = arith.constant 0 : index
    %c0_297 = arith.constant 0 : index
    %635 = vector.load %arg3[%c3_295, %c0_296, %c0_297] : memref<14x8x256xf32, #tpu.memory_space<vmem>>, vector<1x8x256xf32>
    %636 = vector.shape_cast %635 : vector<1x8x256xf32> to vector<8x256xf32>
    %637 = arith.mulf %634, %636 : vector<8x256xf32>
    %638 = vector.extract_strided_slice %5 {offsets = [0, 78], sizes = [8, 1], strides = [1, 1]} : vector<8x121xf32> to vector<8x1xf32>
    %639 = vector.broadcast %638 : vector<8x1xf32> to vector<8x256xf32>
    %640 = arith.mulf %637, %639 : vector<8x256xf32>
    %641 = arith.addf %605, %640 : vector<8x256xf32>
    %c3_i32_298 = arith.constant 3 : i32
    %642 = tpu.dynamic_rotate %625 by %c3_i32_298 dim 1 : vector<8x256xf32>, i32 -> vector<8x256xf32>
    %c4_299 = arith.constant 4 : index
    %c0_300 = arith.constant 0 : index
    %c0_301 = arith.constant 0 : index
    %643 = vector.load %arg3[%c4_299, %c0_300, %c0_301] : memref<14x8x256xf32, #tpu.memory_space<vmem>>, vector<1x8x256xf32>
    %644 = vector.shape_cast %643 : vector<1x8x256xf32> to vector<8x256xf32>
    %645 = arith.mulf %642, %644 : vector<8x256xf32>
    %646 = vector.extract_strided_slice %5 {offsets = [0, 79], sizes = [8, 1], strides = [1, 1]} : vector<8x121xf32> to vector<8x1xf32>
    %647 = vector.broadcast %646 : vector<8x1xf32> to vector<8x256xf32>
    %648 = arith.mulf %645, %647 : vector<8x256xf32>
    %649 = arith.addf %613, %648 : vector<8x256xf32>
    %c2_i32_302 = arith.constant 2 : i32
    %650 = tpu.dynamic_rotate %625 by %c2_i32_302 dim 1 : vector<8x256xf32>, i32 -> vector<8x256xf32>
    %c5_303 = arith.constant 5 : index
    %c0_304 = arith.constant 0 : index
    %c0_305 = arith.constant 0 : index
    %651 = vector.load %arg3[%c5_303, %c0_304, %c0_305] : memref<14x8x256xf32, #tpu.memory_space<vmem>>, vector<1x8x256xf32>
    %652 = vector.shape_cast %651 : vector<1x8x256xf32> to vector<8x256xf32>
    %653 = arith.mulf %650, %652 : vector<8x256xf32>
    %654 = vector.extract_strided_slice %5 {offsets = [0, 80], sizes = [8, 1], strides = [1, 1]} : vector<8x121xf32> to vector<8x1xf32>
    %655 = vector.broadcast %654 : vector<8x1xf32> to vector<8x256xf32>
    %656 = arith.mulf %653, %655 : vector<8x256xf32>
    %657 = arith.addf %621, %656 : vector<8x256xf32>
    %c1_i32_306 = arith.constant 1 : i32
    %658 = tpu.dynamic_rotate %625 by %c1_i32_306 dim 1 : vector<8x256xf32>, i32 -> vector<8x256xf32>
    %c6_307 = arith.constant 6 : index
    %c0_308 = arith.constant 0 : index
    %c0_309 = arith.constant 0 : index
    %659 = vector.load %arg3[%c6_307, %c0_308, %c0_309] : memref<14x8x256xf32, #tpu.memory_space<vmem>>, vector<1x8x256xf32>
    %660 = vector.shape_cast %659 : vector<1x8x256xf32> to vector<8x256xf32>
    %661 = arith.mulf %658, %660 : vector<8x256xf32>
    %662 = vector.extract_strided_slice %5 {offsets = [0, 81], sizes = [8, 1], strides = [1, 1]} : vector<8x121xf32> to vector<8x1xf32>
    %663 = vector.broadcast %662 : vector<8x1xf32> to vector<8x256xf32>
    %664 = arith.mulf %661, %663 : vector<8x256xf32>
    %665 = arith.addf %633, %664 : vector<8x256xf32>
    %666 = vector.extract_strided_slice %5 {offsets = [0, 82], sizes = [8, 1], strides = [1, 1]} : vector<8x121xf32> to vector<8x1xf32>
    %667 = vector.broadcast %666 : vector<8x1xf32> to vector<8x256xf32>
    %668 = arith.mulf %625, %667 : vector<8x256xf32>
    %669 = arith.addf %641, %668 : vector<8x256xf32>
    %c255_i32_310 = arith.constant 255 : i32
    %670 = tpu.dynamic_rotate %625 by %c255_i32_310 dim 1 : vector<8x256xf32>, i32 -> vector<8x256xf32>
    %c7_311 = arith.constant 7 : index
    %c0_312 = arith.constant 0 : index
    %c0_313 = arith.constant 0 : index
    %671 = vector.load %arg3[%c7_311, %c0_312, %c0_313] : memref<14x8x256xf32, #tpu.memory_space<vmem>>, vector<1x8x256xf32>
    %672 = vector.shape_cast %671 : vector<1x8x256xf32> to vector<8x256xf32>
    %673 = arith.mulf %670, %672 : vector<8x256xf32>
    %674 = vector.extract_strided_slice %5 {offsets = [0, 83], sizes = [8, 1], strides = [1, 1]} : vector<8x121xf32> to vector<8x1xf32>
    %675 = vector.broadcast %674 : vector<8x1xf32> to vector<8x256xf32>
    %676 = arith.mulf %673, %675 : vector<8x256xf32>
    %677 = arith.addf %649, %676 : vector<8x256xf32>
    %c254_i32_314 = arith.constant 254 : i32
    %678 = tpu.dynamic_rotate %625 by %c254_i32_314 dim 1 : vector<8x256xf32>, i32 -> vector<8x256xf32>
    %c8_315 = arith.constant 8 : index
    %c0_316 = arith.constant 0 : index
    %c0_317 = arith.constant 0 : index
    %679 = vector.load %arg3[%c8_315, %c0_316, %c0_317] : memref<14x8x256xf32, #tpu.memory_space<vmem>>, vector<1x8x256xf32>
    %680 = vector.shape_cast %679 : vector<1x8x256xf32> to vector<8x256xf32>
    %681 = arith.mulf %678, %680 : vector<8x256xf32>
    %682 = vector.extract_strided_slice %5 {offsets = [0, 84], sizes = [8, 1], strides = [1, 1]} : vector<8x121xf32> to vector<8x1xf32>
    %683 = vector.broadcast %682 : vector<8x1xf32> to vector<8x256xf32>
    %684 = arith.mulf %681, %683 : vector<8x256xf32>
    %685 = arith.addf %657, %684 : vector<8x256xf32>
    %c253_i32_318 = arith.constant 253 : i32
    %686 = tpu.dynamic_rotate %625 by %c253_i32_318 dim 1 : vector<8x256xf32>, i32 -> vector<8x256xf32>
    %c9_319 = arith.constant 9 : index
    %c0_320 = arith.constant 0 : index
    %c0_321 = arith.constant 0 : index
    %687 = vector.load %arg3[%c9_319, %c0_320, %c0_321] : memref<14x8x256xf32, #tpu.memory_space<vmem>>, vector<1x8x256xf32>
    %688 = vector.shape_cast %687 : vector<1x8x256xf32> to vector<8x256xf32>
    %689 = arith.mulf %686, %688 : vector<8x256xf32>
    %690 = vector.extract_strided_slice %5 {offsets = [0, 85], sizes = [8, 1], strides = [1, 1]} : vector<8x121xf32> to vector<8x1xf32>
    %691 = vector.broadcast %690 : vector<8x1xf32> to vector<8x256xf32>
    %692 = arith.mulf %689, %691 : vector<8x256xf32>
    %693 = arith.addf %665, %692 : vector<8x256xf32>
    %c252_i32_322 = arith.constant 252 : i32
    %694 = tpu.dynamic_rotate %625 by %c252_i32_322 dim 1 : vector<8x256xf32>, i32 -> vector<8x256xf32>
    %c10_323 = arith.constant 10 : index
    %c0_324 = arith.constant 0 : index
    %c0_325 = arith.constant 0 : index
    %695 = vector.load %arg3[%c10_323, %c0_324, %c0_325] : memref<14x8x256xf32, #tpu.memory_space<vmem>>, vector<1x8x256xf32>
    %696 = vector.shape_cast %695 : vector<1x8x256xf32> to vector<8x256xf32>
    %697 = arith.mulf %694, %696 : vector<8x256xf32>
    %698 = vector.extract_strided_slice %5 {offsets = [0, 86], sizes = [8, 1], strides = [1, 1]} : vector<8x121xf32> to vector<8x1xf32>
    %699 = vector.broadcast %698 : vector<8x1xf32> to vector<8x256xf32>
    %700 = arith.mulf %697, %699 : vector<8x256xf32>
    %701 = arith.addf %669, %700 : vector<8x256xf32>
    %c251_i32_326 = arith.constant 251 : i32
    %702 = tpu.dynamic_rotate %625 by %c251_i32_326 dim 1 : vector<8x256xf32>, i32 -> vector<8x256xf32>
    %c11_327 = arith.constant 11 : index
    %c0_328 = arith.constant 0 : index
    %c0_329 = arith.constant 0 : index
    %703 = vector.load %arg3[%c11_327, %c0_328, %c0_329] : memref<14x8x256xf32, #tpu.memory_space<vmem>>, vector<1x8x256xf32>
    %704 = vector.shape_cast %703 : vector<1x8x256xf32> to vector<8x256xf32>
    %705 = arith.mulf %702, %704 : vector<8x256xf32>
    %706 = vector.extract_strided_slice %5 {offsets = [0, 87], sizes = [8, 1], strides = [1, 1]} : vector<8x121xf32> to vector<8x1xf32>
    %707 = vector.broadcast %706 : vector<8x1xf32> to vector<8x256xf32>
    %708 = arith.mulf %705, %707 : vector<8x256xf32>
    %709 = arith.addf %677, %708 : vector<8x256xf32>
    %c208_i32 = arith.constant 208 : i32
    %710 = tpu.dynamic_rotate %4 by %c208_i32 dim 1 : vector<8x256xf32>, i32 -> vector<8x256xf32>
    %c9_330 = arith.constant 9 : index
    %c0_331 = arith.constant 0 : index
    %c0_332 = arith.constant 0 : index
    %711 = vector.load %arg2[%c9_330, %c0_331, %c0_332] : memref<14x8x256xf32, #tpu.memory_space<vmem>>, vector<1x8x256xf32>
    %712 = vector.shape_cast %711 : vector<1x8x256xf32> to vector<8x256xf32>
    %713 = arith.mulf %710, %712 : vector<8x256xf32>
    %c5_i32_333 = arith.constant 5 : i32
    %714 = tpu.dynamic_rotate %713 by %c5_i32_333 dim 1 : vector<8x256xf32>, i32 -> vector<8x256xf32>
    %c2_334 = arith.constant 2 : index
    %c0_335 = arith.constant 0 : index
    %c0_336 = arith.constant 0 : index
    %715 = vector.load %arg3[%c2_334, %c0_335, %c0_336] : memref<14x8x256xf32, #tpu.memory_space<vmem>>, vector<1x8x256xf32>
    %716 = vector.shape_cast %715 : vector<1x8x256xf32> to vector<8x256xf32>
    %717 = arith.mulf %714, %716 : vector<8x256xf32>
    %718 = vector.extract_strided_slice %5 {offsets = [0, 88], sizes = [8, 1], strides = [1, 1]} : vector<8x121xf32> to vector<8x1xf32>
    %719 = vector.broadcast %718 : vector<8x1xf32> to vector<8x256xf32>
    %720 = arith.mulf %717, %719 : vector<8x256xf32>
    %721 = arith.addf %685, %720 : vector<8x256xf32>
    %c4_i32_337 = arith.constant 4 : i32
    %722 = tpu.dynamic_rotate %713 by %c4_i32_337 dim 1 : vector<8x256xf32>, i32 -> vector<8x256xf32>
    %c3_338 = arith.constant 3 : index
    %c0_339 = arith.constant 0 : index
    %c0_340 = arith.constant 0 : index
    %723 = vector.load %arg3[%c3_338, %c0_339, %c0_340] : memref<14x8x256xf32, #tpu.memory_space<vmem>>, vector<1x8x256xf32>
    %724 = vector.shape_cast %723 : vector<1x8x256xf32> to vector<8x256xf32>
    %725 = arith.mulf %722, %724 : vector<8x256xf32>
    %726 = vector.extract_strided_slice %5 {offsets = [0, 89], sizes = [8, 1], strides = [1, 1]} : vector<8x121xf32> to vector<8x1xf32>
    %727 = vector.broadcast %726 : vector<8x1xf32> to vector<8x256xf32>
    %728 = arith.mulf %725, %727 : vector<8x256xf32>
    %729 = arith.addf %693, %728 : vector<8x256xf32>
    %c3_i32_341 = arith.constant 3 : i32
    %730 = tpu.dynamic_rotate %713 by %c3_i32_341 dim 1 : vector<8x256xf32>, i32 -> vector<8x256xf32>
    %c4_342 = arith.constant 4 : index
    %c0_343 = arith.constant 0 : index
    %c0_344 = arith.constant 0 : index
    %731 = vector.load %arg3[%c4_342, %c0_343, %c0_344] : memref<14x8x256xf32, #tpu.memory_space<vmem>>, vector<1x8x256xf32>
    %732 = vector.shape_cast %731 : vector<1x8x256xf32> to vector<8x256xf32>
    %733 = arith.mulf %730, %732 : vector<8x256xf32>
    %734 = vector.extract_strided_slice %5 {offsets = [0, 90], sizes = [8, 1], strides = [1, 1]} : vector<8x121xf32> to vector<8x1xf32>
    %735 = vector.broadcast %734 : vector<8x1xf32> to vector<8x256xf32>
    %736 = arith.mulf %733, %735 : vector<8x256xf32>
    %737 = arith.addf %701, %736 : vector<8x256xf32>
    %c2_i32_345 = arith.constant 2 : i32
    %738 = tpu.dynamic_rotate %713 by %c2_i32_345 dim 1 : vector<8x256xf32>, i32 -> vector<8x256xf32>
    %c5_346 = arith.constant 5 : index
    %c0_347 = arith.constant 0 : index
    %c0_348 = arith.constant 0 : index
    %739 = vector.load %arg3[%c5_346, %c0_347, %c0_348] : memref<14x8x256xf32, #tpu.memory_space<vmem>>, vector<1x8x256xf32>
    %740 = vector.shape_cast %739 : vector<1x8x256xf32> to vector<8x256xf32>
    %741 = arith.mulf %738, %740 : vector<8x256xf32>
    %742 = vector.extract_strided_slice %5 {offsets = [0, 91], sizes = [8, 1], strides = [1, 1]} : vector<8x121xf32> to vector<8x1xf32>
    %743 = vector.broadcast %742 : vector<8x1xf32> to vector<8x256xf32>
    %744 = arith.mulf %741, %743 : vector<8x256xf32>
    %745 = arith.addf %709, %744 : vector<8x256xf32>
    %c1_i32_349 = arith.constant 1 : i32
    %746 = tpu.dynamic_rotate %713 by %c1_i32_349 dim 1 : vector<8x256xf32>, i32 -> vector<8x256xf32>
    %c6_350 = arith.constant 6 : index
    %c0_351 = arith.constant 0 : index
    %c0_352 = arith.constant 0 : index
    %747 = vector.load %arg3[%c6_350, %c0_351, %c0_352] : memref<14x8x256xf32, #tpu.memory_space<vmem>>, vector<1x8x256xf32>
    %748 = vector.shape_cast %747 : vector<1x8x256xf32> to vector<8x256xf32>
    %749 = arith.mulf %746, %748 : vector<8x256xf32>
    %750 = vector.extract_strided_slice %5 {offsets = [0, 92], sizes = [8, 1], strides = [1, 1]} : vector<8x121xf32> to vector<8x1xf32>
    %751 = vector.broadcast %750 : vector<8x1xf32> to vector<8x256xf32>
    %752 = arith.mulf %749, %751 : vector<8x256xf32>
    %753 = arith.addf %721, %752 : vector<8x256xf32>
    %754 = vector.extract_strided_slice %5 {offsets = [0, 93], sizes = [8, 1], strides = [1, 1]} : vector<8x121xf32> to vector<8x1xf32>
    %755 = vector.broadcast %754 : vector<8x1xf32> to vector<8x256xf32>
    %756 = arith.mulf %713, %755 : vector<8x256xf32>
    %757 = arith.addf %729, %756 : vector<8x256xf32>
    %c255_i32_353 = arith.constant 255 : i32
    %758 = tpu.dynamic_rotate %713 by %c255_i32_353 dim 1 : vector<8x256xf32>, i32 -> vector<8x256xf32>
    %c7_354 = arith.constant 7 : index
    %c0_355 = arith.constant 0 : index
    %c0_356 = arith.constant 0 : index
    %759 = vector.load %arg3[%c7_354, %c0_355, %c0_356] : memref<14x8x256xf32, #tpu.memory_space<vmem>>, vector<1x8x256xf32>
    %760 = vector.shape_cast %759 : vector<1x8x256xf32> to vector<8x256xf32>
    %761 = arith.mulf %758, %760 : vector<8x256xf32>
    %762 = vector.extract_strided_slice %5 {offsets = [0, 94], sizes = [8, 1], strides = [1, 1]} : vector<8x121xf32> to vector<8x1xf32>
    %763 = vector.broadcast %762 : vector<8x1xf32> to vector<8x256xf32>
    %764 = arith.mulf %761, %763 : vector<8x256xf32>
    %765 = arith.addf %737, %764 : vector<8x256xf32>
    %c254_i32_357 = arith.constant 254 : i32
    %766 = tpu.dynamic_rotate %713 by %c254_i32_357 dim 1 : vector<8x256xf32>, i32 -> vector<8x256xf32>
    %c8_358 = arith.constant 8 : index
    %c0_359 = arith.constant 0 : index
    %c0_360 = arith.constant 0 : index
    %767 = vector.load %arg3[%c8_358, %c0_359, %c0_360] : memref<14x8x256xf32, #tpu.memory_space<vmem>>, vector<1x8x256xf32>
    %768 = vector.shape_cast %767 : vector<1x8x256xf32> to vector<8x256xf32>
    %769 = arith.mulf %766, %768 : vector<8x256xf32>
    %770 = vector.extract_strided_slice %5 {offsets = [0, 95], sizes = [8, 1], strides = [1, 1]} : vector<8x121xf32> to vector<8x1xf32>
    %771 = vector.broadcast %770 : vector<8x1xf32> to vector<8x256xf32>
    %772 = arith.mulf %769, %771 : vector<8x256xf32>
    %773 = arith.addf %745, %772 : vector<8x256xf32>
    %c253_i32_361 = arith.constant 253 : i32
    %774 = tpu.dynamic_rotate %713 by %c253_i32_361 dim 1 : vector<8x256xf32>, i32 -> vector<8x256xf32>
    %c9_362 = arith.constant 9 : index
    %c0_363 = arith.constant 0 : index
    %c0_364 = arith.constant 0 : index
    %775 = vector.load %arg3[%c9_362, %c0_363, %c0_364] : memref<14x8x256xf32, #tpu.memory_space<vmem>>, vector<1x8x256xf32>
    %776 = vector.shape_cast %775 : vector<1x8x256xf32> to vector<8x256xf32>
    %777 = arith.mulf %774, %776 : vector<8x256xf32>
    %778 = vector.extract_strided_slice %5 {offsets = [0, 96], sizes = [8, 1], strides = [1, 1]} : vector<8x121xf32> to vector<8x1xf32>
    %779 = vector.broadcast %778 : vector<8x1xf32> to vector<8x256xf32>
    %780 = arith.mulf %777, %779 : vector<8x256xf32>
    %781 = arith.addf %753, %780 : vector<8x256xf32>
    %c252_i32_365 = arith.constant 252 : i32
    %782 = tpu.dynamic_rotate %713 by %c252_i32_365 dim 1 : vector<8x256xf32>, i32 -> vector<8x256xf32>
    %c10_366 = arith.constant 10 : index
    %c0_367 = arith.constant 0 : index
    %c0_368 = arith.constant 0 : index
    %783 = vector.load %arg3[%c10_366, %c0_367, %c0_368] : memref<14x8x256xf32, #tpu.memory_space<vmem>>, vector<1x8x256xf32>
    %784 = vector.shape_cast %783 : vector<1x8x256xf32> to vector<8x256xf32>
    %785 = arith.mulf %782, %784 : vector<8x256xf32>
    %786 = vector.extract_strided_slice %5 {offsets = [0, 97], sizes = [8, 1], strides = [1, 1]} : vector<8x121xf32> to vector<8x1xf32>
    %787 = vector.broadcast %786 : vector<8x1xf32> to vector<8x256xf32>
    %788 = arith.mulf %785, %787 : vector<8x256xf32>
    %789 = arith.addf %757, %788 : vector<8x256xf32>
    %c251_i32_369 = arith.constant 251 : i32
    %790 = tpu.dynamic_rotate %713 by %c251_i32_369 dim 1 : vector<8x256xf32>, i32 -> vector<8x256xf32>
    %c11_370 = arith.constant 11 : index
    %c0_371 = arith.constant 0 : index
    %c0_372 = arith.constant 0 : index
    %791 = vector.load %arg3[%c11_370, %c0_371, %c0_372] : memref<14x8x256xf32, #tpu.memory_space<vmem>>, vector<1x8x256xf32>
    %792 = vector.shape_cast %791 : vector<1x8x256xf32> to vector<8x256xf32>
    %793 = arith.mulf %790, %792 : vector<8x256xf32>
    %794 = vector.extract_strided_slice %5 {offsets = [0, 98], sizes = [8, 1], strides = [1, 1]} : vector<8x121xf32> to vector<8x1xf32>
    %795 = vector.broadcast %794 : vector<8x1xf32> to vector<8x256xf32>
    %796 = arith.mulf %793, %795 : vector<8x256xf32>
    %797 = arith.addf %765, %796 : vector<8x256xf32>
    %c192_i32 = arith.constant 192 : i32
    %798 = tpu.dynamic_rotate %4 by %c192_i32 dim 1 : vector<8x256xf32>, i32 -> vector<8x256xf32>
    %c10_373 = arith.constant 10 : index
    %c0_374 = arith.constant 0 : index
    %c0_375 = arith.constant 0 : index
    %799 = vector.load %arg2[%c10_373, %c0_374, %c0_375] : memref<14x8x256xf32, #tpu.memory_space<vmem>>, vector<1x8x256xf32>
    %800 = vector.shape_cast %799 : vector<1x8x256xf32> to vector<8x256xf32>
    %801 = arith.mulf %798, %800 : vector<8x256xf32>
    %c5_i32_376 = arith.constant 5 : i32
    %802 = tpu.dynamic_rotate %801 by %c5_i32_376 dim 1 : vector<8x256xf32>, i32 -> vector<8x256xf32>
    %c2_377 = arith.constant 2 : index
    %c0_378 = arith.constant 0 : index
    %c0_379 = arith.constant 0 : index
    %803 = vector.load %arg3[%c2_377, %c0_378, %c0_379] : memref<14x8x256xf32, #tpu.memory_space<vmem>>, vector<1x8x256xf32>
    %804 = vector.shape_cast %803 : vector<1x8x256xf32> to vector<8x256xf32>
    %805 = arith.mulf %802, %804 : vector<8x256xf32>
    %806 = vector.extract_strided_slice %5 {offsets = [0, 99], sizes = [8, 1], strides = [1, 1]} : vector<8x121xf32> to vector<8x1xf32>
    %807 = vector.broadcast %806 : vector<8x1xf32> to vector<8x256xf32>
    %808 = arith.mulf %805, %807 : vector<8x256xf32>
    %809 = arith.addf %773, %808 : vector<8x256xf32>
    %c4_i32_380 = arith.constant 4 : i32
    %810 = tpu.dynamic_rotate %801 by %c4_i32_380 dim 1 : vector<8x256xf32>, i32 -> vector<8x256xf32>
    %c3_381 = arith.constant 3 : index
    %c0_382 = arith.constant 0 : index
    %c0_383 = arith.constant 0 : index
    %811 = vector.load %arg3[%c3_381, %c0_382, %c0_383] : memref<14x8x256xf32, #tpu.memory_space<vmem>>, vector<1x8x256xf32>
    %812 = vector.shape_cast %811 : vector<1x8x256xf32> to vector<8x256xf32>
    %813 = arith.mulf %810, %812 : vector<8x256xf32>
    %814 = vector.extract_strided_slice %5 {offsets = [0, 100], sizes = [8, 1], strides = [1, 1]} : vector<8x121xf32> to vector<8x1xf32>
    %815 = vector.broadcast %814 : vector<8x1xf32> to vector<8x256xf32>
    %816 = arith.mulf %813, %815 : vector<8x256xf32>
    %817 = arith.addf %781, %816 : vector<8x256xf32>
    %c3_i32_384 = arith.constant 3 : i32
    %818 = tpu.dynamic_rotate %801 by %c3_i32_384 dim 1 : vector<8x256xf32>, i32 -> vector<8x256xf32>
    %c4_385 = arith.constant 4 : index
    %c0_386 = arith.constant 0 : index
    %c0_387 = arith.constant 0 : index
    %819 = vector.load %arg3[%c4_385, %c0_386, %c0_387] : memref<14x8x256xf32, #tpu.memory_space<vmem>>, vector<1x8x256xf32>
    %820 = vector.shape_cast %819 : vector<1x8x256xf32> to vector<8x256xf32>
    %821 = arith.mulf %818, %820 : vector<8x256xf32>
    %822 = vector.extract_strided_slice %5 {offsets = [0, 101], sizes = [8, 1], strides = [1, 1]} : vector<8x121xf32> to vector<8x1xf32>
    %823 = vector.broadcast %822 : vector<8x1xf32> to vector<8x256xf32>
    %824 = arith.mulf %821, %823 : vector<8x256xf32>
    %825 = arith.addf %789, %824 : vector<8x256xf32>
    %c2_i32_388 = arith.constant 2 : i32
    %826 = tpu.dynamic_rotate %801 by %c2_i32_388 dim 1 : vector<8x256xf32>, i32 -> vector<8x256xf32>
    %c5_389 = arith.constant 5 : index
    %c0_390 = arith.constant 0 : index
    %c0_391 = arith.constant 0 : index
    %827 = vector.load %arg3[%c5_389, %c0_390, %c0_391] : memref<14x8x256xf32, #tpu.memory_space<vmem>>, vector<1x8x256xf32>
    %828 = vector.shape_cast %827 : vector<1x8x256xf32> to vector<8x256xf32>
    %829 = arith.mulf %826, %828 : vector<8x256xf32>
    %830 = vector.extract_strided_slice %5 {offsets = [0, 102], sizes = [8, 1], strides = [1, 1]} : vector<8x121xf32> to vector<8x1xf32>
    %831 = vector.broadcast %830 : vector<8x1xf32> to vector<8x256xf32>
    %832 = arith.mulf %829, %831 : vector<8x256xf32>
    %833 = arith.addf %797, %832 : vector<8x256xf32>
    %c1_i32_392 = arith.constant 1 : i32
    %834 = tpu.dynamic_rotate %801 by %c1_i32_392 dim 1 : vector<8x256xf32>, i32 -> vector<8x256xf32>
    %c6_393 = arith.constant 6 : index
    %c0_394 = arith.constant 0 : index
    %c0_395 = arith.constant 0 : index
    %835 = vector.load %arg3[%c6_393, %c0_394, %c0_395] : memref<14x8x256xf32, #tpu.memory_space<vmem>>, vector<1x8x256xf32>
    %836 = vector.shape_cast %835 : vector<1x8x256xf32> to vector<8x256xf32>
    %837 = arith.mulf %834, %836 : vector<8x256xf32>
    %838 = vector.extract_strided_slice %5 {offsets = [0, 103], sizes = [8, 1], strides = [1, 1]} : vector<8x121xf32> to vector<8x1xf32>
    %839 = vector.broadcast %838 : vector<8x1xf32> to vector<8x256xf32>
    %840 = arith.mulf %837, %839 : vector<8x256xf32>
    %841 = arith.addf %809, %840 : vector<8x256xf32>
    %842 = vector.extract_strided_slice %5 {offsets = [0, 104], sizes = [8, 1], strides = [1, 1]} : vector<8x121xf32> to vector<8x1xf32>
    %843 = vector.broadcast %842 : vector<8x1xf32> to vector<8x256xf32>
    %844 = arith.mulf %801, %843 : vector<8x256xf32>
    %845 = arith.addf %817, %844 : vector<8x256xf32>
    %c255_i32_396 = arith.constant 255 : i32
    %846 = tpu.dynamic_rotate %801 by %c255_i32_396 dim 1 : vector<8x256xf32>, i32 -> vector<8x256xf32>
    %c7_397 = arith.constant 7 : index
    %c0_398 = arith.constant 0 : index
    %c0_399 = arith.constant 0 : index
    %847 = vector.load %arg3[%c7_397, %c0_398, %c0_399] : memref<14x8x256xf32, #tpu.memory_space<vmem>>, vector<1x8x256xf32>
    %848 = vector.shape_cast %847 : vector<1x8x256xf32> to vector<8x256xf32>
    %849 = arith.mulf %846, %848 : vector<8x256xf32>
    %850 = vector.extract_strided_slice %5 {offsets = [0, 105], sizes = [8, 1], strides = [1, 1]} : vector<8x121xf32> to vector<8x1xf32>
    %851 = vector.broadcast %850 : vector<8x1xf32> to vector<8x256xf32>
    %852 = arith.mulf %849, %851 : vector<8x256xf32>
    %853 = arith.addf %825, %852 : vector<8x256xf32>
    %c254_i32_400 = arith.constant 254 : i32
    %854 = tpu.dynamic_rotate %801 by %c254_i32_400 dim 1 : vector<8x256xf32>, i32 -> vector<8x256xf32>
    %c8_401 = arith.constant 8 : index
    %c0_402 = arith.constant 0 : index
    %c0_403 = arith.constant 0 : index
    %855 = vector.load %arg3[%c8_401, %c0_402, %c0_403] : memref<14x8x256xf32, #tpu.memory_space<vmem>>, vector<1x8x256xf32>
    %856 = vector.shape_cast %855 : vector<1x8x256xf32> to vector<8x256xf32>
    %857 = arith.mulf %854, %856 : vector<8x256xf32>
    %858 = vector.extract_strided_slice %5 {offsets = [0, 106], sizes = [8, 1], strides = [1, 1]} : vector<8x121xf32> to vector<8x1xf32>
    %859 = vector.broadcast %858 : vector<8x1xf32> to vector<8x256xf32>
    %860 = arith.mulf %857, %859 : vector<8x256xf32>
    %861 = arith.addf %833, %860 : vector<8x256xf32>
    %c253_i32_404 = arith.constant 253 : i32
    %862 = tpu.dynamic_rotate %801 by %c253_i32_404 dim 1 : vector<8x256xf32>, i32 -> vector<8x256xf32>
    %c9_405 = arith.constant 9 : index
    %c0_406 = arith.constant 0 : index
    %c0_407 = arith.constant 0 : index
    %863 = vector.load %arg3[%c9_405, %c0_406, %c0_407] : memref<14x8x256xf32, #tpu.memory_space<vmem>>, vector<1x8x256xf32>
    %864 = vector.shape_cast %863 : vector<1x8x256xf32> to vector<8x256xf32>
    %865 = arith.mulf %862, %864 : vector<8x256xf32>
    %866 = vector.extract_strided_slice %5 {offsets = [0, 107], sizes = [8, 1], strides = [1, 1]} : vector<8x121xf32> to vector<8x1xf32>
    %867 = vector.broadcast %866 : vector<8x1xf32> to vector<8x256xf32>
    %868 = arith.mulf %865, %867 : vector<8x256xf32>
    %869 = arith.addf %841, %868 : vector<8x256xf32>
    %c252_i32_408 = arith.constant 252 : i32
    %870 = tpu.dynamic_rotate %801 by %c252_i32_408 dim 1 : vector<8x256xf32>, i32 -> vector<8x256xf32>
    %c10_409 = arith.constant 10 : index
    %c0_410 = arith.constant 0 : index
    %c0_411 = arith.constant 0 : index
    %871 = vector.load %arg3[%c10_409, %c0_410, %c0_411] : memref<14x8x256xf32, #tpu.memory_space<vmem>>, vector<1x8x256xf32>
    %872 = vector.shape_cast %871 : vector<1x8x256xf32> to vector<8x256xf32>
    %873 = arith.mulf %870, %872 : vector<8x256xf32>
    %874 = vector.extract_strided_slice %5 {offsets = [0, 108], sizes = [8, 1], strides = [1, 1]} : vector<8x121xf32> to vector<8x1xf32>
    %875 = vector.broadcast %874 : vector<8x1xf32> to vector<8x256xf32>
    %876 = arith.mulf %873, %875 : vector<8x256xf32>
    %877 = arith.addf %845, %876 : vector<8x256xf32>
    %c251_i32_412 = arith.constant 251 : i32
    %878 = tpu.dynamic_rotate %801 by %c251_i32_412 dim 1 : vector<8x256xf32>, i32 -> vector<8x256xf32>
    %c11_413 = arith.constant 11 : index
    %c0_414 = arith.constant 0 : index
    %c0_415 = arith.constant 0 : index
    %879 = vector.load %arg3[%c11_413, %c0_414, %c0_415] : memref<14x8x256xf32, #tpu.memory_space<vmem>>, vector<1x8x256xf32>
    %880 = vector.shape_cast %879 : vector<1x8x256xf32> to vector<8x256xf32>
    %881 = arith.mulf %878, %880 : vector<8x256xf32>
    %882 = vector.extract_strided_slice %5 {offsets = [0, 109], sizes = [8, 1], strides = [1, 1]} : vector<8x121xf32> to vector<8x1xf32>
    %883 = vector.broadcast %882 : vector<8x1xf32> to vector<8x256xf32>
    %884 = arith.mulf %881, %883 : vector<8x256xf32>
    %885 = arith.addf %853, %884 : vector<8x256xf32>
    %c176_i32 = arith.constant 176 : i32
    %886 = tpu.dynamic_rotate %4 by %c176_i32 dim 1 : vector<8x256xf32>, i32 -> vector<8x256xf32>
    %c11_416 = arith.constant 11 : index
    %c0_417 = arith.constant 0 : index
    %c0_418 = arith.constant 0 : index
    %887 = vector.load %arg2[%c11_416, %c0_417, %c0_418] : memref<14x8x256xf32, #tpu.memory_space<vmem>>, vector<1x8x256xf32>
    %888 = vector.shape_cast %887 : vector<1x8x256xf32> to vector<8x256xf32>
    %889 = arith.mulf %886, %888 : vector<8x256xf32>
    %c5_i32_419 = arith.constant 5 : i32
    %890 = tpu.dynamic_rotate %889 by %c5_i32_419 dim 1 : vector<8x256xf32>, i32 -> vector<8x256xf32>
    %c2_420 = arith.constant 2 : index
    %c0_421 = arith.constant 0 : index
    %c0_422 = arith.constant 0 : index
    %891 = vector.load %arg3[%c2_420, %c0_421, %c0_422] : memref<14x8x256xf32, #tpu.memory_space<vmem>>, vector<1x8x256xf32>
    %892 = vector.shape_cast %891 : vector<1x8x256xf32> to vector<8x256xf32>
    %893 = arith.mulf %890, %892 : vector<8x256xf32>
    %894 = vector.extract_strided_slice %5 {offsets = [0, 110], sizes = [8, 1], strides = [1, 1]} : vector<8x121xf32> to vector<8x1xf32>
    %895 = vector.broadcast %894 : vector<8x1xf32> to vector<8x256xf32>
    %896 = arith.mulf %893, %895 : vector<8x256xf32>
    %897 = arith.addf %861, %896 : vector<8x256xf32>
    %c4_i32_423 = arith.constant 4 : i32
    %898 = tpu.dynamic_rotate %889 by %c4_i32_423 dim 1 : vector<8x256xf32>, i32 -> vector<8x256xf32>
    %c3_424 = arith.constant 3 : index
    %c0_425 = arith.constant 0 : index
    %c0_426 = arith.constant 0 : index
    %899 = vector.load %arg3[%c3_424, %c0_425, %c0_426] : memref<14x8x256xf32, #tpu.memory_space<vmem>>, vector<1x8x256xf32>
    %900 = vector.shape_cast %899 : vector<1x8x256xf32> to vector<8x256xf32>
    %901 = arith.mulf %898, %900 : vector<8x256xf32>
    %902 = vector.extract_strided_slice %5 {offsets = [0, 111], sizes = [8, 1], strides = [1, 1]} : vector<8x121xf32> to vector<8x1xf32>
    %903 = vector.broadcast %902 : vector<8x1xf32> to vector<8x256xf32>
    %904 = arith.mulf %901, %903 : vector<8x256xf32>
    %905 = arith.addf %869, %904 : vector<8x256xf32>
    %c3_i32_427 = arith.constant 3 : i32
    %906 = tpu.dynamic_rotate %889 by %c3_i32_427 dim 1 : vector<8x256xf32>, i32 -> vector<8x256xf32>
    %c4_428 = arith.constant 4 : index
    %c0_429 = arith.constant 0 : index
    %c0_430 = arith.constant 0 : index
    %907 = vector.load %arg3[%c4_428, %c0_429, %c0_430] : memref<14x8x256xf32, #tpu.memory_space<vmem>>, vector<1x8x256xf32>
    %908 = vector.shape_cast %907 : vector<1x8x256xf32> to vector<8x256xf32>
    %909 = arith.mulf %906, %908 : vector<8x256xf32>
    %910 = vector.extract_strided_slice %5 {offsets = [0, 112], sizes = [8, 1], strides = [1, 1]} : vector<8x121xf32> to vector<8x1xf32>
    %911 = vector.broadcast %910 : vector<8x1xf32> to vector<8x256xf32>
    %912 = arith.mulf %909, %911 : vector<8x256xf32>
    %913 = arith.addf %877, %912 : vector<8x256xf32>
    %c2_i32_431 = arith.constant 2 : i32
    %914 = tpu.dynamic_rotate %889 by %c2_i32_431 dim 1 : vector<8x256xf32>, i32 -> vector<8x256xf32>
    %c5_432 = arith.constant 5 : index
    %c0_433 = arith.constant 0 : index
    %c0_434 = arith.constant 0 : index
    %915 = vector.load %arg3[%c5_432, %c0_433, %c0_434] : memref<14x8x256xf32, #tpu.memory_space<vmem>>, vector<1x8x256xf32>
    %916 = vector.shape_cast %915 : vector<1x8x256xf32> to vector<8x256xf32>
    %917 = arith.mulf %914, %916 : vector<8x256xf32>
    %918 = vector.extract_strided_slice %5 {offsets = [0, 113], sizes = [8, 1], strides = [1, 1]} : vector<8x121xf32> to vector<8x1xf32>
    %919 = vector.broadcast %918 : vector<8x1xf32> to vector<8x256xf32>
    %920 = arith.mulf %917, %919 : vector<8x256xf32>
    %921 = arith.addf %885, %920 : vector<8x256xf32>
    %c1_i32_435 = arith.constant 1 : i32
    %922 = tpu.dynamic_rotate %889 by %c1_i32_435 dim 1 : vector<8x256xf32>, i32 -> vector<8x256xf32>
    %c6_436 = arith.constant 6 : index
    %c0_437 = arith.constant 0 : index
    %c0_438 = arith.constant 0 : index
    %923 = vector.load %arg3[%c6_436, %c0_437, %c0_438] : memref<14x8x256xf32, #tpu.memory_space<vmem>>, vector<1x8x256xf32>
    %924 = vector.shape_cast %923 : vector<1x8x256xf32> to vector<8x256xf32>
    %925 = arith.mulf %922, %924 : vector<8x256xf32>
    %926 = vector.extract_strided_slice %5 {offsets = [0, 114], sizes = [8, 1], strides = [1, 1]} : vector<8x121xf32> to vector<8x1xf32>
    %927 = vector.broadcast %926 : vector<8x1xf32> to vector<8x256xf32>
    %928 = arith.mulf %925, %927 : vector<8x256xf32>
    %929 = arith.addf %897, %928 : vector<8x256xf32>
    %930 = vector.extract_strided_slice %5 {offsets = [0, 115], sizes = [8, 1], strides = [1, 1]} : vector<8x121xf32> to vector<8x1xf32>
    %931 = vector.broadcast %930 : vector<8x1xf32> to vector<8x256xf32>
    %932 = arith.mulf %889, %931 : vector<8x256xf32>
    %933 = arith.addf %905, %932 : vector<8x256xf32>
    %c255_i32_439 = arith.constant 255 : i32
    %934 = tpu.dynamic_rotate %889 by %c255_i32_439 dim 1 : vector<8x256xf32>, i32 -> vector<8x256xf32>
    %c7_440 = arith.constant 7 : index
    %c0_441 = arith.constant 0 : index
    %c0_442 = arith.constant 0 : index
    %935 = vector.load %arg3[%c7_440, %c0_441, %c0_442] : memref<14x8x256xf32, #tpu.memory_space<vmem>>, vector<1x8x256xf32>
    %936 = vector.shape_cast %935 : vector<1x8x256xf32> to vector<8x256xf32>
    %937 = arith.mulf %934, %936 : vector<8x256xf32>
    %938 = vector.extract_strided_slice %5 {offsets = [0, 116], sizes = [8, 1], strides = [1, 1]} : vector<8x121xf32> to vector<8x1xf32>
    %939 = vector.broadcast %938 : vector<8x1xf32> to vector<8x256xf32>
    %940 = arith.mulf %937, %939 : vector<8x256xf32>
    %941 = arith.addf %913, %940 : vector<8x256xf32>
    %c254_i32_443 = arith.constant 254 : i32
    %942 = tpu.dynamic_rotate %889 by %c254_i32_443 dim 1 : vector<8x256xf32>, i32 -> vector<8x256xf32>
    %c8_444 = arith.constant 8 : index
    %c0_445 = arith.constant 0 : index
    %c0_446 = arith.constant 0 : index
    %943 = vector.load %arg3[%c8_444, %c0_445, %c0_446] : memref<14x8x256xf32, #tpu.memory_space<vmem>>, vector<1x8x256xf32>
    %944 = vector.shape_cast %943 : vector<1x8x256xf32> to vector<8x256xf32>
    %945 = arith.mulf %942, %944 : vector<8x256xf32>
    %946 = vector.extract_strided_slice %5 {offsets = [0, 117], sizes = [8, 1], strides = [1, 1]} : vector<8x121xf32> to vector<8x1xf32>
    %947 = vector.broadcast %946 : vector<8x1xf32> to vector<8x256xf32>
    %948 = arith.mulf %945, %947 : vector<8x256xf32>
    %949 = arith.addf %921, %948 : vector<8x256xf32>
    %c253_i32_447 = arith.constant 253 : i32
    %950 = tpu.dynamic_rotate %889 by %c253_i32_447 dim 1 : vector<8x256xf32>, i32 -> vector<8x256xf32>
    %c9_448 = arith.constant 9 : index
    %c0_449 = arith.constant 0 : index
    %c0_450 = arith.constant 0 : index
    %951 = vector.load %arg3[%c9_448, %c0_449, %c0_450] : memref<14x8x256xf32, #tpu.memory_space<vmem>>, vector<1x8x256xf32>
    %952 = vector.shape_cast %951 : vector<1x8x256xf32> to vector<8x256xf32>
    %953 = arith.mulf %950, %952 : vector<8x256xf32>
    %954 = vector.extract_strided_slice %5 {offsets = [0, 118], sizes = [8, 1], strides = [1, 1]} : vector<8x121xf32> to vector<8x1xf32>
    %955 = vector.broadcast %954 : vector<8x1xf32> to vector<8x256xf32>
    %956 = arith.mulf %953, %955 : vector<8x256xf32>
    %957 = arith.addf %929, %956 : vector<8x256xf32>
    %c252_i32_451 = arith.constant 252 : i32
    %958 = tpu.dynamic_rotate %889 by %c252_i32_451 dim 1 : vector<8x256xf32>, i32 -> vector<8x256xf32>
    %c10_452 = arith.constant 10 : index
    %c0_453 = arith.constant 0 : index
    %c0_454 = arith.constant 0 : index
    %959 = vector.load %arg3[%c10_452, %c0_453, %c0_454] : memref<14x8x256xf32, #tpu.memory_space<vmem>>, vector<1x8x256xf32>
    %960 = vector.shape_cast %959 : vector<1x8x256xf32> to vector<8x256xf32>
    %961 = arith.mulf %958, %960 : vector<8x256xf32>
    %962 = vector.extract_strided_slice %5 {offsets = [0, 119], sizes = [8, 1], strides = [1, 1]} : vector<8x121xf32> to vector<8x1xf32>
    %963 = vector.broadcast %962 : vector<8x1xf32> to vector<8x256xf32>
    %964 = arith.mulf %961, %963 : vector<8x256xf32>
    %965 = arith.addf %933, %964 : vector<8x256xf32>
    %c251_i32_455 = arith.constant 251 : i32
    %966 = tpu.dynamic_rotate %889 by %c251_i32_455 dim 1 : vector<8x256xf32>, i32 -> vector<8x256xf32>
    %c11_456 = arith.constant 11 : index
    %c0_457 = arith.constant 0 : index
    %c0_458 = arith.constant 0 : index
    %967 = vector.load %arg3[%c11_456, %c0_457, %c0_458] : memref<14x8x256xf32, #tpu.memory_space<vmem>>, vector<1x8x256xf32>
    %968 = vector.shape_cast %967 : vector<1x8x256xf32> to vector<8x256xf32>
    %969 = arith.mulf %966, %968 : vector<8x256xf32>
    %970 = vector.extract_strided_slice %5 {offsets = [0, 120], sizes = [8, 1], strides = [1, 1]} : vector<8x121xf32> to vector<8x1xf32>
    %971 = vector.broadcast %970 : vector<8x1xf32> to vector<8x256xf32>
    %972 = arith.mulf %969, %971 : vector<8x256xf32>
    %973 = arith.addf %941, %972 : vector<8x256xf32>
    %974 = arith.addf %973, %949 : vector<8x256xf32>
    %975 = arith.addf %974, %957 : vector<8x256xf32>
    %976 = arith.addf %975, %965 : vector<8x256xf32>
    %c0_459 = arith.constant 0 : index
    %c0_460 = arith.constant 0 : index
    %977 = vector.load %arg6[%c0_459, %c0_460] : memref<8x1xf32, #tpu.memory_space<vmem>>, vector<8x1xf32>
    %978 = vector.broadcast %977 : vector<8x1xf32> to vector<8x256xf32>
    %979 = arith.addf %976, %978 : vector<8x256xf32>
    %cst_461 = arith.constant 0.000000e+00 : f32
    %980 = vector.broadcast %cst_461 : f32 to vector<8x256xf32>
    %981 = arith.maximumf %979, %980 : vector<8x256xf32>
    %c0_462 = arith.constant 0 : index
    %c0_463 = arith.constant 0 : index
    %982 = vector.load %arg7[%c0_462, %c0_463] : memref<8x8xf32, #tpu.memory_space<vmem>>, vector<8x8xf32>
    %983 = arith.truncf %982 : vector<8x8xf32> to vector<8x8xbf16>
    %984 = arith.truncf %981 : vector<8x256xf32> to vector<8x256xbf16>
    %cst_464 = arith.constant dense<0.000000e+00> : vector<8x256xf32>
    %985 = tpu.matmul %983, %984, %cst_464 {dimension_numbers = #tpu.dot_dimension_numbers<[1], [0], [0], [1], [0, 0, 1, 1], [], []>} : vector<8x8xbf16>, vector<8x256xbf16>, vector<8x256xf32> -> vector<8x256xf32>
    %c0_465 = arith.constant 0 : index
    %c0_466 = arith.constant 0 : index
    %986 = vector.load %arg8[%c0_465, %c0_466] : memref<8x1xf32, #tpu.memory_space<vmem>>, vector<8x1xf32>
    %987 = vector.broadcast %986 : vector<8x1xf32> to vector<8x256xf32>
    %988 = arith.addf %985, %987 : vector<8x256xf32>
    %cst_467 = arith.constant 0.000000e+00 : f32
    %989 = vector.broadcast %cst_467 : f32 to vector<8x256xf32>
    %990 = arith.maximumf %988, %989 : vector<8x256xf32>
    %991 = arith.addf %0, %990 : vector<8x256xf32>
    %c0_468 = arith.constant 0 : index
    %c0_469 = arith.constant 0 : index
    %992 = vector.load %arg9[%c0_468, %c0_469] : memref<8x8xf32, #tpu.memory_space<vmem>>, vector<8x8xf32>
    %993 = arith.truncf %992 : vector<8x8xf32> to vector<8x8xbf16>
    %994 = arith.truncf %991 : vector<8x256xf32> to vector<8x256xbf16>
    %cst_470 = arith.constant dense<0.000000e+00> : vector<8x256xf32>
    %995 = tpu.matmul %993, %994, %cst_470 {dimension_numbers = #tpu.dot_dimension_numbers<[1], [0], [0], [1], [0, 0, 1, 1], [], []>} : vector<8x8xbf16>, vector<8x256xbf16>, vector<8x256xf32> -> vector<8x256xf32>
    %c0_471 = arith.constant 0 : index
    %c0_472 = arith.constant 0 : index
    %996 = vector.load %arg10[%c0_471, %c0_472] : memref<8x33xf32, #tpu.memory_space<vmem>>, vector<8x33xf32>
    %cst_473 = arith.constant 0.000000e+00 : f32
    %997 = vector.broadcast %cst_473 : f32 to vector<8x256xf32>
    %cst_474 = arith.constant 0.000000e+00 : f32
    %998 = vector.broadcast %cst_474 : f32 to vector<8x256xf32>
    %cst_475 = arith.constant 0.000000e+00 : f32
    %999 = vector.broadcast %cst_475 : f32 to vector<8x256xf32>
    %cst_476 = arith.constant 0.000000e+00 : f32
    %1000 = vector.broadcast %cst_476 : f32 to vector<8x256xf32>
    %c176_i32_477 = arith.constant 176 : i32
    %1001 = tpu.dynamic_rotate %995 by %c176_i32_477 dim 1 : vector<8x256xf32>, i32 -> vector<8x256xf32>
    %c0_478 = arith.constant 0 : index
    %c0_479 = arith.constant 0 : index
    %c0_480 = arith.constant 0 : index
    %1002 = vector.load %arg2[%c0_478, %c0_479, %c0_480] : memref<14x8x256xf32, #tpu.memory_space<vmem>>, vector<1x8x256xf32>
    %1003 = vector.shape_cast %1002 : vector<1x8x256xf32> to vector<8x256xf32>
    %1004 = arith.mulf %1001, %1003 : vector<8x256xf32>
    %c11_i32 = arith.constant 11 : i32
    %1005 = tpu.dynamic_rotate %1004 by %c11_i32 dim 1 : vector<8x256xf32>, i32 -> vector<8x256xf32>
    %c0_481 = arith.constant 0 : index
    %c0_482 = arith.constant 0 : index
    %c0_483 = arith.constant 0 : index
    %1006 = vector.load %arg3[%c0_481, %c0_482, %c0_483] : memref<14x8x256xf32, #tpu.memory_space<vmem>>, vector<1x8x256xf32>
    %1007 = vector.shape_cast %1006 : vector<1x8x256xf32> to vector<8x256xf32>
    %1008 = arith.mulf %1005, %1007 : vector<8x256xf32>
    %1009 = vector.extract_strided_slice %996 {offsets = [0, 0], sizes = [8, 1], strides = [1, 1]} : vector<8x33xf32> to vector<8x1xf32>
    %1010 = vector.broadcast %1009 : vector<8x1xf32> to vector<8x256xf32>
    %1011 = arith.mulf %1008, %1010 : vector<8x256xf32>
    %1012 = arith.addf %997, %1011 : vector<8x256xf32>
    %1013 = vector.extract_strided_slice %996 {offsets = [0, 1], sizes = [8, 1], strides = [1, 1]} : vector<8x33xf32> to vector<8x1xf32>
    %1014 = vector.broadcast %1013 : vector<8x1xf32> to vector<8x256xf32>
    %1015 = arith.mulf %1004, %1014 : vector<8x256xf32>
    %1016 = arith.addf %998, %1015 : vector<8x256xf32>
    %c245_i32 = arith.constant 245 : i32
    %1017 = tpu.dynamic_rotate %1004 by %c245_i32 dim 1 : vector<8x256xf32>, i32 -> vector<8x256xf32>
    %c13 = arith.constant 13 : index
    %c0_484 = arith.constant 0 : index
    %c0_485 = arith.constant 0 : index
    %1018 = vector.load %arg3[%c13, %c0_484, %c0_485] : memref<14x8x256xf32, #tpu.memory_space<vmem>>, vector<1x8x256xf32>
    %1019 = vector.shape_cast %1018 : vector<1x8x256xf32> to vector<8x256xf32>
    %1020 = arith.mulf %1017, %1019 : vector<8x256xf32>
    %1021 = vector.extract_strided_slice %996 {offsets = [0, 2], sizes = [8, 1], strides = [1, 1]} : vector<8x33xf32> to vector<8x1xf32>
    %1022 = vector.broadcast %1021 : vector<8x1xf32> to vector<8x256xf32>
    %1023 = arith.mulf %1020, %1022 : vector<8x256xf32>
    %1024 = arith.addf %999, %1023 : vector<8x256xf32>
    %c112_i32 = arith.constant 112 : i32
    %1025 = tpu.dynamic_rotate %995 by %c112_i32 dim 1 : vector<8x256xf32>, i32 -> vector<8x256xf32>
    %c1 = arith.constant 1 : index
    %c0_486 = arith.constant 0 : index
    %c0_487 = arith.constant 0 : index
    %1026 = vector.load %arg2[%c1, %c0_486, %c0_487] : memref<14x8x256xf32, #tpu.memory_space<vmem>>, vector<1x8x256xf32>
    %1027 = vector.shape_cast %1026 : vector<1x8x256xf32> to vector<8x256xf32>
    %1028 = arith.mulf %1025, %1027 : vector<8x256xf32>
    %c7_i32 = arith.constant 7 : i32
    %1029 = tpu.dynamic_rotate %1028 by %c7_i32 dim 1 : vector<8x256xf32>, i32 -> vector<8x256xf32>
    %c1_488 = arith.constant 1 : index
    %c0_489 = arith.constant 0 : index
    %c0_490 = arith.constant 0 : index
    %1030 = vector.load %arg3[%c1_488, %c0_489, %c0_490] : memref<14x8x256xf32, #tpu.memory_space<vmem>>, vector<1x8x256xf32>
    %1031 = vector.shape_cast %1030 : vector<1x8x256xf32> to vector<8x256xf32>
    %1032 = arith.mulf %1029, %1031 : vector<8x256xf32>
    %1033 = vector.extract_strided_slice %996 {offsets = [0, 3], sizes = [8, 1], strides = [1, 1]} : vector<8x33xf32> to vector<8x1xf32>
    %1034 = vector.broadcast %1033 : vector<8x1xf32> to vector<8x256xf32>
    %1035 = arith.mulf %1032, %1034 : vector<8x256xf32>
    %1036 = arith.addf %1000, %1035 : vector<8x256xf32>
    %1037 = vector.extract_strided_slice %996 {offsets = [0, 4], sizes = [8, 1], strides = [1, 1]} : vector<8x33xf32> to vector<8x1xf32>
    %1038 = vector.broadcast %1037 : vector<8x1xf32> to vector<8x256xf32>
    %1039 = arith.mulf %1028, %1038 : vector<8x256xf32>
    %1040 = arith.addf %1012, %1039 : vector<8x256xf32>
    %c249_i32 = arith.constant 249 : i32
    %1041 = tpu.dynamic_rotate %1028 by %c249_i32 dim 1 : vector<8x256xf32>, i32 -> vector<8x256xf32>
    %c12 = arith.constant 12 : index
    %c0_491 = arith.constant 0 : index
    %c0_492 = arith.constant 0 : index
    %1042 = vector.load %arg3[%c12, %c0_491, %c0_492] : memref<14x8x256xf32, #tpu.memory_space<vmem>>, vector<1x8x256xf32>
    %1043 = vector.shape_cast %1042 : vector<1x8x256xf32> to vector<8x256xf32>
    %1044 = arith.mulf %1041, %1043 : vector<8x256xf32>
    %1045 = vector.extract_strided_slice %996 {offsets = [0, 5], sizes = [8, 1], strides = [1, 1]} : vector<8x33xf32> to vector<8x1xf32>
    %1046 = vector.broadcast %1045 : vector<8x1xf32> to vector<8x256xf32>
    %1047 = arith.mulf %1044, %1046 : vector<8x256xf32>
    %1048 = arith.addf %1016, %1047 : vector<8x256xf32>
    %c48_i32_493 = arith.constant 48 : i32
    %1049 = tpu.dynamic_rotate %995 by %c48_i32_493 dim 1 : vector<8x256xf32>, i32 -> vector<8x256xf32>
    %c4_494 = arith.constant 4 : index
    %c0_495 = arith.constant 0 : index
    %c0_496 = arith.constant 0 : index
    %1050 = vector.load %arg2[%c4_494, %c0_495, %c0_496] : memref<14x8x256xf32, #tpu.memory_space<vmem>>, vector<1x8x256xf32>
    %1051 = vector.shape_cast %1050 : vector<1x8x256xf32> to vector<8x256xf32>
    %1052 = arith.mulf %1049, %1051 : vector<8x256xf32>
    %c3_i32_497 = arith.constant 3 : i32
    %1053 = tpu.dynamic_rotate %1052 by %c3_i32_497 dim 1 : vector<8x256xf32>, i32 -> vector<8x256xf32>
    %c4_498 = arith.constant 4 : index
    %c0_499 = arith.constant 0 : index
    %c0_500 = arith.constant 0 : index
    %1054 = vector.load %arg3[%c4_498, %c0_499, %c0_500] : memref<14x8x256xf32, #tpu.memory_space<vmem>>, vector<1x8x256xf32>
    %1055 = vector.shape_cast %1054 : vector<1x8x256xf32> to vector<8x256xf32>
    %1056 = arith.mulf %1053, %1055 : vector<8x256xf32>
    %1057 = vector.extract_strided_slice %996 {offsets = [0, 6], sizes = [8, 1], strides = [1, 1]} : vector<8x33xf32> to vector<8x1xf32>
    %1058 = vector.broadcast %1057 : vector<8x1xf32> to vector<8x256xf32>
    %1059 = arith.mulf %1056, %1058 : vector<8x256xf32>
    %1060 = arith.addf %1024, %1059 : vector<8x256xf32>
    %1061 = vector.extract_strided_slice %996 {offsets = [0, 7], sizes = [8, 1], strides = [1, 1]} : vector<8x33xf32> to vector<8x1xf32>
    %1062 = vector.broadcast %1061 : vector<8x1xf32> to vector<8x256xf32>
    %1063 = arith.mulf %1052, %1062 : vector<8x256xf32>
    %1064 = arith.addf %1036, %1063 : vector<8x256xf32>
    %c253_i32_501 = arith.constant 253 : i32
    %1065 = tpu.dynamic_rotate %1052 by %c253_i32_501 dim 1 : vector<8x256xf32>, i32 -> vector<8x256xf32>
    %c9_502 = arith.constant 9 : index
    %c0_503 = arith.constant 0 : index
    %c0_504 = arith.constant 0 : index
    %1066 = vector.load %arg3[%c9_502, %c0_503, %c0_504] : memref<14x8x256xf32, #tpu.memory_space<vmem>>, vector<1x8x256xf32>
    %1067 = vector.shape_cast %1066 : vector<1x8x256xf32> to vector<8x256xf32>
    %1068 = arith.mulf %1065, %1067 : vector<8x256xf32>
    %1069 = vector.extract_strided_slice %996 {offsets = [0, 8], sizes = [8, 1], strides = [1, 1]} : vector<8x33xf32> to vector<8x1xf32>
    %1070 = vector.broadcast %1069 : vector<8x1xf32> to vector<8x256xf32>
    %1071 = arith.mulf %1068, %1070 : vector<8x256xf32>
    %1072 = arith.addf %1040, %1071 : vector<8x256xf32>
    %c16_i32_505 = arith.constant 16 : i32
    %1073 = tpu.dynamic_rotate %995 by %c16_i32_505 dim 1 : vector<8x256xf32>, i32 -> vector<8x256xf32>
    %c6_506 = arith.constant 6 : index
    %c0_507 = arith.constant 0 : index
    %c0_508 = arith.constant 0 : index
    %1074 = vector.load %arg2[%c6_506, %c0_507, %c0_508] : memref<14x8x256xf32, #tpu.memory_space<vmem>>, vector<1x8x256xf32>
    %1075 = vector.shape_cast %1074 : vector<1x8x256xf32> to vector<8x256xf32>
    %1076 = arith.mulf %1073, %1075 : vector<8x256xf32>
    %c1_i32_509 = arith.constant 1 : i32
    %1077 = tpu.dynamic_rotate %1076 by %c1_i32_509 dim 1 : vector<8x256xf32>, i32 -> vector<8x256xf32>
    %c6_510 = arith.constant 6 : index
    %c0_511 = arith.constant 0 : index
    %c0_512 = arith.constant 0 : index
    %1078 = vector.load %arg3[%c6_510, %c0_511, %c0_512] : memref<14x8x256xf32, #tpu.memory_space<vmem>>, vector<1x8x256xf32>
    %1079 = vector.shape_cast %1078 : vector<1x8x256xf32> to vector<8x256xf32>
    %1080 = arith.mulf %1077, %1079 : vector<8x256xf32>
    %1081 = vector.extract_strided_slice %996 {offsets = [0, 9], sizes = [8, 1], strides = [1, 1]} : vector<8x33xf32> to vector<8x1xf32>
    %1082 = vector.broadcast %1081 : vector<8x1xf32> to vector<8x256xf32>
    %1083 = arith.mulf %1080, %1082 : vector<8x256xf32>
    %1084 = arith.addf %1048, %1083 : vector<8x256xf32>
    %1085 = vector.extract_strided_slice %996 {offsets = [0, 10], sizes = [8, 1], strides = [1, 1]} : vector<8x33xf32> to vector<8x1xf32>
    %1086 = vector.broadcast %1085 : vector<8x1xf32> to vector<8x256xf32>
    %1087 = arith.mulf %1076, %1086 : vector<8x256xf32>
    %1088 = arith.addf %1060, %1087 : vector<8x256xf32>
    %c255_i32_513 = arith.constant 255 : i32
    %1089 = tpu.dynamic_rotate %1076 by %c255_i32_513 dim 1 : vector<8x256xf32>, i32 -> vector<8x256xf32>
    %c7_514 = arith.constant 7 : index
    %c0_515 = arith.constant 0 : index
    %c0_516 = arith.constant 0 : index
    %1090 = vector.load %arg3[%c7_514, %c0_515, %c0_516] : memref<14x8x256xf32, #tpu.memory_space<vmem>>, vector<1x8x256xf32>
    %1091 = vector.shape_cast %1090 : vector<1x8x256xf32> to vector<8x256xf32>
    %1092 = arith.mulf %1089, %1091 : vector<8x256xf32>
    %1093 = vector.extract_strided_slice %996 {offsets = [0, 11], sizes = [8, 1], strides = [1, 1]} : vector<8x33xf32> to vector<8x1xf32>
    %1094 = vector.broadcast %1093 : vector<8x1xf32> to vector<8x256xf32>
    %1095 = arith.mulf %1092, %1094 : vector<8x256xf32>
    %1096 = arith.addf %1064, %1095 : vector<8x256xf32>
    %c11_i32_517 = arith.constant 11 : i32
    %1097 = tpu.dynamic_rotate %995 by %c11_i32_517 dim 1 : vector<8x256xf32>, i32 -> vector<8x256xf32>
    %c0_518 = arith.constant 0 : index
    %c0_519 = arith.constant 0 : index
    %c0_520 = arith.constant 0 : index
    %1098 = vector.load %arg3[%c0_518, %c0_519, %c0_520] : memref<14x8x256xf32, #tpu.memory_space<vmem>>, vector<1x8x256xf32>
    %1099 = vector.shape_cast %1098 : vector<1x8x256xf32> to vector<8x256xf32>
    %1100 = arith.mulf %1097, %1099 : vector<8x256xf32>
    %1101 = vector.extract_strided_slice %996 {offsets = [0, 12], sizes = [8, 1], strides = [1, 1]} : vector<8x33xf32> to vector<8x1xf32>
    %1102 = vector.broadcast %1101 : vector<8x1xf32> to vector<8x256xf32>
    %1103 = arith.mulf %1100, %1102 : vector<8x256xf32>
    %1104 = arith.addf %1072, %1103 : vector<8x256xf32>
    %c7_i32_521 = arith.constant 7 : i32
    %1105 = tpu.dynamic_rotate %995 by %c7_i32_521 dim 1 : vector<8x256xf32>, i32 -> vector<8x256xf32>
    %c1_522 = arith.constant 1 : index
    %c0_523 = arith.constant 0 : index
    %c0_524 = arith.constant 0 : index
    %1106 = vector.load %arg3[%c1_522, %c0_523, %c0_524] : memref<14x8x256xf32, #tpu.memory_space<vmem>>, vector<1x8x256xf32>
    %1107 = vector.shape_cast %1106 : vector<1x8x256xf32> to vector<8x256xf32>
    %1108 = arith.mulf %1105, %1107 : vector<8x256xf32>
    %1109 = vector.extract_strided_slice %996 {offsets = [0, 13], sizes = [8, 1], strides = [1, 1]} : vector<8x33xf32> to vector<8x1xf32>
    %1110 = vector.broadcast %1109 : vector<8x1xf32> to vector<8x256xf32>
    %1111 = arith.mulf %1108, %1110 : vector<8x256xf32>
    %1112 = arith.addf %1084, %1111 : vector<8x256xf32>
    %c3_i32_525 = arith.constant 3 : i32
    %1113 = tpu.dynamic_rotate %995 by %c3_i32_525 dim 1 : vector<8x256xf32>, i32 -> vector<8x256xf32>
    %c4_526 = arith.constant 4 : index
    %c0_527 = arith.constant 0 : index
    %c0_528 = arith.constant 0 : index
    %1114 = vector.load %arg3[%c4_526, %c0_527, %c0_528] : memref<14x8x256xf32, #tpu.memory_space<vmem>>, vector<1x8x256xf32>
    %1115 = vector.shape_cast %1114 : vector<1x8x256xf32> to vector<8x256xf32>
    %1116 = arith.mulf %1113, %1115 : vector<8x256xf32>
    %1117 = vector.extract_strided_slice %996 {offsets = [0, 14], sizes = [8, 1], strides = [1, 1]} : vector<8x33xf32> to vector<8x1xf32>
    %1118 = vector.broadcast %1117 : vector<8x1xf32> to vector<8x256xf32>
    %1119 = arith.mulf %1116, %1118 : vector<8x256xf32>
    %1120 = arith.addf %1088, %1119 : vector<8x256xf32>
    %c1_i32_529 = arith.constant 1 : i32
    %1121 = tpu.dynamic_rotate %995 by %c1_i32_529 dim 1 : vector<8x256xf32>, i32 -> vector<8x256xf32>
    %c6_530 = arith.constant 6 : index
    %c0_531 = arith.constant 0 : index
    %c0_532 = arith.constant 0 : index
    %1122 = vector.load %arg3[%c6_530, %c0_531, %c0_532] : memref<14x8x256xf32, #tpu.memory_space<vmem>>, vector<1x8x256xf32>
    %1123 = vector.shape_cast %1122 : vector<1x8x256xf32> to vector<8x256xf32>
    %1124 = arith.mulf %1121, %1123 : vector<8x256xf32>
    %1125 = vector.extract_strided_slice %996 {offsets = [0, 15], sizes = [8, 1], strides = [1, 1]} : vector<8x33xf32> to vector<8x1xf32>
    %1126 = vector.broadcast %1125 : vector<8x1xf32> to vector<8x256xf32>
    %1127 = arith.mulf %1124, %1126 : vector<8x256xf32>
    %1128 = arith.addf %1096, %1127 : vector<8x256xf32>
    %1129 = vector.extract_strided_slice %996 {offsets = [0, 16], sizes = [8, 1], strides = [1, 1]} : vector<8x33xf32> to vector<8x1xf32>
    %1130 = vector.broadcast %1129 : vector<8x1xf32> to vector<8x256xf32>
    %1131 = arith.mulf %995, %1130 : vector<8x256xf32>
    %1132 = arith.addf %1104, %1131 : vector<8x256xf32>
    %c255_i32_533 = arith.constant 255 : i32
    %1133 = tpu.dynamic_rotate %995 by %c255_i32_533 dim 1 : vector<8x256xf32>, i32 -> vector<8x256xf32>
    %c7_534 = arith.constant 7 : index
    %c0_535 = arith.constant 0 : index
    %c0_536 = arith.constant 0 : index
    %1134 = vector.load %arg3[%c7_534, %c0_535, %c0_536] : memref<14x8x256xf32, #tpu.memory_space<vmem>>, vector<1x8x256xf32>
    %1135 = vector.shape_cast %1134 : vector<1x8x256xf32> to vector<8x256xf32>
    %1136 = arith.mulf %1133, %1135 : vector<8x256xf32>
    %1137 = vector.extract_strided_slice %996 {offsets = [0, 17], sizes = [8, 1], strides = [1, 1]} : vector<8x33xf32> to vector<8x1xf32>
    %1138 = vector.broadcast %1137 : vector<8x1xf32> to vector<8x256xf32>
    %1139 = arith.mulf %1136, %1138 : vector<8x256xf32>
    %1140 = arith.addf %1112, %1139 : vector<8x256xf32>
    %c253_i32_537 = arith.constant 253 : i32
    %1141 = tpu.dynamic_rotate %995 by %c253_i32_537 dim 1 : vector<8x256xf32>, i32 -> vector<8x256xf32>
    %c9_538 = arith.constant 9 : index
    %c0_539 = arith.constant 0 : index
    %c0_540 = arith.constant 0 : index
    %1142 = vector.load %arg3[%c9_538, %c0_539, %c0_540] : memref<14x8x256xf32, #tpu.memory_space<vmem>>, vector<1x8x256xf32>
    %1143 = vector.shape_cast %1142 : vector<1x8x256xf32> to vector<8x256xf32>
    %1144 = arith.mulf %1141, %1143 : vector<8x256xf32>
    %1145 = vector.extract_strided_slice %996 {offsets = [0, 18], sizes = [8, 1], strides = [1, 1]} : vector<8x33xf32> to vector<8x1xf32>
    %1146 = vector.broadcast %1145 : vector<8x1xf32> to vector<8x256xf32>
    %1147 = arith.mulf %1144, %1146 : vector<8x256xf32>
    %1148 = arith.addf %1120, %1147 : vector<8x256xf32>
    %c249_i32_541 = arith.constant 249 : i32
    %1149 = tpu.dynamic_rotate %995 by %c249_i32_541 dim 1 : vector<8x256xf32>, i32 -> vector<8x256xf32>
    %c12_542 = arith.constant 12 : index
    %c0_543 = arith.constant 0 : index
    %c0_544 = arith.constant 0 : index
    %1150 = vector.load %arg3[%c12_542, %c0_543, %c0_544] : memref<14x8x256xf32, #tpu.memory_space<vmem>>, vector<1x8x256xf32>
    %1151 = vector.shape_cast %1150 : vector<1x8x256xf32> to vector<8x256xf32>
    %1152 = arith.mulf %1149, %1151 : vector<8x256xf32>
    %1153 = vector.extract_strided_slice %996 {offsets = [0, 19], sizes = [8, 1], strides = [1, 1]} : vector<8x33xf32> to vector<8x1xf32>
    %1154 = vector.broadcast %1153 : vector<8x1xf32> to vector<8x256xf32>
    %1155 = arith.mulf %1152, %1154 : vector<8x256xf32>
    %1156 = arith.addf %1128, %1155 : vector<8x256xf32>
    %c245_i32_545 = arith.constant 245 : i32
    %1157 = tpu.dynamic_rotate %995 by %c245_i32_545 dim 1 : vector<8x256xf32>, i32 -> vector<8x256xf32>
    %c13_546 = arith.constant 13 : index
    %c0_547 = arith.constant 0 : index
    %c0_548 = arith.constant 0 : index
    %1158 = vector.load %arg3[%c13_546, %c0_547, %c0_548] : memref<14x8x256xf32, #tpu.memory_space<vmem>>, vector<1x8x256xf32>
    %1159 = vector.shape_cast %1158 : vector<1x8x256xf32> to vector<8x256xf32>
    %1160 = arith.mulf %1157, %1159 : vector<8x256xf32>
    %1161 = vector.extract_strided_slice %996 {offsets = [0, 20], sizes = [8, 1], strides = [1, 1]} : vector<8x33xf32> to vector<8x1xf32>
    %1162 = vector.broadcast %1161 : vector<8x1xf32> to vector<8x256xf32>
    %1163 = arith.mulf %1160, %1162 : vector<8x256xf32>
    %1164 = arith.addf %1132, %1163 : vector<8x256xf32>
    %c240_i32_549 = arith.constant 240 : i32
    %1165 = tpu.dynamic_rotate %995 by %c240_i32_549 dim 1 : vector<8x256xf32>, i32 -> vector<8x256xf32>
    %c7_550 = arith.constant 7 : index
    %c0_551 = arith.constant 0 : index
    %c0_552 = arith.constant 0 : index
    %1166 = vector.load %arg2[%c7_550, %c0_551, %c0_552] : memref<14x8x256xf32, #tpu.memory_space<vmem>>, vector<1x8x256xf32>
    %1167 = vector.shape_cast %1166 : vector<1x8x256xf32> to vector<8x256xf32>
    %1168 = arith.mulf %1165, %1167 : vector<8x256xf32>
    %c1_i32_553 = arith.constant 1 : i32
    %1169 = tpu.dynamic_rotate %1168 by %c1_i32_553 dim 1 : vector<8x256xf32>, i32 -> vector<8x256xf32>
    %c6_554 = arith.constant 6 : index
    %c0_555 = arith.constant 0 : index
    %c0_556 = arith.constant 0 : index
    %1170 = vector.load %arg3[%c6_554, %c0_555, %c0_556] : memref<14x8x256xf32, #tpu.memory_space<vmem>>, vector<1x8x256xf32>
    %1171 = vector.shape_cast %1170 : vector<1x8x256xf32> to vector<8x256xf32>
    %1172 = arith.mulf %1169, %1171 : vector<8x256xf32>
    %1173 = vector.extract_strided_slice %996 {offsets = [0, 21], sizes = [8, 1], strides = [1, 1]} : vector<8x33xf32> to vector<8x1xf32>
    %1174 = vector.broadcast %1173 : vector<8x1xf32> to vector<8x256xf32>
    %1175 = arith.mulf %1172, %1174 : vector<8x256xf32>
    %1176 = arith.addf %1140, %1175 : vector<8x256xf32>
    %1177 = vector.extract_strided_slice %996 {offsets = [0, 22], sizes = [8, 1], strides = [1, 1]} : vector<8x33xf32> to vector<8x1xf32>
    %1178 = vector.broadcast %1177 : vector<8x1xf32> to vector<8x256xf32>
    %1179 = arith.mulf %1168, %1178 : vector<8x256xf32>
    %1180 = arith.addf %1148, %1179 : vector<8x256xf32>
    %c255_i32_557 = arith.constant 255 : i32
    %1181 = tpu.dynamic_rotate %1168 by %c255_i32_557 dim 1 : vector<8x256xf32>, i32 -> vector<8x256xf32>
    %c7_558 = arith.constant 7 : index
    %c0_559 = arith.constant 0 : index
    %c0_560 = arith.constant 0 : index
    %1182 = vector.load %arg3[%c7_558, %c0_559, %c0_560] : memref<14x8x256xf32, #tpu.memory_space<vmem>>, vector<1x8x256xf32>
    %1183 = vector.shape_cast %1182 : vector<1x8x256xf32> to vector<8x256xf32>
    %1184 = arith.mulf %1181, %1183 : vector<8x256xf32>
    %1185 = vector.extract_strided_slice %996 {offsets = [0, 23], sizes = [8, 1], strides = [1, 1]} : vector<8x33xf32> to vector<8x1xf32>
    %1186 = vector.broadcast %1185 : vector<8x1xf32> to vector<8x256xf32>
    %1187 = arith.mulf %1184, %1186 : vector<8x256xf32>
    %1188 = arith.addf %1156, %1187 : vector<8x256xf32>
    %c208_i32_561 = arith.constant 208 : i32
    %1189 = tpu.dynamic_rotate %995 by %c208_i32_561 dim 1 : vector<8x256xf32>, i32 -> vector<8x256xf32>
    %c9_562 = arith.constant 9 : index
    %c0_563 = arith.constant 0 : index
    %c0_564 = arith.constant 0 : index
    %1190 = vector.load %arg2[%c9_562, %c0_563, %c0_564] : memref<14x8x256xf32, #tpu.memory_space<vmem>>, vector<1x8x256xf32>
    %1191 = vector.shape_cast %1190 : vector<1x8x256xf32> to vector<8x256xf32>
    %1192 = arith.mulf %1189, %1191 : vector<8x256xf32>
    %c3_i32_565 = arith.constant 3 : i32
    %1193 = tpu.dynamic_rotate %1192 by %c3_i32_565 dim 1 : vector<8x256xf32>, i32 -> vector<8x256xf32>
    %c4_566 = arith.constant 4 : index
    %c0_567 = arith.constant 0 : index
    %c0_568 = arith.constant 0 : index
    %1194 = vector.load %arg3[%c4_566, %c0_567, %c0_568] : memref<14x8x256xf32, #tpu.memory_space<vmem>>, vector<1x8x256xf32>
    %1195 = vector.shape_cast %1194 : vector<1x8x256xf32> to vector<8x256xf32>
    %1196 = arith.mulf %1193, %1195 : vector<8x256xf32>
    %1197 = vector.extract_strided_slice %996 {offsets = [0, 24], sizes = [8, 1], strides = [1, 1]} : vector<8x33xf32> to vector<8x1xf32>
    %1198 = vector.broadcast %1197 : vector<8x1xf32> to vector<8x256xf32>
    %1199 = arith.mulf %1196, %1198 : vector<8x256xf32>
    %1200 = arith.addf %1164, %1199 : vector<8x256xf32>
    %1201 = vector.extract_strided_slice %996 {offsets = [0, 25], sizes = [8, 1], strides = [1, 1]} : vector<8x33xf32> to vector<8x1xf32>
    %1202 = vector.broadcast %1201 : vector<8x1xf32> to vector<8x256xf32>
    %1203 = arith.mulf %1192, %1202 : vector<8x256xf32>
    %1204 = arith.addf %1176, %1203 : vector<8x256xf32>
    %c253_i32_569 = arith.constant 253 : i32
    %1205 = tpu.dynamic_rotate %1192 by %c253_i32_569 dim 1 : vector<8x256xf32>, i32 -> vector<8x256xf32>
    %c9_570 = arith.constant 9 : index
    %c0_571 = arith.constant 0 : index
    %c0_572 = arith.constant 0 : index
    %1206 = vector.load %arg3[%c9_570, %c0_571, %c0_572] : memref<14x8x256xf32, #tpu.memory_space<vmem>>, vector<1x8x256xf32>
    %1207 = vector.shape_cast %1206 : vector<1x8x256xf32> to vector<8x256xf32>
    %1208 = arith.mulf %1205, %1207 : vector<8x256xf32>
    %1209 = vector.extract_strided_slice %996 {offsets = [0, 26], sizes = [8, 1], strides = [1, 1]} : vector<8x33xf32> to vector<8x1xf32>
    %1210 = vector.broadcast %1209 : vector<8x1xf32> to vector<8x256xf32>
    %1211 = arith.mulf %1208, %1210 : vector<8x256xf32>
    %1212 = arith.addf %1180, %1211 : vector<8x256xf32>
    %c144_i32 = arith.constant 144 : i32
    %1213 = tpu.dynamic_rotate %995 by %c144_i32 dim 1 : vector<8x256xf32>, i32 -> vector<8x256xf32>
    %c12_573 = arith.constant 12 : index
    %c0_574 = arith.constant 0 : index
    %c0_575 = arith.constant 0 : index
    %1214 = vector.load %arg2[%c12_573, %c0_574, %c0_575] : memref<14x8x256xf32, #tpu.memory_space<vmem>>, vector<1x8x256xf32>
    %1215 = vector.shape_cast %1214 : vector<1x8x256xf32> to vector<8x256xf32>
    %1216 = arith.mulf %1213, %1215 : vector<8x256xf32>
    %c7_i32_576 = arith.constant 7 : i32
    %1217 = tpu.dynamic_rotate %1216 by %c7_i32_576 dim 1 : vector<8x256xf32>, i32 -> vector<8x256xf32>
    %c1_577 = arith.constant 1 : index
    %c0_578 = arith.constant 0 : index
    %c0_579 = arith.constant 0 : index
    %1218 = vector.load %arg3[%c1_577, %c0_578, %c0_579] : memref<14x8x256xf32, #tpu.memory_space<vmem>>, vector<1x8x256xf32>
    %1219 = vector.shape_cast %1218 : vector<1x8x256xf32> to vector<8x256xf32>
    %1220 = arith.mulf %1217, %1219 : vector<8x256xf32>
    %1221 = vector.extract_strided_slice %996 {offsets = [0, 27], sizes = [8, 1], strides = [1, 1]} : vector<8x33xf32> to vector<8x1xf32>
    %1222 = vector.broadcast %1221 : vector<8x1xf32> to vector<8x256xf32>
    %1223 = arith.mulf %1220, %1222 : vector<8x256xf32>
    %1224 = arith.addf %1188, %1223 : vector<8x256xf32>
    %1225 = vector.extract_strided_slice %996 {offsets = [0, 28], sizes = [8, 1], strides = [1, 1]} : vector<8x33xf32> to vector<8x1xf32>
    %1226 = vector.broadcast %1225 : vector<8x1xf32> to vector<8x256xf32>
    %1227 = arith.mulf %1216, %1226 : vector<8x256xf32>
    %1228 = arith.addf %1200, %1227 : vector<8x256xf32>
    %c249_i32_580 = arith.constant 249 : i32
    %1229 = tpu.dynamic_rotate %1216 by %c249_i32_580 dim 1 : vector<8x256xf32>, i32 -> vector<8x256xf32>
    %c12_581 = arith.constant 12 : index
    %c0_582 = arith.constant 0 : index
    %c0_583 = arith.constant 0 : index
    %1230 = vector.load %arg3[%c12_581, %c0_582, %c0_583] : memref<14x8x256xf32, #tpu.memory_space<vmem>>, vector<1x8x256xf32>
    %1231 = vector.shape_cast %1230 : vector<1x8x256xf32> to vector<8x256xf32>
    %1232 = arith.mulf %1229, %1231 : vector<8x256xf32>
    %1233 = vector.extract_strided_slice %996 {offsets = [0, 29], sizes = [8, 1], strides = [1, 1]} : vector<8x33xf32> to vector<8x1xf32>
    %1234 = vector.broadcast %1233 : vector<8x1xf32> to vector<8x256xf32>
    %1235 = arith.mulf %1232, %1234 : vector<8x256xf32>
    %1236 = arith.addf %1204, %1235 : vector<8x256xf32>
    %c80_i32_584 = arith.constant 80 : i32
    %1237 = tpu.dynamic_rotate %995 by %c80_i32_584 dim 1 : vector<8x256xf32>, i32 -> vector<8x256xf32>
    %c13_585 = arith.constant 13 : index
    %c0_586 = arith.constant 0 : index
    %c0_587 = arith.constant 0 : index
    %1238 = vector.load %arg2[%c13_585, %c0_586, %c0_587] : memref<14x8x256xf32, #tpu.memory_space<vmem>>, vector<1x8x256xf32>
    %1239 = vector.shape_cast %1238 : vector<1x8x256xf32> to vector<8x256xf32>
    %1240 = arith.mulf %1237, %1239 : vector<8x256xf32>
    %c11_i32_588 = arith.constant 11 : i32
    %1241 = tpu.dynamic_rotate %1240 by %c11_i32_588 dim 1 : vector<8x256xf32>, i32 -> vector<8x256xf32>
    %c0_589 = arith.constant 0 : index
    %c0_590 = arith.constant 0 : index
    %c0_591 = arith.constant 0 : index
    %1242 = vector.load %arg3[%c0_589, %c0_590, %c0_591] : memref<14x8x256xf32, #tpu.memory_space<vmem>>, vector<1x8x256xf32>
    %1243 = vector.shape_cast %1242 : vector<1x8x256xf32> to vector<8x256xf32>
    %1244 = arith.mulf %1241, %1243 : vector<8x256xf32>
    %1245 = vector.extract_strided_slice %996 {offsets = [0, 30], sizes = [8, 1], strides = [1, 1]} : vector<8x33xf32> to vector<8x1xf32>
    %1246 = vector.broadcast %1245 : vector<8x1xf32> to vector<8x256xf32>
    %1247 = arith.mulf %1244, %1246 : vector<8x256xf32>
    %1248 = arith.addf %1212, %1247 : vector<8x256xf32>
    %1249 = vector.extract_strided_slice %996 {offsets = [0, 31], sizes = [8, 1], strides = [1, 1]} : vector<8x33xf32> to vector<8x1xf32>
    %1250 = vector.broadcast %1249 : vector<8x1xf32> to vector<8x256xf32>
    %1251 = arith.mulf %1240, %1250 : vector<8x256xf32>
    %1252 = arith.addf %1224, %1251 : vector<8x256xf32>
    %c245_i32_592 = arith.constant 245 : i32
    %1253 = tpu.dynamic_rotate %1240 by %c245_i32_592 dim 1 : vector<8x256xf32>, i32 -> vector<8x256xf32>
    %c13_593 = arith.constant 13 : index
    %c0_594 = arith.constant 0 : index
    %c0_595 = arith.constant 0 : index
    %1254 = vector.load %arg3[%c13_593, %c0_594, %c0_595] : memref<14x8x256xf32, #tpu.memory_space<vmem>>, vector<1x8x256xf32>
    %1255 = vector.shape_cast %1254 : vector<1x8x256xf32> to vector<8x256xf32>
    %1256 = arith.mulf %1253, %1255 : vector<8x256xf32>
    %1257 = vector.extract_strided_slice %996 {offsets = [0, 32], sizes = [8, 1], strides = [1, 1]} : vector<8x33xf32> to vector<8x1xf32>
    %1258 = vector.broadcast %1257 : vector<8x1xf32> to vector<8x256xf32>
    %1259 = arith.mulf %1256, %1258 : vector<8x256xf32>
    %1260 = arith.addf %1228, %1259 : vector<8x256xf32>
    %1261 = arith.addf %1260, %1236 : vector<8x256xf32>
    %1262 = arith.addf %1261, %1248 : vector<8x256xf32>
    %1263 = arith.addf %1262, %1252 : vector<8x256xf32>
    %c0_596 = arith.constant 0 : index
    %c0_597 = arith.constant 0 : index
    %1264 = vector.load %arg11[%c0_596, %c0_597] : memref<8x1xf32, #tpu.memory_space<vmem>>, vector<8x1xf32>
    %1265 = vector.broadcast %1264 : vector<8x1xf32> to vector<8x256xf32>
    %1266 = arith.addf %1263, %1265 : vector<8x256xf32>
    %cst_598 = arith.constant 0.000000e+00 : f32
    %1267 = vector.broadcast %cst_598 : f32 to vector<8x256xf32>
    %1268 = arith.maximumf %1266, %1267 : vector<8x256xf32>
    %c0_599 = arith.constant 0 : index
    %c0_600 = arith.constant 0 : index
    %1269 = vector.load %arg12[%c0_599, %c0_600] : memref<8x8xf32, #tpu.memory_space<vmem>>, vector<8x8xf32>
    %1270 = arith.truncf %1269 : vector<8x8xf32> to vector<8x8xbf16>
    %1271 = arith.truncf %1268 : vector<8x256xf32> to vector<8x256xbf16>
    %cst_601 = arith.constant dense<0.000000e+00> : vector<8x256xf32>
    %1272 = tpu.matmul %1270, %1271, %cst_601 {dimension_numbers = #tpu.dot_dimension_numbers<[1], [0], [0], [1], [0, 0, 1, 1], [], []>} : vector<8x8xbf16>, vector<8x256xbf16>, vector<8x256xf32> -> vector<8x256xf32>
    %c0_602 = arith.constant 0 : index
    %c0_603 = arith.constant 0 : index
    %1273 = vector.load %arg13[%c0_602, %c0_603] : memref<8x1xf32, #tpu.memory_space<vmem>>, vector<8x1xf32>
    %1274 = vector.broadcast %1273 : vector<8x1xf32> to vector<8x256xf32>
    %1275 = arith.addf %1272, %1274 : vector<8x256xf32>
    %1276 = arith.addf %991, %1275 : vector<8x256xf32>
    %c0_604 = arith.constant 0 : index
    %c0_605 = arith.constant 0 : index
    %1277 = vector.load %arg14[%c0_604, %c0_605] : memref<8x256xf32, #tpu.memory_space<vmem>>, vector<8x256xf32>
    tpu.vector_store %arg14[%c0_604, %c0_605], %1276 {strides = array<i32>} : memref<8x256xf32, #tpu.memory_space<vmem>>, vector<8x256xf32>,
    return
  }
  func.func @transform_0(%arg0: i32) -> (i32, i32) {
    %c0_i32 = arith.constant 0 : i32
    %c0_i32_0 = arith.constant 0 : i32
    return %c0_i32, %arg0 : i32, i32
  }
  func.func @transform_1(%arg0: i32) -> (i32, i32, i32) {
    %c0_i32 = arith.constant 0 : i32
    %c0_i32_0 = arith.constant 0 : i32
    %c0_i32_1 = arith.constant 0 : i32
    %c0_i32_2 = arith.constant 0 : i32
    return %c0_i32, %c0_i32_0, %c0_i32_1 : i32, i32, i32
  }
  func.func @transform_2(%arg0: i32) -> (i32, i32, i32) {
    %c0_i32 = arith.constant 0 : i32
    %c0_i32_0 = arith.constant 0 : i32
    %c0_i32_1 = arith.constant 0 : i32
    %c0_i32_2 = arith.constant 0 : i32
    return %c0_i32, %c0_i32_0, %c0_i32_1 : i32, i32, i32
  }
  func.func @transform_3(%arg0: i32) -> (i32, i32) {
    %c0_i32 = arith.constant 0 : i32
    %c0_i32_0 = arith.constant 0 : i32
    %c0_i32_1 = arith.constant 0 : i32
    return %c0_i32, %c0_i32_0 : i32, i32
  }
  func.func @transform_4(%arg0: i32) -> (i32, i32) {
    %c0_i32 = arith.constant 0 : i32
    %c0_i32_0 = arith.constant 0 : i32
    %c0_i32_1 = arith.constant 0 : i32
    return %c0_i32, %c0_i32_0 : i32, i32
  }
  func.func @transform_5(%arg0: i32) -> (i32, i32) {
    %c0_i32 = arith.constant 0 : i32
    %c0_i32_0 = arith.constant 0 : i32
    %c0_i32_1 = arith.constant 0 : i32
    return %c0_i32, %c0_i32_0 : i32, i32
  }
  func.func @transform_6(%arg0: i32) -> (i32, i32) {
    %c0_i32 = arith.constant 0 : i32
    %c0_i32_0 = arith.constant 0 : i32
    %c0_i32_1 = arith.constant 0 : i32
    return %c0_i32, %c0_i32_0 : i32, i32
  }
  func.func @transform_7(%arg0: i32) -> (i32, i32) {
    %c0_i32 = arith.constant 0 : i32
    %c0_i32_0 = arith.constant 0 : i32
    %c0_i32_1 = arith.constant 0 : i32
    return %c0_i32, %c0_i32_0 : i32, i32
  }
  func.func @transform_8(%arg0: i32) -> (i32, i32) {
    %c0_i32 = arith.constant 0 : i32
    %c0_i32_0 = arith.constant 0 : i32
    %c0_i32_1 = arith.constant 0 : i32
    return %c0_i32, %c0_i32_0 : i32, i32
  }
  func.func @transform_9(%arg0: i32) -> (i32, i32) {
    %c0_i32 = arith.constant 0 : i32
    %c0_i32_0 = arith.constant 0 : i32
    %c0_i32_1 = arith.constant 0 : i32
    return %c0_i32, %c0_i32_0 : i32, i32
  }
  func.func @transform_10(%arg0: i32) -> (i32, i32) {
    %c0_i32 = arith.constant 0 : i32
    %c0_i32_0 = arith.constant 0 : i32
    %c0_i32_1 = arith.constant 0 : i32
    return %c0_i32, %c0_i32_0 : i32, i32
  }
  func.func @transform_11(%arg0: i32) -> (i32, i32) {
    %c0_i32 = arith.constant 0 : i32
    %c0_i32_0 = arith.constant 0 : i32
    %c0_i32_1 = arith.constant 0 : i32
    return %c0_i32, %c0_i32_0 : i32, i32
  }
  func.func @transform_12(%arg0: i32) -> (i32, i32) {
    %c0_i32 = arith.constant 0 : i32
    %c0_i32_0 = arith.constant 0 : i32
    %c0_i32_1 = arith.constant 0 : i32
    return %c0_i32, %c0_i32_0 : i32, i32
  }
  func.func @transform_13(%arg0: i32) -> (i32, i32) {
    %c0_i32 = arith.constant 0 : i32
    %c0_i32_0 = arith.constant 0 : i32
    return %c0_i32, %arg0 : i32, i32
  }
}

</mosaic_0001>

<llo_original>
// kernel: tpu_custom_call.1
$region0: #{tpu_custom_call.1}
  #allocation0 [shape = 'u32[]', space=smem, size = 0x4, offset = 0x4, fixed_abs, tag = 'smem constant byte address 0x4 - core index']
  #allocation1 [shape = 'u32[72,128]{1,0:T(1,128)}', space=vmem, size = 0x9000, scoped, tag = 'internal scratch']
  %s0 = inlined_call_operand.hbm [shape: f32[8,512], index: 0, kind: input, shape index: {}]
  %s1 = inlined_call_operand.hbm [shape: f32[14,8,256], index: 1, kind: input, shape index: {}]
  %s2 = inlined_call_operand.hbm [shape: f32[14,8,256], index: 2, kind: input, shape index: {}]
  %s3 = inlined_call_operand.vmem [shape: f32[8,8], index: 3, kind: input, shape index: {}]
  %s4 = inlined_call_operand.vmem [shape: f32[8,121], index: 4, kind: input, shape index: {}]
  %s5 = inlined_call_operand.vmem [shape: f32[8,1], index: 5, kind: input, shape index: {}]
  %s6 = inlined_call_operand.vmem [shape: f32[8,8], index: 6, kind: input, shape index: {}]
  %s7 = inlined_call_operand.vmem [shape: f32[8,1], index: 7, kind: input, shape index: {}]
  %s8 = inlined_call_operand.vmem [shape: f32[8,8], index: 8, kind: input, shape index: {}]
  %s9 = inlined_call_operand.hbm [shape: f32[8,33], index: 9, kind: input, shape index: {}]
  %s10 = inlined_call_operand.vmem [shape: f32[8,1], index: 10, kind: input, shape index: {}]
  %s11 = inlined_call_operand.vmem [shape: f32[8,8], index: 11, kind: input, shape index: {}]
  %s12 = inlined_call_operand.vmem [shape: f32[8,1], index: 12, kind: input, shape index: {}]
  %s13 = inlined_call_operand.hbm [shape: f32[8,512], index: 13, kind: output, shape index: {}]
  %s14 = sld [smem:[#allocation0]]
  $region101: #{tpu_custom_call.1} parent=0
    _
  %s16 = ssub.s32 1, %s14
  %s17 = scalar_select 0, %s16, %s14
  $region1: #{tpu_custom_call.1} parent=0
    #allocation2 [shape = 'u8[16384]{0}', space=vmem, size = 0x4000, scoped, tag = 'input window, operand 0']
    #allocation3 [shape = 's32[2]{0}', space=sflag, size = 0x8, scoped, tag = 'scoped memory for tpu_custom_call.1']
    #allocation4 [shape = 's32[2]{0}', space=sflag, size = 0x8, scoped, tag = 'scoped memory for tpu_custom_call.1']
    #allocation5 [shape = 'u8[114688]{0}', space=vmem, size = 0x1c000, scoped, tag = 'input window, operand 1, single buffered']
    #allocation6 [shape = 's32[1]{0}', space=sflag, size = 0x4, scoped, tag = 'scoped memory for tpu_custom_call.1']
    #allocation7 [shape = 'u8[114688]{0}', space=vmem, size = 0x1c000, scoped, tag = 'input window, operand 2, single buffered']
    #allocation8 [shape = 'u8[4096]{0}', space=vmem, size = 0x1000, scoped, tag = 'input window, operand 9, single buffered']
    #allocation9 [shape = 's32[1]{0}', space=sflag, size = 0x4, scoped, tag = 'scoped memory for tpu_custom_call.1']
    #allocation10 [shape = 'u8[16384]{0}', space=vmem, size = 0x4000, scoped, tag = 'output window, operand 0']
    %18 = vsyncpa [#allocation3], 0
    %s19 = scalar_lea.sflag [#allocation3], 1
    %20 = vsyncpa %s19, 0
    %21 = vsyncpa [#allocation6], 0
    %22 = vsyncpa [#allocation9], 0
    %23 = vsyncpa [#allocation4], 0
    %s24 = scalar_lea.sflag [#allocation4], 1
    %25 = vsyncpa %s24, 0
    loop: start=0, step=1, limit=4
    $region2: #{tpu_custom_call.1} parent=1 // loop_pre_header
      _
    $region3: #{tpu_custom_call.1} parent=1 // loop_header
      %s27 = sphi 0, %s31
      %p28 = scmp.ge.s32.totalorder %s27, 4
      %s37 = sphi 0, %s39
      %s40 = sphi 0, %s37
      %s41 = sphi 0, %s40
      %s57 = sphi 0, %s41
      %s61 = sphi 0, %s61
      %s63 = sphi 0, %s61
      %s64 = sphi 0, %s63
      %s78 = sphi 0, %s64
      %s82 = sphi 0, %s82
      %s84 = sphi 0, %s82
      %s85 = sphi 0, %s84
      %s99 = sphi 0, %s85
      %s103 = sphi 0, %s103
      %s105 = sphi 0, %s103
      %s106 = sphi 0, %s105
      %s120 = sphi 0, %s106
      %s124 = sphi 0, %s124
      %s126 = sphi 0, %s124
      %s127 = sphi 0, %s126
      %s141 = sphi 0, %s127
      %s145 = sphi 0, %s145
      %s147 = sphi 0, %s145
      %s148 = sphi 0, %s147
      %s162 = sphi 0, %s148
      %s166 = sphi 0, %s166
      %s168 = sphi 0, %s166
      %s169 = sphi 0, %s168
      %s183 = sphi 0, %s169
      %s187 = sphi 0, %s187
      %s189 = sphi 0, %s187
      %s190 = sphi 0, %s189
      %s204 = sphi 0, %s190
      %s208 = sphi 0, %s208
      %s210 = sphi 0, %s208
      %s211 = sphi 0, %s210
      %s225 = sphi 0, %s211
      %s229 = sphi 0, %s229
      %s231 = sphi 0, %s229
      %s232 = sphi 0, %s231
      %s246 = sphi 0, %s232
      %s250 = sphi 0, %s250
      %s252 = sphi 0, %s250
      %s253 = sphi 0, %s252
      %s267 = sphi 0, %s253
      %s271 = sphi 0, %s271
      %s273 = sphi 0, %s271
      %s274 = sphi 0, %s273
      %s288 = sphi 0, %s274
      %s292 = sphi 0, %s292
      %s294 = sphi 0, %s292
      %s295 = sphi 0, %s294
      %s309 = sphi 0, %s295
      %s315 = sphi 0, %s317
      %s318 = sphi 0, %s315
      %s319 = sphi 0, %s318
      %s335 = sphi 0, %s319
    $region4: #{tpu_custom_call.1} parent=1 // loop_header_branch
      %30 = sbr.rel (%p28) target = $region8
    $region5: #{tpu_custom_call.1} parent=1 // loop_body
      %s32 = ssub.s32 %s27, 1
      %s33 = ssub.s32 %s27, 2
      %s34 = sadd.s32 %s27, 1
      %s35 = ssub.s32 %s27, %s34
      %p36 = scmp.eq.s32.totalorder %s35, 0
      %s38 = sadd.s32 %s37, 1
      %s39 = scalar_select %p36, %s37, %s38
      %p42 = pneg %p36
      %p43 = scmp.eq.s32.totalorder %s27, 1
      %p44 = por %p42, %p43
      %p45 = scmp.ne.s32.totalorder %s37, %s40
      %p46 = scmp.eq.s32.totalorder %s27, 0
      %p47 = por %p45, %p46
      %p48 = scmp.ne.s32.totalorder %s37, %s40
      %p49 = scmp.eq.s32.totalorder %s32, 1
      %p50 = por %p48, %p49
      %p51 = scmp.ne.s32.totalorder %s40, %s41
      %p52 = scmp.eq.s32.totalorder %s32, 0
      %p53 = por %p51, %p52
      %p54 = scmp.ne.s32.totalorder %s40, %s41
      %p55 = scmp.eq.s32.totalorder %s33, 1
      %p56 = por %p54, %p55
      %p58 = scmp.ne.s32.totalorder %s41, %s57
      %p59 = scmp.eq.s32.totalorder %s33, 0
      %p60 = por %p58, %p59
      %s62 = sadd.s32 %s61, 1
      %p65 = scmp.eq.s32.totalorder %s27, 1
      %p66 = scmp.ne.s32.totalorder %s61, %s63
      %p67 = scmp.eq.s32.totalorder %s27, 0
      %p68 = por %p66, %p67
      %p69 = scmp.ne.s32.totalorder %s61, %s63
      %p70 = scmp.eq.s32.totalorder %s32, 1
      %p71 = por %p69, %p70
      %p72 = scmp.ne.s32.totalorder %s63, %s64
      %p73 = scmp.eq.s32.totalorder %s32, 0
      %p74 = por %p72, %p73
      %p75 = scmp.ne.s32.totalorder %s63, %s64
      %p76 = scmp.eq.s32.totalorder %s33, 1
      %p77 = por %p75, %p76
      %p79 = scmp.ne.s32.totalorder %s64, %s78
      %p80 = scmp.eq.s32.totalorder %s33, 0
      %p81 = por %p79, %p80
      %s83 = sadd.s32 %s82, 1
      %p86 = scmp.eq.s32.totalorder %s27, 1
      %p87 = scmp.ne.s32.totalorder %s82, %s84
      %p88 = scmp.eq.s32.totalorder %s27, 0
      %p89 = por %p87, %p88
      %p90 = scmp.ne.s32.totalorder %s82, %s84
      %p91 = scmp.eq.s32.totalorder %s32, 1
      %p92 = por %p90, %p91
      %p93 = scmp.ne.s32.totalorder %s84, %s85
      %p94 = scmp.eq.s32.totalorder %s32, 0
      %p95 = por %p93, %p94
      %p96 = scmp.ne.s32.totalorder %s84, %s85
      %p97 = scmp.eq.s32.totalorder %s33, 1
      %p98 = por %p96, %p97
      %p100 = scmp.ne.s32.totalorder %s85, %s99
      %p101 = scmp.eq.s32.totalorder %s33, 0
      %p102 = por %p100, %p101
      %s104 = sadd.s32 %s103, 1
      %p107 = scmp.eq.s32.totalorder %s27, 1
      %p108 = scmp.ne.s32.totalorder %s103, %s105
      %p109 = scmp.eq.s32.totalorder %s27, 0
      %p110 = por %p108, %p109
      %p111 = scmp.ne.s32.totalorder %s103, %s105
      %p112 = scmp.eq.s32.totalorder %s32, 1
      %p113 = por %p111, %p112
      %p114 = scmp.ne.s32.totalorder %s105, %s106
      %p115 = scmp.eq.s32.totalorder %s32, 0
      %p116 = por %p114, %p115
      %p117 = scmp.ne.s32.totalorder %s105, %s106
      %p118 = scmp.eq.s32.totalorder %s33, 1
      %p119 = por %p117, %p118
      %p121 = scmp.ne.s32.totalorder %s106, %s120
      %p122 = scmp.eq.s32.totalorder %s33, 0
      %p123 = por %p121, %p122
      %s125 = sadd.s32 %s124, 1
      %p128 = scmp.eq.s32.totalorder %s27, 1
      %p129 = scmp.ne.s32.totalorder %s124, %s126
      %p130 = scmp.eq.s32.totalorder %s27, 0
      %p131 = por %p129, %p130
      %p132 = scmp.ne.s32.totalorder %s124, %s126
      %p133 = scmp.eq.s32.totalorder %s32, 1
      %p134 = por %p132, %p133
      %p135 = scmp.ne.s32.totalorder %s126, %s127
      %p136 = scmp.eq.s32.totalorder %s32, 0
      %p137 = por %p135, %p136
      %p138 = scmp.ne.s32.totalorder %s126, %s127
      %p139 = scmp.eq.s32.totalorder %s33, 1
      %p140 = por %p138, %p139
      %p142 = scmp.ne.s32.totalorder %s127, %s141
      %p143 = scmp.eq.s32.totalorder %s33, 0
      %p144 = por %p142, %p143
      %s146 = sadd.s32 %s145, 1
      %p149 = scmp.eq.s32.totalorder %s27, 1
      %p150 = scmp.ne.s32.totalorder %s145, %s147
      %p151 = scmp.eq.s32.totalorder %s27, 0
      %p152 = por %p150, %p151
      %p153 = scmp.ne.s32.totalorder %s145, %s147
      %p154 = scmp.eq.s32.totalorder %s32, 1
      %p155 = por %p153, %p154
      %p156 = scmp.ne.s32.totalorder %s147, %s148
      %p157 = scmp.eq.s32.totalorder %s32, 0
      %p158 = por %p156, %p157
      %p159 = scmp.ne.s32.totalorder %s147, %s148
      %p160 = scmp.eq.s32.totalorder %s33, 1
      %p161 = por %p159, %p160
      %p163 = scmp.ne.s32.totalorder %s148, %s162
      %p164 = scmp.eq.s32.totalorder %s33, 0
      %p165 = por %p163, %p164
      %s167 = sadd.s32 %s166, 1
      %p170 = scmp.eq.s32.totalorder %s27, 1
      %p171 = scmp.ne.s32.totalorder %s166, %s168
      %p172 = scmp.eq.s32.totalorder %s27, 0
      %p173 = por %p171, %p172
      %p174 = scmp.ne.s32.totalorder %s166, %s168
      %p175 = scmp.eq.s32.totalorder %s32, 1
      %p176 = por %p174, %p175
      %p177 = scmp.ne.s32.totalorder %s168, %s169
      %p178 = scmp.eq.s32.totalorder %s32, 0
      %p179 = por %p177, %p178
      %p180 = scmp.ne.s32.totalorder %s168, %s169
      %p181 = scmp.eq.s32.totalorder %s33, 1
      %p182 = por %p180, %p181
      %p184 = scmp.ne.s32.totalorder %s169, %s183
      %p185 = scmp.eq.s32.totalorder %s33, 0
      %p186 = por %p184, %p185
      %s188 = sadd.s32 %s187, 1
      %p191 = scmp.eq.s32.totalorder %s27, 1
      %p192 = scmp.ne.s32.totalorder %s187, %s189
      %p193 = scmp.eq.s32.totalorder %s27, 0
      %p194 = por %p192, %p193
      %p195 = scmp.ne.s32.totalorder %s187, %s189
      %p196 = scmp.eq.s32.totalorder %s32, 1
      %p197 = por %p195, %p196
      %p198 = scmp.ne.s32.totalorder %s189, %s190
      %p199 = scmp.eq.s32.totalorder %s32, 0
      %p200 = por %p198, %p199
      %p201 = scmp.ne.s32.totalorder %s189, %s190
      %p202 = scmp.eq.s32.totalorder %s33, 1
      %p203 = por %p201, %p202
      %p205 = scmp.ne.s32.totalorder %s190, %s204
      %p206 = scmp.eq.s32.totalorder %s33, 0
      %p207 = por %p205, %p206
      %s209 = sadd.s32 %s208, 1
      %p212 = scmp.eq.s32.totalorder %s27, 1
      %p213 = scmp.ne.s32.totalorder %s208, %s210
      %p214 = scmp.eq.s32.totalorder %s27, 0
      %p215 = por %p213, %p214
      %p216 = scmp.ne.s32.totalorder %s208, %s210
      %p217 = scmp.eq.s32.totalorder %s32, 1
      %p218 = por %p216, %p217
      %p219 = scmp.ne.s32.totalorder %s210, %s211
      %p220 = scmp.eq.s32.totalorder %s32, 0
      %p221 = por %p219, %p220
      %p222 = scmp.ne.s32.totalorder %s210, %s211
      %p223 = scmp.eq.s32.totalorder %s33, 1
      %p224 = por %p222, %p223
      %p226 = scmp.ne.s32.totalorder %s211, %s225
      %p227 = scmp.eq.s32.totalorder %s33, 0
      %p228 = por %p226, %p227
      %s230 = sadd.s32 %s229, 1
      %p233 = scmp.eq.s32.totalorder %s27, 1
      %p234 = scmp.ne.s32.totalorder %s229, %s231
      %p235 = scmp.eq.s32.totalorder %s27, 0
      %p236 = por %p234, %p235
      %p237 = scmp.ne.s32.totalorder %s229, %s231
      %p238 = scmp.eq.s32.totalorder %s32, 1
      %p239 = por %p237, %p238
      %p240 = scmp.ne.s32.totalorder %s231, %s232
      %p241 = scmp.eq.s32.totalorder %s32, 0
      %p242 = por %p240, %p241
      %p243 = scmp.ne.s32.totalorder %s231, %s232
      %p244 = scmp.eq.s32.totalorder %s33, 1
      %p245 = por %p243, %p244
      %p247 = scmp.ne.s32.totalorder %s232, %s246
      %p248 = scmp.eq.s32.totalorder %s33, 0
      %p249 = por %p247, %p248
      %s251 = sadd.s32 %s250, 1
      %p254 = scmp.eq.s32.totalorder %s27, 1
      %p255 = scmp.ne.s32.totalorder %s250, %s252
      %p256 = scmp.eq.s32.totalorder %s27, 0
      %p257 = por %p255, %p256
      %p258 = scmp.ne.s32.totalorder %s250, %s252
      %p259 = scmp.eq.s32.totalorder %s32, 1
      %p260 = por %p258, %p259
      %p261 = scmp.ne.s32.totalorder %s252, %s253
      %p262 = scmp.eq.s32.totalorder %s32, 0
      %p263 = por %p261, %p262
      %p264 = scmp.ne.s32.totalorder %s252, %s253
      %p265 = scmp.eq.s32.totalorder %s33, 1
      %p266 = por %p264, %p265
      %p268 = scmp.ne.s32.totalorder %s253, %s267
      %p269 = scmp.eq.s32.totalorder %s33, 0
      %p270 = por %p268, %p269
      %s272 = sadd.s32 %s271, 1
      %p275 = scmp.eq.s32.totalorder %s27, 1
      %p276 = scmp.ne.s32.totalorder %s271, %s273
      %p277 = scmp.eq.s32.totalorder %s27, 0
      %p278 = por %p276, %p277
      %p279 = scmp.ne.s32.totalorder %s271, %s273
      %p280 = scmp.eq.s32.totalorder %s32, 1
      %p281 = por %p279, %p280
      %p282 = scmp.ne.s32.totalorder %s273, %s274
      %p283 = scmp.eq.s32.totalorder %s32, 0
      %p284 = por %p282, %p283
      %p285 = scmp.ne.s32.totalorder %s273, %s274
      %p286 = scmp.eq.s32.totalorder %s33, 1
      %p287 = por %p285, %p286
      %p289 = scmp.ne.s32.totalorder %s274, %s288
      %p290 = scmp.eq.s32.totalorder %s33, 0
      %p291 = por %p289, %p290
      %s293 = sadd.s32 %s292, 1
      %p296 = scmp.eq.s32.totalorder %s27, 1
      %p297 = scmp.ne.s32.totalorder %s292, %s294
      %p298 = scmp.eq.s32.totalorder %s27, 0
      %p299 = por %p297, %p298
      %p300 = scmp.ne.s32.totalorder %s292, %s294
      %p301 = scmp.eq.s32.totalorder %s32, 1
      %p302 = por %p300, %p301
      %p303 = scmp.ne.s32.totalorder %s294, %s295
      %p304 = scmp.eq.s32.totalorder %s32, 0
      %p305 = por %p303, %p304
      %p306 = scmp.ne.s32.totalorder %s294, %s295
      %p307 = scmp.eq.s32.totalorder %s33, 1
      %p308 = por %p306, %p307
      %p310 = scmp.ne.s32.totalorder %s295, %s309
      %p311 = scmp.eq.s32.totalorder %s33, 0
      %p312 = por %p310, %p311
      %s313 = ssub.s32 %s27, %s34
      %p314 = scmp.eq.s32.totalorder %s313, 0
      %s316 = sadd.s32 %s315, 1
      %s317 = scalar_select %p314, %s315, %s316
      %p320 = pneg %p314
      %p321 = scmp.eq.s32.totalorder %s27, 1
      %p322 = por %p320, %p321
      %p323 = scmp.ne.s32.totalorder %s315, %s318
      %p324 = scmp.eq.s32.totalorder %s27, 0
      %p325 = por %p323, %p324
      %p326 = scmp.ne.s32.totalorder %s315, %s318
      %p327 = scmp.eq.s32.totalorder %s32, 1
      %p328 = por %p326, %p327
      %p329 = scmp.ne.s32.totalorder %s318, %s319
      %p330 = scmp.eq.s32.totalorder %s32, 0
      %p331 = por %p329, %p330
      %p332 = scmp.ne.s32.totalorder %s318, %s319
      %p333 = scmp.eq.s32.totalorder %s33, 1
      %p334 = por %p332, %p333
      %p336 = scmp.ne.s32.totalorder %s319, %s335
      %p337 = scmp.eq.s32.totalorder %s33, 0
      %p338 = por %p336, %p337
      %p339 = scmp.le.s32.totalorder 1, %s27
      %p340 = scmp.lt.s32.totalorder %s27, 3
      %p341 = pnand %p339, %p340
      %p342 = pneg %p341
      // Predicated region
      $region9: #{tpu_custom_call.1} parent=5 // pred_check
        _
      $region10: #{tpu_custom_call.1} parent=5 // pred_check_branch
        %344 = sbr.rel (%p341) target = $region12
      $region11: #{tpu_custom_call.1} parent=5 // pred_region
        %s345 = ssub.s32 %s27, 1
        // Predicated region
        $region13: #{tpu_custom_call.1} parent=11 // pred_check
          %p346 = pneg %p74
        $region14: #{tpu_custom_call.1} parent=11 // pred_check_branch
          %348 = sbr.rel (%p346) target = $region16
        $region15: #{tpu_custom_call.1} parent=11 // pred_region
          %350 = vsyncadd [#allocation6], 0
          %s351 = sshll.u32 %s1, 4
          %s352 = int_to_ptr.hbm [resolvable:$true] %s351
          %s353 = sshll.u32 [#allocation5], 4
          %s354 = int_to_ptr.vmem [resolvable:$true] %s353
          %359 = dma.hbm_to_vmem [thread:$0]  %s352, 3584, %s354, [#allocation6], 256, 256, 16
        $region16: #{tpu_custom_call.1} parent=11 // pred_fallthru
          _
        // Predicated region
        $region17: #{tpu_custom_call.1} parent=11 // pred_check
          %p360 = pneg %p95
        $region18: #{tpu_custom_call.1} parent=11 // pred_check_branch
          %362 = sbr.rel (%p360) target = $region20
        $region19: #{tpu_custom_call.1} parent=11 // pred_region
          %364 = vsyncadd [#allocation6], 0
          %s365 = sshll.u32 %s2, 4
          %s366 = int_to_ptr.hbm [resolvable:$true] %s365
          %s367 = sshll.u32 [#allocation7], 4
          %s368 = int_to_ptr.vmem [resolvable:$true] %s367
          %373 = dma.hbm_to_vmem [thread:$0]  %s366, 3584, %s368, [#allocation6], 256, 256, 16
        $region20: #{tpu_custom_call.1} parent=11 // pred_fallthru
          _
        // Predicated region
        $region21: #{tpu_custom_call.1} parent=11 // pred_check
          %p374 = pneg %p116
        $region22: #{tpu_custom_call.1} parent=11 // pred_check_branch
          %376 = sbr.rel (%p374) target = $region24
        $region23: #{tpu_custom_call.1} parent=11 // pred_region
          _
        $region24: #{tpu_custom_call.1} parent=11 // pred_fallthru
          _
        // Predicated region
        $region25: #{tpu_custom_call.1} parent=11 // pred_check
          %p377 = pneg %p137
        $region26: #{tpu_custom_call.1} parent=11 // pred_check_branch
          %379 = sbr.rel (%p377) target = $region28
        $region27: #{tpu_custom_call.1} parent=11 // pred_region
          _
        $region28: #{tpu_custom_call.1} parent=11 // pred_fallthru
          _
        // Predicated region
        $region29: #{tpu_custom_call.1} parent=11 // pred_check
          %p380 = pneg %p158
        $region30: #{tpu_custom_call.1} parent=11 // pred_check_branch
          %382 = sbr.rel (%p380) target = $region32
        $region31: #{tpu_custom_call.1} parent=11 // pred_region
          _
        $region32: #{tpu_custom_call.1} parent=11 // pred_fallthru
          _
        // Predicated region
        $region33: #{tpu_custom_call.1} parent=11 // pred_check
          %p383 = pneg %p179
        $region34: #{tpu_custom_call.1} parent=11 // pred_check_branch
          %385 = sbr.rel (%p383) target = $region36
        $region35: #{tpu_custom_call.1} parent=11 // pred_region
          _
        $region36: #{tpu_custom_call.1} parent=11 // pred_fallthru
          _
        // Predicated region
        $region37: #{tpu_custom_call.1} parent=11 // pred_check
          %p386 = pneg %p200
        $region38: #{tpu_custom_call.1} parent=11 // pred_check_branch
          %388 = sbr.rel (%p386) target = $region40
        $region39: #{tpu_custom_call.1} parent=11 // pred_region
          _
        $region40: #{tpu_custom_call.1} parent=11 // pred_fallthru
          _
        // Predicated region
        $region41: #{tpu_custom_call.1} parent=11 // pred_check
          %p389 = pneg %p221
        $region42: #{tpu_custom_call.1} parent=11 // pred_check_branch
          %391 = sbr.rel (%p389) target = $region44
        $region43: #{tpu_custom_call.1} parent=11 // pred_region
          _
        $region44: #{tpu_custom_call.1} parent=11 // pred_fallthru
          _
        // Predicated region
        $region45: #{tpu_custom_call.1} parent=11 // pred_check
          %p392 = pneg %p242
        $region46: #{tpu_custom_call.1} parent=11 // pred_check_branch
          %394 = sbr.rel (%p392) target = $region48
        $region47: #{tpu_custom_call.1} parent=11 // pred_region
          %396 = vsyncadd [#allocation9], 0
          %s398 = sshll.u32 %s9, 4
          %s399 = int_to_ptr.hbm [resolvable:$true] %s398
          %s400 = sshll.u32 [#allocation8], 4
          %s401 = int_to_ptr.vmem [resolvable:$true] %s400
          %403 = dma.hbm_to_vmem [thread:$0]  %s399, 128, %s401, [#allocation9]
        $region48: #{tpu_custom_call.1} parent=11 // pred_fallthru
          _
        // Predicated region
        $region49: #{tpu_custom_call.1} parent=11 // pred_check
          %p404 = pneg %p263
        $region50: #{tpu_custom_call.1} parent=11 // pred_check_branch
          %406 = sbr.rel (%p404) target = $region52
        $region51: #{tpu_custom_call.1} parent=11 // pred_region
          _
        $region52: #{tpu_custom_call.1} parent=11 // pred_fallthru
          _
        // Predicated region
        $region53: #{tpu_custom_call.1} parent=11 // pred_check
          %p407 = pneg %p284
        $region54: #{tpu_custom_call.1} parent=11 // pred_check_branch
          %409 = sbr.rel (%p407) target = $region56
        $region55: #{tpu_custom_call.1} parent=11 // pred_region
          _
        $region56: #{tpu_custom_call.1} parent=11 // pred_fallthru
          _
        // Predicated region
        $region57: #{tpu_custom_call.1} parent=11 // pred_check
          %p410 = pneg %p305
        $region58: #{tpu_custom_call.1} parent=11 // pred_check_branch
          %412 = sbr.rel (%p410) target = $region60
        $region59: #{tpu_custom_call.1} parent=11 // pred_region
          _
        $region60: #{tpu_custom_call.1} parent=11 // pred_fallthru
          _
      $region12: #{tpu_custom_call.1} parent=5 // pred_fallthru
        _
      %p413 = scmp.lt.s32.totalorder %s27, 2
      // Predicated region
      $region61: #{tpu_custom_call.1} parent=5 // pred_check
        %p414 = pneg %p413
      $region62: #{tpu_custom_call.1} parent=5 // pred_check_branch
        %416 = sbr.rel (%p414) target = $region64
      $region63: #{tpu_custom_call.1} parent=5 // pred_region
        // Predicated region
        $region65: #{tpu_custom_call.1} parent=63 // pred_check
          %p417 = pneg %p47
        $region66: #{tpu_custom_call.1} parent=63 // pred_check_branch
          %419 = sbr.rel (%p417) target = $region68
        $region67: #{tpu_custom_call.1} parent=63 // pred_region
          %s420 = sand.u32 %s37, 1
          %s421 = scalar_lea.sflag [#allocation3], %s420
          %s422 = sand.u32 %s37, 1
          %s423 = smul.addr %s422, 16
          %s424 = scalar_lea.vmem [#allocation2], %s423
          %s425 = smul.u32 2, %s27
          %427 = vsyncadd %s421, 0
          %s428 = smul.addr %s425, 8
          %s429 = scalar_lea.hbm %s0, %s428
          %s431 = sshll.u32 %s429, 4
          %s432 = int_to_ptr.hbm [resolvable:$true] %s431
          %s433 = sshll.u32 %s424, 4
          %s434 = int_to_ptr.vmem [resolvable:$true] %s433
          %436 = dma.hbm_to_vmem [thread:$0]  %s432, 256, %s434, %s421
        $region68: #{tpu_custom_call.1} parent=63 // pred_fallthru
          _
      $region64: #{tpu_custom_call.1} parent=5 // pred_fallthru
        _
      %p437 = scmp.le.s32.totalorder 1, %s27
      %p438 = scmp.lt.s32.totalorder %s27, 3
      %p439 = pnand %p437, %p438
      %p440 = pneg %p439
      // Predicated region
      $region69: #{tpu_custom_call.1} parent=5 // pred_check
        _
      $region70: #{tpu_custom_call.1} parent=5 // pred_check_branch
        %442 = sbr.rel (%p439) target = $region72
      $region71: #{tpu_custom_call.1} parent=5 // pred_region
        %s443 = ssub.s32 %s27, 1
        %s444 = sand.u32 %s40, 1
        %s445 = scalar_lea.sflag [#allocation3], %s444
        %s446 = sand.u32 %s40, 1
        %s447 = smul.addr %s446, 16
        %s448 = scalar_lea.vmem [#allocation2], %s447
        // Predicated region
        $region73: #{tpu_custom_call.1} parent=71 // pred_check
          %p449 = pneg %p53
        $region74: #{tpu_custom_call.1} parent=71 // pred_check_branch
          %451 = sbr.rel (%p449) target = $region76
        $region75: #{tpu_custom_call.1} parent=71 // pred_region
          %453 = dma.done %s445, 256
        $region76: #{tpu_custom_call.1} parent=71 // pred_fallthru
          _
        // Predicated region
        $region77: #{tpu_custom_call.1} parent=71 // pred_check
          %p454 = pneg %p74
        $region78: #{tpu_custom_call.1} parent=71 // pred_check_branch
          %456 = sbr.rel (%p454) target = $region80
        $region79: #{tpu_custom_call.1} parent=71 // pred_region
          %458 = dma.done [#allocation6], 3584
        $region80: #{tpu_custom_call.1} parent=71 // pred_fallthru
          _
        // Predicated region
        $region81: #{tpu_custom_call.1} parent=71 // pred_check
          %p459 = pneg %p95
        $region82: #{tpu_custom_call.1} parent=71 // pred_check_branch
          %461 = sbr.rel (%p459) target = $region84
        $region83: #{tpu_custom_call.1} parent=71 // pred_region
          %463 = dma.done [#allocation6], 3584
        $region84: #{tpu_custom_call.1} parent=71 // pred_fallthru
          _
        // Predicated region
        $region85: #{tpu_custom_call.1} parent=71 // pred_check
          %p464 = pneg %p242
        $region86: #{tpu_custom_call.1} parent=71 // pred_check_branch
          %466 = sbr.rel (%p464) target = $region88
        $region87: #{tpu_custom_call.1} parent=71 // pred_region
          %468 = dma.done [#allocation9], 128
        $region88: #{tpu_custom_call.1} parent=71 // pred_fallthru
          _
        %s469 = sand.u32 %s40, 1
        %s470 = scalar_lea.sflag [#allocation3], %s469
        %s471 = sand.u32 %s40, 1
        %s472 = smul.addr %s471, 16
        %s473 = scalar_lea.vmem [#allocation2], %s472
        %p474 = pneg %p53
        %p475 = pneg %p50
        %p476 = pneg %p74
        %p477 = pneg %p71
        %p478 = pneg %p95
        %p479 = pneg %p92
        %p480 = pneg %p116
        %p481 = pneg %p113
        %p482 = pneg %p137
        %p483 = pneg %p134
        %p484 = pneg %p158
        %p485 = pneg %p155
        %p486 = pneg %p179
        %p487 = pneg %p176
        %p488 = pneg %p200
        %p489 = pneg %p197
        %p490 = pneg %p221
        %p491 = pneg %p218
        %p492 = pneg %p242
        %p493 = pneg %p239
        %p494 = pneg %p263
        %p495 = pneg %p260
        %p496 = pneg %p284
        %p497 = pneg %p281
        %p498 = pneg %p305
        %p499 = pneg %p302
        %p500 = pneg %p331
        %p501 = pneg %p328
        %s502 = sand.u32 %s318, 1
        %s503 = scalar_lea.sflag [#allocation4], %s502
        %s504 = sand.u32 %s318, 1
        %s505 = smul.addr %s504, 16
        %s506 = scalar_lea.vmem [#allocation10], %s505
        %s507 = smul.u32 2, %s32
        %s508 = smul.u32 2, %s32
        %v510 = vld [vmem:[%s448] sm:$0xff]
        %v511 = vld [vmem:[%s448 + $0x8] sm:$0xff]
        %v512 = vld [vmem:[%s3] sm:$0xff]
        %v513 = vpack.c.bf16 %v512, %v512
        %v514 = vpack.c.bf16 %v510, %v510
        %v515 = vpack.c.bf16 %v511, %v511
        %vm516 = vcmask 64512
        %v518 = vsel %vm516, %v513, 0
        %vm520 = vcmask 1043456
        %v522 = vsel %vm520, %v514, 0
        %v525 = vsel %vm520, %v515, 0
        %527 = vmatpush.bf16.msra.mxu0 0
        %528 = vmatpush.bf16.msra.mxu0 0
        %529 = vmatpush.bf16.msra.mxu0 0
        %530 = vmatpush.bf16.msra.mxu0 0
        %531 = vmatpush.bf16.msra.mxu0 0
        %532 = vmatpush.bf16.msra.mxu0 0
        %533 = vmatpush.bf16.msra.mxu0 0
        %534 = vmatpush.bf16.msra.mxu0 %v522
        %535 = vmatmul.bf16.gmra.mxu0 %v518
        %v536 = vpop.f32.mrf.mxu0
        %v537 = vadd.f32 0.0, %v536
        %v538 = vpop.f32.mrf.mxu0
        %539 = vdwg.mxu0
        %540 = vmatpush.bf16.msra.mxu0 0
        %541 = vmatpush.bf16.msra.mxu0 0
        %542 = vmatpush.bf16.msra.mxu0 0
        %543 = vmatpush.bf16.msra.mxu0 0
        %544 = vmatpush.bf16.msra.mxu0 0
        %545 = vmatpush.bf16.msra.mxu0 0
        %546 = vmatpush.bf16.msra.mxu0 0
        %547 = vmatpush.bf16.msra.mxu0 %v525
        %548 = vmatmul.bf16.gmra.mxu0 %v518
        %v549 = vpop.f32.mrf.mxu0
        %v550 = vadd.f32 0.0, %v549
        %v551 = vpop.f32.mrf.mxu0
        %552 = vdwg.mxu0
        %v553 = vld [vmem:[%s4] sm:$0xff]
        %554 = vrot.lane.b32.xlu0 %v537, 80
        %v555 = vpop.permute.xlu0 %554
        %556 = vrot.lane.b32.xlu0 %v550, 80
        %v557 = vpop.permute.xlu0 %556
        %v558 = vlaneseq
        %v559 = vand.u32 %v558, 127
        %vm560 = vcmp.lt.s32.totalorder %v559, 80
        %v561 = vsel %vm560, %v555, %v557
        %v562 = vsel %vm560, %v557, %v555
        %s563 = scalar_lea.vmem [#allocation5], 32
        %v564 = vld [vmem:[%s563] sm:$0xff]
        %v565 = vld [vmem:[%s563 + $0x8] sm:$0xff]
        %v566 = vmul.f32 %v562, %v564
        %v567 = vmul.f32 %v561, %v565
        %568 = vrot.lane.b32.xlu0 %v566, 5
        %v569 = vpop.permute.xlu0 %568
        %570 = vrot.lane.b32.xlu0 %v567, 5
        %v571 = vpop.permute.xlu0 %570
        %vm572 = vcmp.lt.s32.totalorder %v559, 5
        %v573 = vsel %vm572, %v569, %v571
        %v574 = vsel %vm572, %v571, %v569
        %s575 = scalar_lea.vmem [#allocation7], 32
        %v576 = vld [vmem:[%s575] sm:$0xff]
        %v577 = vld [vmem:[%s575 + $0x8] sm:$0xff]
        %v578 = vmul.f32 %v574, %v576
        %v579 = vmul.f32 %v573, %v577
        %581 = vset.pattern.permute.xlu0 0
        %582 = vperm.xlu0 %581, %v553
        %v583 = vpop.permute.xlu0 %582
        %v585 = vmul.f32 %v578, %v583
        %v586 = vmul.f32 %v579, %v583
        %v587 = vadd.f32 %v585, 0.0
        %v588 = vadd.f32 %v586, 0.0
        %589 = vrot.lane.b32.xlu0 %v566, 4
        %v590 = vpop.permute.xlu0 %589
        %591 = vrot.lane.b32.xlu0 %v567, 4
        %v592 = vpop.permute.xlu0 %591
        %vm593 = vcmp.lt.s32.totalorder %v559, 4
        %v594 = vsel %vm593, %v590, %v592
        %v595 = vsel %vm593, %v592, %v590
        %s596 = scalar_lea.vmem [#allocation7], 48
        %v597 = vld [vmem:[%s596] sm:$0xff]
        %v598 = vld [vmem:[%s596 + $0x8] sm:$0xff]
        %v599 = vmul.f32 %v595, %v597
        %v600 = vmul.f32 %v594, %v598
        %601 = vset.pattern.permute.xlu0 1
        %602 = vperm.xlu0 %601, %v553
        %v603 = vpop.permute.xlu0 %602
        %v605 = vmul.f32 %v599, %v603
        %v606 = vmul.f32 %v600, %v603
        %v607 = vadd.f32 %v605, 0.0
        %v608 = vadd.f32 %v606, 0.0
        %609 = vrot.lane.b32.xlu0 %v566, 3
        %v610 = vpop.permute.xlu0 %609
        %611 = vrot.lane.b32.xlu0 %v567, 3
        %v612 = vpop.permute.xlu0 %611
        %vm613 = vcmp.lt.s32.totalorder %v559, 3
        %v614 = vsel %vm613, %v610, %v612
        %v615 = vsel %vm613, %v612, %v610
        %s616 = scalar_lea.vmem [#allocation7], 64
        %v617 = vld [vmem:[%s616] sm:$0xff]
        %v618 = vld [vmem:[%s616 + $0x8] sm:$0xff]
        %v619 = vmul.f32 %v615, %v617
        %v620 = vmul.f32 %v614, %v618
        %621 = vset.pattern.permute.xlu0 2
        %622 = vperm.xlu0 %621, %v553
        %v623 = vpop.permute.xlu0 %622
        %v625 = vmul.f32 %v619, %v623
        %v626 = vmul.f32 %v620, %v623
        %v627 = vadd.f32 %v625, 0.0
        %v628 = vadd.f32 %v626, 0.0
        %629 = vrot.lane.b32.xlu0 %v566, 2
        %v630 = vpop.permute.xlu0 %629
        %631 = vrot.lane.b32.xlu0 %v567, 2
        %v632 = vpop.permute.xlu0 %631
        %vm633 = vcmp.lt.s32.totalorder %v559, 2
        %v634 = vsel %vm633, %v630, %v632
        %v635 = vsel %vm633, %v632, %v630
        %s636 = scalar_lea.vmem [#allocation7], 80
        %v637 = vld [vmem:[%s636] sm:$0xff]
        %v638 = vld [vmem:[%s636 + $0x8] sm:$0xff]
        %v639 = vmul.f32 %v635, %v637
        %v640 = vmul.f32 %v634, %v638
        %641 = vset.pattern.permute.xlu0 3
        %642 = vperm.xlu0 %641, %v553
        %v643 = vpop.permute.xlu0 %642
        %v645 = vmul.f32 %v639, %v643
        %v646 = vmul.f32 %v640, %v643
        %v647 = vadd.f32 %v645, 0.0
        %v648 = vadd.f32 %v646, 0.0
        %649 = vrot.lane.b32.xlu0 %v566, 1
        %v650 = vpop.permute.xlu0 %649
        %651 = vrot.lane.b32.xlu0 %v567, 1
        %v652 = vpop.permute.xlu0 %651
        %vm653 = vcmp.lt.s32.totalorder %v559, 1
        %v654 = vsel %vm653, %v650, %v652
        %v655 = vsel %vm653, %v652, %v650
        %s656 = scalar_lea.vmem [#allocation7], 96
        %v657 = vld [vmem:[%s656] sm:$0xff]
        %v658 = vld [vmem:[%s656 + $0x8] sm:$0xff]
        %v659 = vmul.f32 %v655, %v657
        %v660 = vmul.f32 %v654, %v658
        %661 = vset.pattern.permute.xlu0 4
        %662 = vperm.xlu0 %661, %v553
        %v663 = vpop.permute.xlu0 %662
        %v665 = vmul.f32 %v659, %v663
        %v666 = vmul.f32 %v660, %v663
        %v667 = vadd.f32 %v587, %v665
        %v668 = vadd.f32 %v588, %v666
        %669 = vset.pattern.permute.xlu0 5
        %670 = vperm.xlu0 %669, %v553
        %v671 = vpop.permute.xlu0 %670
        %v673 = vmul.f32 %v566, %v671
        %v674 = vmul.f32 %v567, %v671
        %v675 = vadd.f32 %v607, %v673
        %v676 = vadd.f32 %v608, %v674
        %677 = vrot.lane.b32.xlu0 %v566, 127
        %v678 = vpop.permute.xlu0 %677
        %679 = vrot.lane.b32.xlu0 %v567, 127
        %v680 = vpop.permute.xlu0 %679
        %vm681 = vcmp.lt.s32.totalorder %v559, 127
        %v682 = vsel %vm681, %v678, %v680
        %v683 = vsel %vm681, %v680, %v678
        %s684 = scalar_lea.vmem [#allocation7], 112
        %v685 = vld [vmem:[%s684] sm:$0xff]
        %v686 = vld [vmem:[%s684 + $0x8] sm:$0xff]
        %v687 = vmul.f32 %v682, %v685
        %v688 = vmul.f32 %v683, %v686
        %689 = vset.pattern.permute.xlu0 6
        %690 = vperm.xlu0 %689, %v553
        %v691 = vpop.permute.xlu0 %690
        %v693 = vmul.f32 %v687, %v691
        %v694 = vmul.f32 %v688, %v691
        %v695 = vadd.f32 %v627, %v693
        %v696 = vadd.f32 %v628, %v694
        %697 = vrot.lane.b32.xlu0 %v566, 126
        %v698 = vpop.permute.xlu0 %697
        %699 = vrot.lane.b32.xlu0 %v567, 126
        %v700 = vpop.permute.xlu0 %699
        %vm701 = vcmp.lt.s32.totalorder %v559, 126
        %v702 = vsel %vm701, %v698, %v700
        %v703 = vsel %vm701, %v700, %v698
        %s704 = scalar_lea.vmem [#allocation7], 128
        %v705 = vld [vmem:[%s704] sm:$0xff]
        %v706 = vld [vmem:[%s704 + $0x8] sm:$0xff]
        %v707 = vmul.f32 %v702, %v705
        %v708 = vmul.f32 %v703, %v706
        %709 = vset.pattern.permute.xlu0 7
        %710 = vperm.xlu0 %709, %v553
        %v711 = vpop.permute.xlu0 %710
        %v713 = vmul.f32 %v707, %v711
        %v714 = vmul.f32 %v708, %v711
        %v715 = vadd.f32 %v647, %v713
        %v716 = vadd.f32 %v648, %v714
        %717 = vrot.lane.b32.xlu0 %v566, 125
        %v718 = vpop.permute.xlu0 %717
        %719 = vrot.lane.b32.xlu0 %v567, 125
        %v720 = vpop.permute.xlu0 %719
        %vm721 = vcmp.lt.s32.totalorder %v559, 125
        %v722 = vsel %vm721, %v718, %v720
        %v723 = vsel %vm721, %v720, %v718
        %s724 = scalar_lea.vmem [#allocation7], 144
        %v725 = vld [vmem:[%s724] sm:$0xff]
        %v726 = vld [vmem:[%s724 + $0x8] sm:$0xff]
        %v727 = vmul.f32 %v722, %v725
        %v728 = vmul.f32 %v723, %v726
        %729 = vset.pattern.permute.xlu0 8
        %730 = vperm.xlu0 %729, %v553
        %v731 = vpop.permute.xlu0 %730
        %v733 = vmul.f32 %v727, %v731
        %v734 = vmul.f32 %v728, %v731
        %v735 = vadd.f32 %v667, %v733
        %v736 = vadd.f32 %v668, %v734
        %737 = vrot.lane.b32.xlu0 %v566, 124
        %v738 = vpop.permute.xlu0 %737
        %739 = vrot.lane.b32.xlu0 %v567, 124
        %v740 = vpop.permute.xlu0 %739
        %vm741 = vcmp.lt.s32.totalorder %v559, 124
        %v742 = vsel %vm741, %v738, %v740
        %v743 = vsel %vm741, %v740, %v738
        %s744 = scalar_lea.vmem [#allocation7], 160
        %v745 = vld [vmem:[%s744] sm:$0xff]
        %v746 = vld [vmem:[%s744 + $0x8] sm:$0xff]
        %v747 = vmul.f32 %v742, %v745
        %v748 = vmul.f32 %v743, %v746
        %749 = vset.pattern.permute.xlu0 9
        %750 = vperm.xlu0 %749, %v553
        %v751 = vpop.permute.xlu0 %750
        %v753 = vmul.f32 %v747, %v751
        %v754 = vmul.f32 %v748, %v751
        %v755 = vadd.f32 %v675, %v753
        %v756 = vadd.f32 %v676, %v754
        %757 = vrot.lane.b32.xlu0 %v566, 123
        %v758 = vpop.permute.xlu0 %757
        %759 = vrot.lane.b32.xlu0 %v567, 123
        %v760 = vpop.permute.xlu0 %759
        %vm761 = vcmp.lt.s32.totalorder %v559, 123
        %v762 = vsel %vm761, %v758, %v760
        %v763 = vsel %vm761, %v760, %v758
        %s764 = scalar_lea.vmem [#allocation7], 176
        %v765 = vld [vmem:[%s764] sm:$0xff]
        %v766 = vld [vmem:[%s764 + $0x8] sm:$0xff]
        %v767 = vmul.f32 %v762, %v765
        %v768 = vmul.f32 %v763, %v766
        %769 = vset.pattern.permute.xlu0 10
        %770 = vperm.xlu0 %769, %v553
        %v771 = vpop.permute.xlu0 %770
        %v773 = vmul.f32 %v767, %v771
        %v774 = vmul.f32 %v768, %v771
        %v775 = vadd.f32 %v695, %v773
        %v776 = vadd.f32 %v696, %v774
        %777 = vrot.lane.b32.xlu0 %v537, 64
        %v778 = vpop.permute.xlu0 %777
        %779 = vrot.lane.b32.xlu0 %v550, 64
        %v780 = vpop.permute.xlu0 %779
        %vm781 = vcmp.lt.s32.totalorder %v559, 64
        %v782 = vsel %vm781, %v778, %v780
        %v783 = vsel %vm781, %v780, %v778
        %s784 = scalar_lea.vmem [#allocation5], 48
        %v785 = vld [vmem:[%s784] sm:$0xff]
        %v786 = vld [vmem:[%s784 + $0x8] sm:$0xff]
        %v787 = vmul.f32 %v783, %v785
        %v788 = vmul.f32 %v782, %v786
        %789 = vrot.lane.b32.xlu0 %v787, 5
        %v790 = vpop.permute.xlu0 %789
        %791 = vrot.lane.b32.xlu0 %v788, 5
        %v792 = vpop.permute.xlu0 %791
        %v793 = vsel %vm572, %v790, %v792
        %v794 = vsel %vm572, %v792, %v790
        %v795 = vmul.f32 %v794, %v576
        %v796 = vmul.f32 %v793, %v577
        %797 = vset.pattern.permute.xlu0 11
        %798 = vperm.xlu0 %797, %v553
        %v799 = vpop.permute.xlu0 %798
        %v801 = vmul.f32 %v795, %v799
        %v802 = vmul.f32 %v796, %v799
        %v803 = vadd.f32 %v715, %v801
        %v804 = vadd.f32 %v716, %v802
        %805 = vrot.lane.b32.xlu0 %v787, 4
        %v806 = vpop.permute.xlu0 %805
        %807 = vrot.lane.b32.xlu0 %v788, 4
        %v808 = vpop.permute.xlu0 %807
        %v809 = vsel %vm593, %v806, %v808
        %v810 = vsel %vm593, %v808, %v806
        %v811 = vmul.f32 %v810, %v597
        %v812 = vmul.f32 %v809, %v598
        %813 = vset.pattern.permute.xlu0 12
        %814 = vperm.xlu0 %813, %v553
        %v815 = vpop.permute.xlu0 %814
        %v817 = vmul.f32 %v811, %v815
        %v818 = vmul.f32 %v812, %v815
        %v819 = vadd.f32 %v735, %v817
        %v820 = vadd.f32 %v736, %v818
        %821 = vrot.lane.b32.xlu0 %v787, 3
        %v822 = vpop.permute.xlu0 %821
        %823 = vrot.lane.b32.xlu0 %v788, 3
        %v824 = vpop.permute.xlu0 %823
        %v825 = vsel %vm613, %v822, %v824
        %v826 = vsel %vm613, %v824, %v822
        %v827 = vmul.f32 %v826, %v617
        %v828 = vmul.f32 %v825, %v618
        %829 = vset.pattern.permute.xlu0 13
        %830 = vperm.xlu0 %829, %v553
        %v831 = vpop.permute.xlu0 %830
        %v833 = vmul.f32 %v827, %v831
        %v834 = vmul.f32 %v828, %v831
        %v835 = vadd.f32 %v755, %v833
        %v836 = vadd.f32 %v756, %v834
        %837 = vrot.lane.b32.xlu0 %v787, 2
        %v838 = vpop.permute.xlu0 %837
        %839 = vrot.lane.b32.xlu0 %v788, 2
        %v840 = vpop.permute.xlu0 %839
        %v841 = vsel %vm633, %v838, %v840
        %v842 = vsel %vm633, %v840, %v838
        %v843 = vmul.f32 %v842, %v637
        %v844 = vmul.f32 %v841, %v638
        %845 = vset.pattern.permute.xlu0 14
        %846 = vperm.xlu0 %845, %v553
        %v847 = vpop.permute.xlu0 %846
        %v849 = vmul.f32 %v843, %v847
        %v850 = vmul.f32 %v844, %v847
        %v851 = vadd.f32 %v775, %v849
        %v852 = vadd.f32 %v776, %v850
        %853 = vrot.lane.b32.xlu0 %v787, 1
        %v854 = vpop.permute.xlu0 %853
        %855 = vrot.lane.b32.xlu0 %v788, 1
        %v856 = vpop.permute.xlu0 %855
        %v857 = vsel %vm653, %v854, %v856
        %v858 = vsel %vm653, %v856, %v854
        %v859 = vmul.f32 %v858, %v657
        %v860 = vmul.f32 %v857, %v658
        %861 = vset.pattern.permute.xlu0 15
        %862 = vperm.xlu0 %861, %v553
        %v863 = vpop.permute.xlu0 %862
        %v865 = vmul.f32 %v859, %v863
        %v866 = vmul.f32 %v860, %v863
        %v867 = vadd.f32 %v803, %v865
        %v868 = vadd.f32 %v804, %v866
        %869 = vset.pattern.permute.xlu0 16
        %870 = vperm.xlu0 %869, %v553
        %v871 = vpop.permute.xlu0 %870
        %v873 = vmul.f32 %v787, %v871
        %v874 = vmul.f32 %v788, %v871
        %v875 = vadd.f32 %v819, %v873
        %v876 = vadd.f32 %v820, %v874
        %877 = vrot.lane.b32.xlu0 %v787, 127
        %v878 = vpop.permute.xlu0 %877
        %879 = vrot.lane.b32.xlu0 %v788, 127
        %v880 = vpop.permute.xlu0 %879
        %v881 = vsel %vm681, %v878, %v880
        %v882 = vsel %vm681, %v880, %v878
        %v883 = vmul.f32 %v881, %v685
        %v884 = vmul.f32 %v882, %v686
        %885 = vset.pattern.permute.xlu0 17
        %886 = vperm.xlu0 %885, %v553
        %v887 = vpop.permute.xlu0 %886
        %v889 = vmul.f32 %v883, %v887
        %v890 = vmul.f32 %v884, %v887
        %v891 = vadd.f32 %v835, %v889
        %v892 = vadd.f32 %v836, %v890
        %893 = vrot.lane.b32.xlu0 %v787, 126
        %v894 = vpop.permute.xlu0 %893
        %895 = vrot.lane.b32.xlu0 %v788, 126
        %v896 = vpop.permute.xlu0 %895
        %v897 = vsel %vm701, %v894, %v896
        %v898 = vsel %vm701, %v896, %v894
        %v899 = vmul.f32 %v897, %v705
        %v900 = vmul.f32 %v898, %v706
        %901 = vset.pattern.permute.xlu0 18
        %902 = vperm.xlu0 %901, %v553
        %v903 = vpop.permute.xlu0 %902
        %v905 = vmul.f32 %v899, %v903
        %v906 = vmul.f32 %v900, %v903
        %v907 = vadd.f32 %v851, %v905
        %v908 = vadd.f32 %v852, %v906
        %909 = vrot.lane.b32.xlu0 %v787, 125
        %v910 = vpop.permute.xlu0 %909
        %911 = vrot.lane.b32.xlu0 %v788, 125
        %v912 = vpop.permute.xlu0 %911
        %v913 = vsel %vm721, %v910, %v912
        %v914 = vsel %vm721, %v912, %v910
        %v915 = vmul.f32 %v913, %v725
        %v916 = vmul.f32 %v914, %v726
        %917 = vset.pattern.permute.xlu0 19
        %918 = vperm.xlu0 %917, %v553
        %v919 = vpop.permute.xlu0 %918
        %v921 = vmul.f32 %v915, %v919
        %v922 = vmul.f32 %v916, %v919
        %v923 = vadd.f32 %v867, %v921
        %v924 = vadd.f32 %v868, %v922
        %925 = vrot.lane.b32.xlu0 %v787, 124
        %v926 = vpop.permute.xlu0 %925
        %927 = vrot.lane.b32.xlu0 %v788, 124
        %v928 = vpop.permute.xlu0 %927
        %v929 = vsel %vm741, %v926, %v928
        %v930 = vsel %vm741, %v928, %v926
        %v931 = vmul.f32 %v929, %v745
        %v932 = vmul.f32 %v930, %v746
        %933 = vset.pattern.permute.xlu0 20
        %934 = vperm.xlu0 %933, %v553
        %v935 = vpop.permute.xlu0 %934
        %v937 = vmul.f32 %v931, %v935
        %v938 = vmul.f32 %v932, %v935
        %v939 = vadd.f32 %v875, %v937
        %v940 = vadd.f32 %v876, %v938
        %941 = vrot.lane.b32.xlu0 %v787, 123
        %v942 = vpop.permute.xlu0 %941
        %943 = vrot.lane.b32.xlu0 %v788, 123
        %v944 = vpop.permute.xlu0 %943
        %v945 = vsel %vm761, %v942, %v944
        %v946 = vsel %vm761, %v944, %v942
        %v947 = vmul.f32 %v945, %v765
        %v948 = vmul.f32 %v946, %v766
        %949 = vset.pattern.permute.xlu0 21
        %950 = vperm.xlu0 %949, %v553
        %v951 = vpop.permute.xlu0 %950
        %v953 = vmul.f32 %v947, %v951
        %v954 = vmul.f32 %v948, %v951
        %v955 = vadd.f32 %v891, %v953
        %v956 = vadd.f32 %v892, %v954
        %957 = vrot.lane.b32.xlu0 %v537, 48
        %v958 = vpop.permute.xlu0 %957
        %959 = vrot.lane.b32.xlu0 %v550, 48
        %v960 = vpop.permute.xlu0 %959
        %vm961 = vcmp.lt.s32.totalorder %v559, 48
        %v962 = vsel %vm961, %v958, %v960
        %v963 = vsel %vm961, %v960, %v958
        %s964 = scalar_lea.vmem [#allocation5], 64
        %v965 = vld [vmem:[%s964] sm:$0xff]
        %v966 = vld [vmem:[%s964 + $0x8] sm:$0xff]
        %v967 = vmul.f32 %v963, %v965
        %v968 = vmul.f32 %v962, %v966
        %969 = vrot.lane.b32.xlu0 %v967, 5
        %v970 = vpop.permute.xlu0 %969
        %971 = vrot.lane.b32.xlu0 %v968, 5
        %v972 = vpop.permute.xlu0 %971
        %v973 = vsel %vm572, %v970, %v972
        %v974 = vsel %vm572, %v972, %v970
        %v975 = vmul.f32 %v974, %v576
        %v976 = vmul.f32 %v973, %v577
        %977 = vset.pattern.permute.xlu0 22
        %978 = vperm.xlu0 %977, %v553
        %v979 = vpop.permute.xlu0 %978
        %v981 = vmul.f32 %v975, %v979
        %v982 = vmul.f32 %v976, %v979
        %v983 = vadd.f32 %v907, %v981
        %v984 = vadd.f32 %v908, %v982
        %985 = vrot.lane.b32.xlu0 %v967, 4
        %v986 = vpop.permute.xlu0 %985
        %987 = vrot.lane.b32.xlu0 %v968, 4
        %v988 = vpop.permute.xlu0 %987
        %v989 = vsel %vm593, %v986, %v988
        %v990 = vsel %vm593, %v988, %v986
        %v991 = vmul.f32 %v990, %v597
        %v992 = vmul.f32 %v989, %v598
        %993 = vset.pattern.permute.xlu0 23
        %994 = vperm.xlu0 %993, %v553
        %v995 = vpop.permute.xlu0 %994
        %v997 = vmul.f32 %v991, %v995
        %v998 = vmul.f32 %v992, %v995
        %v999 = vadd.f32 %v923, %v997
        %v1000 = vadd.f32 %v924, %v998
        %1001 = vrot.lane.b32.xlu0 %v967, 3
        %v1002 = vpop.permute.xlu0 %1001
        %1003 = vrot.lane.b32.xlu0 %v968, 3
        %v1004 = vpop.permute.xlu0 %1003
        %v1005 = vsel %vm613, %v1002, %v1004
        %v1006 = vsel %vm613, %v1004, %v1002
        %v1007 = vmul.f32 %v1006, %v617
        %v1008 = vmul.f32 %v1005, %v618
        %1009 = vset.pattern.permute.xlu0 24
        %1010 = vperm.xlu0 %1009, %v553
        %v1011 = vpop.permute.xlu0 %1010
        %v1013 = vmul.f32 %v1007, %v1011
        %v1014 = vmul.f32 %v1008, %v1011
        %v1015 = vadd.f32 %v939, %v1013
        %v1016 = vadd.f32 %v940, %v1014
        %1017 = vrot.lane.b32.xlu0 %v967, 2
        %v1018 = vpop.permute.xlu0 %1017
        %1019 = vrot.lane.b32.xlu0 %v968, 2
        %v1020 = vpop.permute.xlu0 %1019
        %v1021 = vsel %vm633, %v1018, %v1020
        %v1022 = vsel %vm633, %v1020, %v1018
        %v1023 = vmul.f32 %v1022, %v637
        %v1024 = vmul.f32 %v1021, %v638
        %1025 = vset.pattern.permute.xlu0 25
        %1026 = vperm.xlu0 %1025, %v553
        %v1027 = vpop.permute.xlu0 %1026
        %v1029 = vmul.f32 %v1023, %v1027
        %v1030 = vmul.f32 %v1024, %v1027
        %v1031 = vadd.f32 %v955, %v1029
        %v1032 = vadd.f32 %v956, %v1030
        %1033 = vrot.lane.b32.xlu0 %v967, 1
        %v1034 = vpop.permute.xlu0 %1033
        %1035 = vrot.lane.b32.xlu0 %v968, 1
        %v1036 = vpop.permute.xlu0 %1035
        %v1037 = vsel %vm653, %v1034, %v1036
        %v1038 = vsel %vm653, %v1036, %v1034
        %v1039 = vmul.f32 %v1038, %v657
        %v1040 = vmul.f32 %v1037, %v658
        %1041 = vset.pattern.permute.xlu0 26
        %1042 = vperm.xlu0 %1041, %v553
        %v1043 = vpop.permute.xlu0 %1042
        %v1045 = vmul.f32 %v1039, %v1043
        %v1046 = vmul.f32 %v1040, %v1043
        %v1047 = vadd.f32 %v983, %v1045
        %v1048 = vadd.f32 %v984, %v1046
        %1049 = vset.pattern.permute.xlu0 27
        %1050 = vperm.xlu0 %1049, %v553
        %v1051 = vpop.permute.xlu0 %1050
        %v1053 = vmul.f32 %v967, %v1051
        %v1054 = vmul.f32 %v968, %v1051
        %v1055 = vadd.f32 %v999, %v1053
        %v1056 = vadd.f32 %v1000, %v1054
        %1057 = vrot.lane.b32.xlu0 %v967, 127
        %v1058 = vpop.permute.xlu0 %1057
        %1059 = vrot.lane.b32.xlu0 %v968, 127
        %v1060 = vpop.permute.xlu0 %1059
        %v1061 = vsel %vm681, %v1058, %v1060
        %v1062 = vsel %vm681, %v1060, %v1058
        %v1063 = vmul.f32 %v1061, %v685
        %v1064 = vmul.f32 %v1062, %v686
        %1065 = vset.pattern.permute.xlu0 28
        %1066 = vperm.xlu0 %1065, %v553
        %v1067 = vpop.permute.xlu0 %1066
        %v1069 = vmul.f32 %v1063, %v1067
        %v1070 = vmul.f32 %v1064, %v1067
        %v1071 = vadd.f32 %v1015, %v1069
        %v1072 = vadd.f32 %v1016, %v1070
        %1073 = vrot.lane.b32.xlu0 %v967, 126
        %v1074 = vpop.permute.xlu0 %1073
        %1075 = vrot.lane.b32.xlu0 %v968, 126
        %v1076 = vpop.permute.xlu0 %1075
        %v1077 = vsel %vm701, %v1074, %v1076
        %v1078 = vsel %vm701, %v1076, %v1074
        %v1079 = vmul.f32 %v1077, %v705
        %v1080 = vmul.f32 %v1078, %v706
        %1081 = vset.pattern.permute.xlu0 29
        %1082 = vperm.xlu0 %1081, %v553
        %v1083 = vpop.permute.xlu0 %1082
        %v1085 = vmul.f32 %v1079, %v1083
        %v1086 = vmul.f32 %v1080, %v1083
        %v1087 = vadd.f32 %v1031, %v1085
        %v1088 = vadd.f32 %v1032, %v1086
        %1089 = vrot.lane.b32.xlu0 %v967, 125
        %v1090 = vpop.permute.xlu0 %1089
        %1091 = vrot.lane.b32.xlu0 %v968, 125
        %v1092 = vpop.permute.xlu0 %1091
        %v1093 = vsel %vm721, %v1090, %v1092
        %v1094 = vsel %vm721, %v1092, %v1090
        %v1095 = vmul.f32 %v1093, %v725
        %v1096 = vmul.f32 %v1094, %v726
        %1097 = vset.pattern.permute.xlu0 30
        %1098 = vperm.xlu0 %1097, %v553
        %v1099 = vpop.permute.xlu0 %1098
        %v1101 = vmul.f32 %v1095, %v1099
        %v1102 = vmul.f32 %v1096, %v1099
        %v1103 = vadd.f32 %v1047, %v1101
        %v1104 = vadd.f32 %v1048, %v1102
        %1105 = vrot.lane.b32.xlu0 %v967, 124
        %v1106 = vpop.permute.xlu0 %1105
        %1107 = vrot.lane.b32.xlu0 %v968, 124
        %v1108 = vpop.permute.xlu0 %1107
        %v1109 = vsel %vm741, %v1106, %v1108
        %v1110 = vsel %vm741, %v1108, %v1106
        %v1111 = vmul.f32 %v1109, %v745
        %v1112 = vmul.f32 %v1110, %v746
        %1113 = vset.pattern.permute.xlu0 31
        %1114 = vperm.xlu0 %1113, %v553
        %v1115 = vpop.permute.xlu0 %1114
        %v1117 = vmul.f32 %v1111, %v1115
        %v1118 = vmul.f32 %v1112, %v1115
        %v1119 = vadd.f32 %v1055, %v1117
        %v1120 = vadd.f32 %v1056, %v1118
        %1121 = vrot.lane.b32.xlu0 %v967, 123
        %v1122 = vpop.permute.xlu0 %1121
        %1123 = vrot.lane.b32.xlu0 %v968, 123
        %v1124 = vpop.permute.xlu0 %1123
        %v1125 = vsel %vm761, %v1122, %v1124
        %v1126 = vsel %vm761, %v1124, %v1122
        %v1127 = vmul.f32 %v1125, %v765
        %v1128 = vmul.f32 %v1126, %v766
        %1129 = vset.pattern.permute.xlu0 32
        %1130 = vperm.xlu0 %1129, %v553
        %v1131 = vpop.permute.xlu0 %1130
        %v1133 = vmul.f32 %v1127, %v1131
        %v1134 = vmul.f32 %v1128, %v1131
        %v1135 = vadd.f32 %v1071, %v1133
        %v1136 = vadd.f32 %v1072, %v1134
        %1137 = vrot.lane.b32.xlu0 %v537, 32
        %v1138 = vpop.permute.xlu0 %1137
        %1139 = vrot.lane.b32.xlu0 %v550, 32
        %v1140 = vpop.permute.xlu0 %1139
        %vm1141 = vcmp.lt.s32.totalorder %v559, 32
        %v1142 = vsel %vm1141, %v1138, %v1140
        %v1143 = vsel %vm1141, %v1140, %v1138
        %s1144 = scalar_lea.vmem [#allocation5], 80
        %v1145 = vld [vmem:[%s1144] sm:$0xff]
        %v1146 = vld [vmem:[%s1144 + $0x8] sm:$0xff]
        %v1147 = vmul.f32 %v1143, %v1145
        %v1148 = vmul.f32 %v1142, %v1146
        %1149 = vrot.lane.b32.xlu0 %v1147, 5
        %v1150 = vpop.permute.xlu0 %1149
        %1151 = vrot.lane.b32.xlu0 %v1148, 5
        %v1152 = vpop.permute.xlu0 %1151
        %v1153 = vsel %vm572, %v1150, %v1152
        %v1154 = vsel %vm572, %v1152, %v1150
        %v1155 = vmul.f32 %v1154, %v576
        %v1156 = vmul.f32 %v1153, %v577
        %1157 = vset.pattern.permute.xlu0 33
        %1158 = vperm.xlu0 %1157, %v553
        %v1159 = vpop.permute.xlu0 %1158
        %v1161 = vmul.f32 %v1155, %v1159
        %v1162 = vmul.f32 %v1156, %v1159
        %v1163 = vadd.f32 %v1087, %v1161
        %v1164 = vadd.f32 %v1088, %v1162
        %1165 = vrot.lane.b32.xlu0 %v1147, 4
        %v1166 = vpop.permute.xlu0 %1165
        %1167 = vrot.lane.b32.xlu0 %v1148, 4
        %v1168 = vpop.permute.xlu0 %1167
        %v1169 = vsel %vm593, %v1166, %v1168
        %v1170 = vsel %vm593, %v1168, %v1166
        %v1171 = vmul.f32 %v1170, %v597
        %v1172 = vmul.f32 %v1169, %v598
        %1173 = vset.pattern.permute.xlu0 34
        %1174 = vperm.xlu0 %1173, %v553
        %v1175 = vpop.permute.xlu0 %1174
        %v1177 = vmul.f32 %v1171, %v1175
        %v1178 = vmul.f32 %v1172, %v1175
        %v1179 = vadd.f32 %v1103, %v1177
        %v1180 = vadd.f32 %v1104, %v1178
        %1181 = vrot.lane.b32.xlu0 %v1147, 3
        %v1182 = vpop.permute.xlu0 %1181
        %1183 = vrot.lane.b32.xlu0 %v1148, 3
        %v1184 = vpop.permute.xlu0 %1183
        %v1185 = vsel %vm613, %v1182, %v1184
        %v1186 = vsel %vm613, %v1184, %v1182
        %v1187 = vmul.f32 %v1186, %v617
        %v1188 = vmul.f32 %v1185, %v618
        %1189 = vset.pattern.permute.xlu0 35
        %1190 = vperm.xlu0 %1189, %v553
        %v1191 = vpop.permute.xlu0 %1190
        %v1193 = vmul.f32 %v1187, %v1191
        %v1194 = vmul.f32 %v1188, %v1191
        %v1195 = vadd.f32 %v1119, %v1193
        %v1196 = vadd.f32 %v1120, %v1194
        %1197 = vrot.lane.b32.xlu0 %v1147, 2
        %v1198 = vpop.permute.xlu0 %1197
        %1199 = vrot.lane.b32.xlu0 %v1148, 2
        %v1200 = vpop.permute.xlu0 %1199
        %v1201 = vsel %vm633, %v1198, %v1200
        %v1202 = vsel %vm633, %v1200, %v1198
        %v1203 = vmul.f32 %v1202, %v637
        %v1204 = vmul.f32 %v1201, %v638
        %1205 = vset.pattern.permute.xlu0 36
        %1206 = vperm.xlu0 %1205, %v553
        %v1207 = vpop.permute.xlu0 %1206
        %v1209 = vmul.f32 %v1203, %v1207
        %v1210 = vmul.f32 %v1204, %v1207
        %v1211 = vadd.f32 %v1135, %v1209
        %v1212 = vadd.f32 %v1136, %v1210
        %1213 = vrot.lane.b32.xlu0 %v1147, 1
        %v1214 = vpop.permute.xlu0 %1213
        %1215 = vrot.lane.b32.xlu0 %v1148, 1
        %v1216 = vpop.permute.xlu0 %1215
        %v1217 = vsel %vm653, %v1214, %v1216
        %v1218 = vsel %vm653, %v1216, %v1214
        %v1219 = vmul.f32 %v1218, %v657
        %v1220 = vmul.f32 %v1217, %v658
        %1221 = vset.pattern.permute.xlu0 37
        %1222 = vperm.xlu0 %1221, %v553
        %v1223 = vpop.permute.xlu0 %1222
        %v1225 = vmul.f32 %v1219, %v1223
        %v1226 = vmul.f32 %v1220, %v1223
        %v1227 = vadd.f32 %v1163, %v1225
        %v1228 = vadd.f32 %v1164, %v1226
        %1229 = vset.pattern.permute.xlu0 38
        %1230 = vperm.xlu0 %1229, %v553
        %v1231 = vpop.permute.xlu0 %1230
        %v1233 = vmul.f32 %v1147, %v1231
        %v1234 = vmul.f32 %v1148, %v1231
        %v1235 = vadd.f32 %v1179, %v1233
        %v1236 = vadd.f32 %v1180, %v1234
        %1237 = vrot.lane.b32.xlu0 %v1147, 127
        %v1238 = vpop.permute.xlu0 %1237
        %1239 = vrot.lane.b32.xlu0 %v1148, 127
        %v1240 = vpop.permute.xlu0 %1239
        %v1241 = vsel %vm681, %v1238, %v1240
        %v1242 = vsel %vm681, %v1240, %v1238
        %v1243 = vmul.f32 %v1241, %v685
        %v1244 = vmul.f32 %v1242, %v686
        %1245 = vset.pattern.permute.xlu0 39
        %1246 = vperm.xlu0 %1245, %v553
        %v1247 = vpop.permute.xlu0 %1246
        %v1249 = vmul.f32 %v1243, %v1247
        %v1250 = vmul.f32 %v1244, %v1247
        %v1251 = vadd.f32 %v1195, %v1249
        %v1252 = vadd.f32 %v1196, %v1250
        %1253 = vrot.lane.b32.xlu0 %v1147, 126
        %v1254 = vpop.permute.xlu0 %1253
        %1255 = vrot.lane.b32.xlu0 %v1148, 126
        %v1256 = vpop.permute.xlu0 %1255
        %v1257 = vsel %vm701, %v1254, %v1256
        %v1258 = vsel %vm701, %v1256, %v1254
        %v1259 = vmul.f32 %v1257, %v705
        %v1260 = vmul.f32 %v1258, %v706
        %1261 = vset.pattern.permute.xlu0 40
        %1262 = vperm.xlu0 %1261, %v553
        %v1263 = vpop.permute.xlu0 %1262
        %v1265 = vmul.f32 %v1259, %v1263
        %v1266 = vmul.f32 %v1260, %v1263
        %v1267 = vadd.f32 %v1211, %v1265
        %v1268 = vadd.f32 %v1212, %v1266
        %1269 = vrot.lane.b32.xlu0 %v1147, 125
        %v1270 = vpop.permute.xlu0 %1269
        %1271 = vrot.lane.b32.xlu0 %v1148, 125
        %v1272 = vpop.permute.xlu0 %1271
        %v1273 = vsel %vm721, %v1270, %v1272
        %v1274 = vsel %vm721, %v1272, %v1270
        %v1275 = vmul.f32 %v1273, %v725
        %v1276 = vmul.f32 %v1274, %v726
        %1277 = vset.pattern.permute.xlu0 41
        %1278 = vperm.xlu0 %1277, %v553
        %v1279 = vpop.permute.xlu0 %1278
        %v1281 = vmul.f32 %v1275, %v1279
        %v1282 = vmul.f32 %v1276, %v1279
        %v1283 = vadd.f32 %v1227, %v1281
        %v1284 = vadd.f32 %v1228, %v1282
        %1285 = vrot.lane.b32.xlu0 %v1147, 124
        %v1286 = vpop.permute.xlu0 %1285
        %1287 = vrot.lane.b32.xlu0 %v1148, 124
        %v1288 = vpop.permute.xlu0 %1287
        %v1289 = vsel %vm741, %v1286, %v1288
        %v1290 = vsel %vm741, %v1288, %v1286
        %v1291 = vmul.f32 %v1289, %v745
        %v1292 = vmul.f32 %v1290, %v746
        %1293 = vset.pattern.permute.xlu0 42
        %1294 = vperm.xlu0 %1293, %v553
        %v1295 = vpop.permute.xlu0 %1294
        %v1297 = vmul.f32 %v1291, %v1295
        %v1298 = vmul.f32 %v1292, %v1295
        %v1299 = vadd.f32 %v1235, %v1297
        %v1300 = vadd.f32 %v1236, %v1298
        %1301 = vrot.lane.b32.xlu0 %v1147, 123
        %v1302 = vpop.permute.xlu0 %1301
        %1303 = vrot.lane.b32.xlu0 %v1148, 123
        %v1304 = vpop.permute.xlu0 %1303
        %v1305 = vsel %vm761, %v1302, %v1304
        %v1306 = vsel %vm761, %v1304, %v1302
        %v1307 = vmul.f32 %v1305, %v765
        %v1308 = vmul.f32 %v1306, %v766
        %1309 = vset.pattern.permute.xlu0 43
        %1310 = vperm.xlu0 %1309, %v553
        %v1311 = vpop.permute.xlu0 %1310
        %v1313 = vmul.f32 %v1307, %v1311
        %v1314 = vmul.f32 %v1308, %v1311
        %v1315 = vadd.f32 %v1251, %v1313
        %v1316 = vadd.f32 %v1252, %v1314
        %1317 = vrot.lane.b32.xlu0 %v537, 16
        %v1318 = vpop.permute.xlu0 %1317
        %1319 = vrot.lane.b32.xlu0 %v550, 16
        %v1320 = vpop.permute.xlu0 %1319
        %vm1321 = vcmp.lt.s32.totalorder %v559, 16
        %v1322 = vsel %vm1321, %v1318, %v1320
        %v1323 = vsel %vm1321, %v1320, %v1318
        %s1324 = scalar_lea.vmem [#allocation5], 96
        %v1325 = vld [vmem:[%s1324] sm:$0xff]
        %v1326 = vld [vmem:[%s1324 + $0x8] sm:$0xff]
        %v1327 = vmul.f32 %v1323, %v1325
        %v1328 = vmul.f32 %v1322, %v1326
        %1329 = vrot.lane.b32.xlu0 %v1327, 5
        %v1330 = vpop.permute.xlu0 %1329
        %1331 = vrot.lane.b32.xlu0 %v1328, 5
        %v1332 = vpop.permute.xlu0 %1331
        %v1333 = vsel %vm572, %v1330, %v1332
        %v1334 = vsel %vm572, %v1332, %v1330
        %v1335 = vmul.f32 %v1334, %v576
        %v1336 = vmul.f32 %v1333, %v577
        %1337 = vset.pattern.permute.xlu0 44
        %1338 = vperm.xlu0 %1337, %v553
        %v1339 = vpop.permute.xlu0 %1338
        %v1341 = vmul.f32 %v1335, %v1339
        %v1342 = vmul.f32 %v1336, %v1339
        %v1343 = vadd.f32 %v1267, %v1341
        %v1344 = vadd.f32 %v1268, %v1342
        %1345 = vrot.lane.b32.xlu0 %v1327, 4
        %v1346 = vpop.permute.xlu0 %1345
        %1347 = vrot.lane.b32.xlu0 %v1328, 4
        %v1348 = vpop.permute.xlu0 %1347
        %v1349 = vsel %vm593, %v1346, %v1348
        %v1350 = vsel %vm593, %v1348, %v1346
        %v1351 = vmul.f32 %v1350, %v597
        %v1352 = vmul.f32 %v1349, %v598
        %1353 = vset.pattern.permute.xlu0 45
        %1354 = vperm.xlu0 %1353, %v553
        %v1355 = vpop.permute.xlu0 %1354
        %v1357 = vmul.f32 %v1351, %v1355
        %v1358 = vmul.f32 %v1352, %v1355
        %v1359 = vadd.f32 %v1283, %v1357
        %v1360 = vadd.f32 %v1284, %v1358
        %1361 = vrot.lane.b32.xlu0 %v1327, 3
        %v1362 = vpop.permute.xlu0 %1361
        %1363 = vrot.lane.b32.xlu0 %v1328, 3
        %v1364 = vpop.permute.xlu0 %1363
        %v1365 = vsel %vm613, %v1362, %v1364
        %v1366 = vsel %vm613, %v1364, %v1362
        %v1367 = vmul.f32 %v1366, %v617
        %v1368 = vmul.f32 %v1365, %v618
        %1369 = vset.pattern.permute.xlu0 46
        %1370 = vperm.xlu0 %1369, %v553
        %v1371 = vpop.permute.xlu0 %1370
        %v1373 = vmul.f32 %v1367, %v1371
        %v1374 = vmul.f32 %v1368, %v1371
        %v1375 = vadd.f32 %v1299, %v1373
        %v1376 = vadd.f32 %v1300, %v1374
        %1377 = vrot.lane.b32.xlu0 %v1327, 2
        %v1378 = vpop.permute.xlu0 %1377
        %1379 = vrot.lane.b32.xlu0 %v1328, 2
        %v1380 = vpop.permute.xlu0 %1379
        %v1381 = vsel %vm633, %v1378, %v1380
        %v1382 = vsel %vm633, %v1380, %v1378
        %v1383 = vmul.f32 %v1382, %v637
        %v1384 = vmul.f32 %v1381, %v638
        %1385 = vset.pattern.permute.xlu0 47
        %1386 = vperm.xlu0 %1385, %v553
        %v1387 = vpop.permute.xlu0 %1386
        %v1389 = vmul.f32 %v1383, %v1387
        %v1390 = vmul.f32 %v1384, %v1387
        %v1391 = vadd.f32 %v1315, %v1389
        %v1392 = vadd.f32 %v1316, %v1390
        %1393 = vrot.lane.b32.xlu0 %v1327, 1
        %v1394 = vpop.permute.xlu0 %1393
        %1395 = vrot.lane.b32.xlu0 %v1328, 1
        %v1396 = vpop.permute.xlu0 %1395
        %v1397 = vsel %vm653, %v1394, %v1396
        %v1398 = vsel %vm653, %v1396, %v1394
        %v1399 = vmul.f32 %v1398, %v657
        %v1400 = vmul.f32 %v1397, %v658
        %1401 = vset.pattern.permute.xlu0 48
        %1402 = vperm.xlu0 %1401, %v553
        %v1403 = vpop.permute.xlu0 %1402
        %v1405 = vmul.f32 %v1399, %v1403
        %v1406 = vmul.f32 %v1400, %v1403
        %v1407 = vadd.f32 %v1343, %v1405
        %v1408 = vadd.f32 %v1344, %v1406
        %1409 = vset.pattern.permute.xlu0 49
        %1410 = vperm.xlu0 %1409, %v553
        %v1411 = vpop.permute.xlu0 %1410
        %v1413 = vmul.f32 %v1327, %v1411
        %v1414 = vmul.f32 %v1328, %v1411
        %v1415 = vadd.f32 %v1359, %v1413
        %v1416 = vadd.f32 %v1360, %v1414
        %1417 = vrot.lane.b32.xlu0 %v1327, 127
        %v1418 = vpop.permute.xlu0 %1417
        %1419 = vrot.lane.b32.xlu0 %v1328, 127
        %v1420 = vpop.permute.xlu0 %1419
        %v1421 = vsel %vm681, %v1418, %v1420
        %v1422 = vsel %vm681, %v1420, %v1418
        %v1423 = vmul.f32 %v1421, %v685
        %v1424 = vmul.f32 %v1422, %v686
        %1425 = vset.pattern.permute.xlu0 50
        %1426 = vperm.xlu0 %1425, %v553
        %v1427 = vpop.permute.xlu0 %1426
        %v1429 = vmul.f32 %v1423, %v1427
        %v1430 = vmul.f32 %v1424, %v1427
        %v1431 = vadd.f32 %v1375, %v1429
        %v1432 = vadd.f32 %v1376, %v1430
        %1433 = vrot.lane.b32.xlu0 %v1327, 126
        %v1434 = vpop.permute.xlu0 %1433
        %1435 = vrot.lane.b32.xlu0 %v1328, 126
        %v1436 = vpop.permute.xlu0 %1435
        %v1437 = vsel %vm701, %v1434, %v1436
        %v1438 = vsel %vm701, %v1436, %v1434
        %v1439 = vmul.f32 %v1437, %v705
        %v1440 = vmul.f32 %v1438, %v706
        %1441 = vset.pattern.permute.xlu0 51
        %1442 = vperm.xlu0 %1441, %v553
        %v1443 = vpop.permute.xlu0 %1442
        %v1445 = vmul.f32 %v1439, %v1443
        %v1446 = vmul.f32 %v1440, %v1443
        %v1447 = vadd.f32 %v1391, %v1445
        %v1448 = vadd.f32 %v1392, %v1446
        %1449 = vrot.lane.b32.xlu0 %v1327, 125
        %v1450 = vpop.permute.xlu0 %1449
        %1451 = vrot.lane.b32.xlu0 %v1328, 125
        %v1452 = vpop.permute.xlu0 %1451
        %v1453 = vsel %vm721, %v1450, %v1452
        %v1454 = vsel %vm721, %v1452, %v1450
        %v1455 = vmul.f32 %v1453, %v725
        %v1456 = vmul.f32 %v1454, %v726
        %1457 = vset.pattern.permute.xlu0 52
        %1458 = vperm.xlu0 %1457, %v553
        %v1459 = vpop.permute.xlu0 %1458
        %v1461 = vmul.f32 %v1455, %v1459
        %v1462 = vmul.f32 %v1456, %v1459
        %v1463 = vadd.f32 %v1407, %v1461
        %v1464 = vadd.f32 %v1408, %v1462
        %1465 = vrot.lane.b32.xlu0 %v1327, 124
        %v1466 = vpop.permute.xlu0 %1465
        %1467 = vrot.lane.b32.xlu0 %v1328, 124
        %v1468 = vpop.permute.xlu0 %1467
        %v1469 = vsel %vm741, %v1466, %v1468
        %v1470 = vsel %vm741, %v1468, %v1466
        %v1471 = vmul.f32 %v1469, %v745
        %v1472 = vmul.f32 %v1470, %v746
        %1473 = vset.pattern.permute.xlu0 53
        %1474 = vperm.xlu0 %1473, %v553
        %v1475 = vpop.permute.xlu0 %1474
        %v1477 = vmul.f32 %v1471, %v1475
        %v1478 = vmul.f32 %v1472, %v1475
        %v1479 = vadd.f32 %v1415, %v1477
        %v1480 = vadd.f32 %v1416, %v1478
        %1481 = vrot.lane.b32.xlu0 %v1327, 123
        %v1482 = vpop.permute.xlu0 %1481
        %1483 = vrot.lane.b32.xlu0 %v1328, 123
        %v1484 = vpop.permute.xlu0 %1483
        %v1485 = vsel %vm761, %v1482, %v1484
        %v1486 = vsel %vm761, %v1484, %v1482
        %v1487 = vmul.f32 %v1485, %v765
        %v1488 = vmul.f32 %v1486, %v766
        %1489 = vset.pattern.permute.xlu0 54
        %1490 = vperm.xlu0 %1489, %v553
        %v1491 = vpop.permute.xlu0 %1490
        %v1493 = vmul.f32 %v1487, %v1491
        %v1494 = vmul.f32 %v1488, %v1491
        %v1495 = vadd.f32 %v1431, %v1493
        %v1496 = vadd.f32 %v1432, %v1494
        %1497 = vrot.lane.b32.xlu0 %v537, 5
        %v1498 = vpop.permute.xlu0 %1497
        %1499 = vrot.lane.b32.xlu0 %v550, 5
        %v1500 = vpop.permute.xlu0 %1499
        %v1501 = vsel %vm572, %v1498, %v1500
        %v1502 = vsel %vm572, %v1500, %v1498
        %v1503 = vmul.f32 %v1502, %v576
        %v1504 = vmul.f32 %v1501, %v577
        %1505 = vset.pattern.permute.xlu0 55
        %1506 = vperm.xlu0 %1505, %v553
        %v1507 = vpop.permute.xlu0 %1506
        %v1509 = vmul.f32 %v1503, %v1507
        %v1510 = vmul.f32 %v1504, %v1507
        %v1511 = vadd.f32 %v1447, %v1509
        %v1512 = vadd.f32 %v1448, %v1510
        %1513 = vrot.lane.b32.xlu0 %v537, 4
        %v1514 = vpop.permute.xlu0 %1513
        %1515 = vrot.lane.b32.xlu0 %v550, 4
        %v1516 = vpop.permute.xlu0 %1515
        %v1517 = vsel %vm593, %v1514, %v1516
        %v1518 = vsel %vm593, %v1516, %v1514
        %v1519 = vmul.f32 %v1518, %v597
        %v1520 = vmul.f32 %v1517, %v598
        %1521 = vset.pattern.permute.xlu0 56
        %1522 = vperm.xlu0 %1521, %v553
        %v1523 = vpop.permute.xlu0 %1522
        %v1525 = vmul.f32 %v1519, %v1523
        %v1526 = vmul.f32 %v1520, %v1523
        %v1527 = vadd.f32 %v1463, %v1525
        %v1528 = vadd.f32 %v1464, %v1526
        %1529 = vrot.lane.b32.xlu0 %v537, 3
        %v1530 = vpop.permute.xlu0 %1529
        %1531 = vrot.lane.b32.xlu0 %v550, 3
        %v1532 = vpop.permute.xlu0 %1531
        %v1533 = vsel %vm613, %v1530, %v1532
        %v1534 = vsel %vm613, %v1532, %v1530
        %v1535 = vmul.f32 %v1534, %v617
        %v1536 = vmul.f32 %v1533, %v618
        %1537 = vset.pattern.permute.xlu0 57
        %1538 = vperm.xlu0 %1537, %v553
        %v1539 = vpop.permute.xlu0 %1538
        %v1541 = vmul.f32 %v1535, %v1539
        %v1542 = vmul.f32 %v1536, %v1539
        %v1543 = vadd.f32 %v1479, %v1541
        %v1544 = vadd.f32 %v1480, %v1542
        %1545 = vrot.lane.b32.xlu0 %v537, 2
        %v1546 = vpop.permute.xlu0 %1545
        %1547 = vrot.lane.b32.xlu0 %v550, 2
        %v1548 = vpop.permute.xlu0 %1547
        %v1549 = vsel %vm633, %v1546, %v1548
        %v1550 = vsel %vm633, %v1548, %v1546
        %v1551 = vmul.f32 %v1550, %v637
        %v1552 = vmul.f32 %v1549, %v638
        %1553 = vset.pattern.permute.xlu0 58
        %1554 = vperm.xlu0 %1553, %v553
        %v1555 = vpop.permute.xlu0 %1554
        %v1557 = vmul.f32 %v1551, %v1555
        %v1558 = vmul.f32 %v1552, %v1555
        %v1559 = vadd.f32 %v1495, %v1557
        %v1560 = vadd.f32 %v1496, %v1558
        %1561 = vrot.lane.b32.xlu0 %v537, 1
        %v1562 = vpop.permute.xlu0 %1561
        %1563 = vrot.lane.b32.xlu0 %v550, 1
        %v1564 = vpop.permute.xlu0 %1563
        %v1565 = vsel %vm653, %v1562, %v1564
        %v1566 = vsel %vm653, %v1564, %v1562
        %v1567 = vmul.f32 %v1566, %v657
        %v1568 = vmul.f32 %v1565, %v658
        %1569 = vset.pattern.permute.xlu0 59
        %1570 = vperm.xlu0 %1569, %v553
        %v1571 = vpop.permute.xlu0 %1570
        %v1573 = vmul.f32 %v1567, %v1571
        %v1574 = vmul.f32 %v1568, %v1571
        %v1575 = vadd.f32 %v1511, %v1573
        %v1576 = vadd.f32 %v1512, %v1574
        %1577 = vset.pattern.permute.xlu0 60
        %1578 = vperm.xlu0 %1577, %v553
        %v1579 = vpop.permute.xlu0 %1578
        %v1581 = vmul.f32 %v537, %v1579
        %v1582 = vmul.f32 %v550, %v1579
        %v1583 = vadd.f32 %v1527, %v1581
        %v1584 = vadd.f32 %v1528, %v1582
        %1585 = vrot.lane.b32.xlu0 %v537, 127
        %v1586 = vpop.permute.xlu0 %1585
        %1587 = vrot.lane.b32.xlu0 %v550, 127
        %v1588 = vpop.permute.xlu0 %1587
        %v1589 = vsel %vm681, %v1586, %v1588
        %v1590 = vsel %vm681, %v1588, %v1586
        %v1591 = vmul.f32 %v1589, %v685
        %v1592 = vmul.f32 %v1590, %v686
        %1593 = vset.pattern.permute.xlu0 61
        %1594 = vperm.xlu0 %1593, %v553
        %v1595 = vpop.permute.xlu0 %1594
        %v1597 = vmul.f32 %v1591, %v1595
        %v1598 = vmul.f32 %v1592, %v1595
        %v1599 = vadd.f32 %v1543, %v1597
        %v1600 = vadd.f32 %v1544, %v1598
        %1601 = vrot.lane.b32.xlu0 %v537, 126
        %v1602 = vpop.permute.xlu0 %1601
        %1603 = vrot.lane.b32.xlu0 %v550, 126
        %v1604 = vpop.permute.xlu0 %1603
        %v1605 = vsel %vm701, %v1602, %v1604
        %v1606 = vsel %vm701, %v1604, %v1602
        %v1607 = vmul.f32 %v1605, %v705
        %v1608 = vmul.f32 %v1606, %v706
        %1609 = vset.pattern.permute.xlu0 62
        %1610 = vperm.xlu0 %1609, %v553
        %v1611 = vpop.permute.xlu0 %1610
        %v1613 = vmul.f32 %v1607, %v1611
        %v1614 = vmul.f32 %v1608, %v1611
        %v1615 = vadd.f32 %v1559, %v1613
        %v1616 = vadd.f32 %v1560, %v1614
        %1617 = vrot.lane.b32.xlu0 %v537, 125
        %v1618 = vpop.permute.xlu0 %1617
        %1619 = vrot.lane.b32.xlu0 %v550, 125
        %v1620 = vpop.permute.xlu0 %1619
        %v1621 = vsel %vm721, %v1618, %v1620
        %v1622 = vsel %vm721, %v1620, %v1618
        %v1623 = vmul.f32 %v1621, %v725
        %v1624 = vmul.f32 %v1622, %v726
        %1625 = vset.pattern.permute.xlu0 63
        %1626 = vperm.xlu0 %1625, %v553
        %v1627 = vpop.permute.xlu0 %1626
        %v1629 = vmul.f32 %v1623, %v1627
        %v1630 = vmul.f32 %v1624, %v1627
        %v1631 = vadd.f32 %v1575, %v1629
        %v1632 = vadd.f32 %v1576, %v1630
        %1633 = vrot.lane.b32.xlu0 %v537, 124
        %v1634 = vpop.permute.xlu0 %1633
        %1635 = vrot.lane.b32.xlu0 %v550, 124
        %v1636 = vpop.permute.xlu0 %1635
        %v1637 = vsel %vm741, %v1634, %v1636
        %v1638 = vsel %vm741, %v1636, %v1634
        %v1639 = vmul.f32 %v1637, %v745
        %v1640 = vmul.f32 %v1638, %v746
        %1641 = vset.pattern.permute.xlu0 64
        %1642 = vperm.xlu0 %1641, %v553
        %v1643 = vpop.permute.xlu0 %1642
        %v1645 = vmul.f32 %v1639, %v1643
        %v1646 = vmul.f32 %v1640, %v1643
        %v1647 = vadd.f32 %v1583, %v1645
        %v1648 = vadd.f32 %v1584, %v1646
        %1649 = vrot.lane.b32.xlu0 %v537, 123
        %v1650 = vpop.permute.xlu0 %1649
        %1651 = vrot.lane.b32.xlu0 %v550, 123
        %v1652 = vpop.permute.xlu0 %1651
        %v1653 = vsel %vm761, %v1650, %v1652
        %v1654 = vsel %vm761, %v1652, %v1650
        %v1655 = vmul.f32 %v1653, %v765
        %v1656 = vmul.f32 %v1654, %v766
        %1657 = vset.pattern.permute.xlu0 65
        %1658 = vperm.xlu0 %1657, %v553
        %v1659 = vpop.permute.xlu0 %1658
        %v1661 = vmul.f32 %v1655, %v1659
        %v1662 = vmul.f32 %v1656, %v1659
        %v1663 = vadd.f32 %v1599, %v1661
        %v1664 = vadd.f32 %v1600, %v1662
        %1665 = vrot.lane.b32.xlu0 %v537, 112
        %v1666 = vpop.permute.xlu0 %1665
        %1667 = vrot.lane.b32.xlu0 %v550, 112
        %v1668 = vpop.permute.xlu0 %1667
        %vm1669 = vcmp.lt.s32.totalorder %v559, 112
        %v1670 = vsel %vm1669, %v1666, %v1668
        %v1671 = vsel %vm1669, %v1668, %v1666
        %s1672 = scalar_lea.vmem [#allocation5], 112
        %v1673 = vld [vmem:[%s1672] sm:$0xff]
        %v1674 = vld [vmem:[%s1672 + $0x8] sm:$0xff]
        %v1675 = vmul.f32 %v1670, %v1673
        %v1676 = vmul.f32 %v1671, %v1674
        %1677 = vrot.lane.b32.xlu0 %v1675, 5
        %v1678 = vpop.permute.xlu0 %1677
        %1679 = vrot.lane.b32.xlu0 %v1676, 5
        %v1680 = vpop.permute.xlu0 %1679
        %v1681 = vsel %vm572, %v1678, %v1680
        %v1682 = vsel %vm572, %v1680, %v1678
        %v1683 = vmul.f32 %v1682, %v576
        %v1684 = vmul.f32 %v1681, %v577
        %1685 = vset.pattern.permute.xlu0 66
        %1686 = vperm.xlu0 %1685, %v553
        %v1687 = vpop.permute.xlu0 %1686
        %v1689 = vmul.f32 %v1683, %v1687
        %v1690 = vmul.f32 %v1684, %v1687
        %v1691 = vadd.f32 %v1615, %v1689
        %v1692 = vadd.f32 %v1616, %v1690
        %1693 = vrot.lane.b32.xlu0 %v1675, 4
        %v1694 = vpop.permute.xlu0 %1693
        %1695 = vrot.lane.b32.xlu0 %v1676, 4
        %v1696 = vpop.permute.xlu0 %1695
        %v1697 = vsel %vm593, %v1694, %v1696
        %v1698 = vsel %vm593, %v1696, %v1694
        %v1699 = vmul.f32 %v1698, %v597
        %v1700 = vmul.f32 %v1697, %v598
        %1701 = vset.pattern.permute.xlu0 67
        %1702 = vperm.xlu0 %1701, %v553
        %v1703 = vpop.permute.xlu0 %1702
        %v1705 = vmul.f32 %v1699, %v1703
        %v1706 = vmul.f32 %v1700, %v1703
        %v1707 = vadd.f32 %v1631, %v1705
        %v1708 = vadd.f32 %v1632, %v1706
        %1709 = vrot.lane.b32.xlu0 %v1675, 3
        %v1710 = vpop.permute.xlu0 %1709
        %1711 = vrot.lane.b32.xlu0 %v1676, 3
        %v1712 = vpop.permute.xlu0 %1711
        %v1713 = vsel %vm613, %v1710, %v1712
        %v1714 = vsel %vm613, %v1712, %v1710
        %v1715 = vmul.f32 %v1714, %v617
        %v1716 = vmul.f32 %v1713, %v618
        %1717 = vset.pattern.permute.xlu0 68
        %1718 = vperm.xlu0 %1717, %v553
        %v1719 = vpop.permute.xlu0 %1718
        %v1721 = vmul.f32 %v1715, %v1719
        %v1722 = vmul.f32 %v1716, %v1719
        %v1723 = vadd.f32 %v1647, %v1721
        %v1724 = vadd.f32 %v1648, %v1722
        %1725 = vrot.lane.b32.xlu0 %v1675, 2
        %v1726 = vpop.permute.xlu0 %1725
        %1727 = vrot.lane.b32.xlu0 %v1676, 2
        %v1728 = vpop.permute.xlu0 %1727
        %v1729 = vsel %vm633, %v1726, %v1728
        %v1730 = vsel %vm633, %v1728, %v1726
        %v1731 = vmul.f32 %v1730, %v637
        %v1732 = vmul.f32 %v1729, %v638
        %1733 = vset.pattern.permute.xlu0 69
        %1734 = vperm.xlu0 %1733, %v553
        %v1735 = vpop.permute.xlu0 %1734
        %v1737 = vmul.f32 %v1731, %v1735
        %v1738 = vmul.f32 %v1732, %v1735
        %v1739 = vadd.f32 %v1663, %v1737
        %v1740 = vadd.f32 %v1664, %v1738
        %1741 = vrot.lane.b32.xlu0 %v1675, 1
        %v1742 = vpop.permute.xlu0 %1741
        %1743 = vrot.lane.b32.xlu0 %v1676, 1
        %v1744 = vpop.permute.xlu0 %1743
        %v1745 = vsel %vm653, %v1742, %v1744
        %v1746 = vsel %vm653, %v1744, %v1742
        %v1747 = vmul.f32 %v1746, %v657
        %v1748 = vmul.f32 %v1745, %v658
        %1749 = vset.pattern.permute.xlu0 70
        %1750 = vperm.xlu0 %1749, %v553
        %v1751 = vpop.permute.xlu0 %1750
        %v1753 = vmul.f32 %v1747, %v1751
        %v1754 = vmul.f32 %v1748, %v1751
        %v1755 = vadd.f32 %v1691, %v1753
        %v1756 = vadd.f32 %v1692, %v1754
        %1757 = vset.pattern.permute.xlu0 71
        %1758 = vperm.xlu0 %1757, %v553
        %v1759 = vpop.permute.xlu0 %1758
        %v1761 = vmul.f32 %v1675, %v1759
        %v1762 = vmul.f32 %v1676, %v1759
        %v1763 = vadd.f32 %v1707, %v1761
        %v1764 = vadd.f32 %v1708, %v1762
        %1765 = vrot.lane.b32.xlu0 %v1675, 127
        %v1766 = vpop.permute.xlu0 %1765
        %1767 = vrot.lane.b32.xlu0 %v1676, 127
        %v1768 = vpop.permute.xlu0 %1767
        %v1769 = vsel %vm681, %v1766, %v1768
        %v1770 = vsel %vm681, %v1768, %v1766
        %v1771 = vmul.f32 %v1769, %v685
        %v1772 = vmul.f32 %v1770, %v686
        %1773 = vset.pattern.permute.xlu0 72
        %1774 = vperm.xlu0 %1773, %v553
        %v1775 = vpop.permute.xlu0 %1774
        %v1777 = vmul.f32 %v1771, %v1775
        %v1778 = vmul.f32 %v1772, %v1775
        %v1779 = vadd.f32 %v1723, %v1777
        %v1780 = vadd.f32 %v1724, %v1778
        %1781 = vrot.lane.b32.xlu0 %v1675, 126
        %v1782 = vpop.permute.xlu0 %1781
        %1783 = vrot.lane.b32.xlu0 %v1676, 126
        %v1784 = vpop.permute.xlu0 %1783
        %v1785 = vsel %vm701, %v1782, %v1784
        %v1786 = vsel %vm701, %v1784, %v1782
        %v1787 = vmul.f32 %v1785, %v705
        %v1788 = vmul.f32 %v1786, %v706
        %1789 = vset.pattern.permute.xlu0 73
        %1790 = vperm.xlu0 %1789, %v553
        %v1791 = vpop.permute.xlu0 %1790
        %v1793 = vmul.f32 %v1787, %v1791
        %v1794 = vmul.f32 %v1788, %v1791
        %v1795 = vadd.f32 %v1739, %v1793
        %v1796 = vadd.f32 %v1740, %v1794
        %1797 = vrot.lane.b32.xlu0 %v1675, 125
        %v1798 = vpop.permute.xlu0 %1797
        %1799 = vrot.lane.b32.xlu0 %v1676, 125
        %v1800 = vpop.permute.xlu0 %1799
        %v1801 = vsel %vm721, %v1798, %v1800
        %v1802 = vsel %vm721, %v1800, %v1798
        %v1803 = vmul.f32 %v1801, %v725
        %v1804 = vmul.f32 %v1802, %v726
        %1805 = vset.pattern.permute.xlu0 74
        %1806 = vperm.xlu0 %1805, %v553
        %v1807 = vpop.permute.xlu0 %1806
        %v1809 = vmul.f32 %v1803, %v1807
        %v1810 = vmul.f32 %v1804, %v1807
        %v1811 = vadd.f32 %v1755, %v1809
        %v1812 = vadd.f32 %v1756, %v1810
        %1813 = vrot.lane.b32.xlu0 %v1675, 124
        %v1814 = vpop.permute.xlu0 %1813
        %1815 = vrot.lane.b32.xlu0 %v1676, 124
        %v1816 = vpop.permute.xlu0 %1815
        %v1817 = vsel %vm741, %v1814, %v1816
        %v1818 = vsel %vm741, %v1816, %v1814
        %v1819 = vmul.f32 %v1817, %v745
        %v1820 = vmul.f32 %v1818, %v746
        %1821 = vset.pattern.permute.xlu0 75
        %1822 = vperm.xlu0 %1821, %v553
        %v1823 = vpop.permute.xlu0 %1822
        %v1825 = vmul.f32 %v1819, %v1823
        %v1826 = vmul.f32 %v1820, %v1823
        %v1827 = vadd.f32 %v1763, %v1825
        %v1828 = vadd.f32 %v1764, %v1826
        %1829 = vrot.lane.b32.xlu0 %v1675, 123
        %v1830 = vpop.permute.xlu0 %1829
        %1831 = vrot.lane.b32.xlu0 %v1676, 123
        %v1832 = vpop.permute.xlu0 %1831
        %v1833 = vsel %vm761, %v1830, %v1832
        %v1834 = vsel %vm761, %v1832, %v1830
        %v1835 = vmul.f32 %v1833, %v765
        %v1836 = vmul.f32 %v1834, %v766
        %1837 = vset.pattern.permute.xlu0 76
        %1838 = vperm.xlu0 %1837, %v553
        %v1839 = vpop.permute.xlu0 %1838
        %v1841 = vmul.f32 %v1835, %v1839
        %v1842 = vmul.f32 %v1836, %v1839
        %v1843 = vadd.f32 %v1779, %v1841
        %v1844 = vadd.f32 %v1780, %v1842
        %1845 = vrot.lane.b32.xlu0 %v537, 96
        %v1846 = vpop.permute.xlu0 %1845
        %1847 = vrot.lane.b32.xlu0 %v550, 96
        %v1848 = vpop.permute.xlu0 %1847
        %vm1849 = vcmp.lt.s32.totalorder %v559, 96
        %v1850 = vsel %vm1849, %v1846, %v1848
        %v1851 = vsel %vm1849, %v1848, %v1846
        %s1852 = scalar_lea.vmem [#allocation5], 128
        %v1853 = vld [vmem:[%s1852] sm:$0xff]
        %v1854 = vld [vmem:[%s1852 + $0x8] sm:$0xff]
        %v1855 = vmul.f32 %v1850, %v1853
        %v1856 = vmul.f32 %v1851, %v1854
        %1857 = vrot.lane.b32.xlu0 %v1855, 5
        %v1858 = vpop.permute.xlu0 %1857
        %1859 = vrot.lane.b32.xlu0 %v1856, 5
        %v1860 = vpop.permute.xlu0 %1859
        %v1861 = vsel %vm572, %v1858, %v1860
        %v1862 = vsel %vm572, %v1860, %v1858
        %v1863 = vmul.f32 %v1862, %v576
        %v1864 = vmul.f32 %v1861, %v577
        %1865 = vset.pattern.permute.xlu0 77
        %1866 = vperm.xlu0 %1865, %v553
        %v1867 = vpop.permute.xlu0 %1866
        %v1869 = vmul.f32 %v1863, %v1867
        %v1870 = vmul.f32 %v1864, %v1867
        %v1871 = vadd.f32 %v1795, %v1869
        %v1872 = vadd.f32 %v1796, %v1870
        %1873 = vrot.lane.b32.xlu0 %v1855, 4
        %v1874 = vpop.permute.xlu0 %1873
        %1875 = vrot.lane.b32.xlu0 %v1856, 4
        %v1876 = vpop.permute.xlu0 %1875
        %v1877 = vsel %vm593, %v1874, %v1876
        %v1878 = vsel %vm593, %v1876, %v1874
        %v1879 = vmul.f32 %v1878, %v597
        %v1880 = vmul.f32 %v1877, %v598
        %1881 = vset.pattern.permute.xlu0 78
        %1882 = vperm.xlu0 %1881, %v553
        %v1883 = vpop.permute.xlu0 %1882
        %v1885 = vmul.f32 %v1879, %v1883
        %v1886 = vmul.f32 %v1880, %v1883
        %v1887 = vadd.f32 %v1811, %v1885
        %v1888 = vadd.f32 %v1812, %v1886
        %1889 = vrot.lane.b32.xlu0 %v1855, 3
        %v1890 = vpop.permute.xlu0 %1889
        %1891 = vrot.lane.b32.xlu0 %v1856, 3
        %v1892 = vpop.permute.xlu0 %1891
        %v1893 = vsel %vm613, %v1890, %v1892
        %v1894 = vsel %vm613, %v1892, %v1890
        %v1895 = vmul.f32 %v1894, %v617
        %v1896 = vmul.f32 %v1893, %v618
        %1897 = vset.pattern.permute.xlu0 79
        %1898 = vperm.xlu0 %1897, %v553
        %v1899 = vpop.permute.xlu0 %1898
        %v1901 = vmul.f32 %v1895, %v1899
        %v1902 = vmul.f32 %v1896, %v1899
        %v1903 = vadd.f32 %v1827, %v1901
        %v1904 = vadd.f32 %v1828, %v1902
        %1905 = vrot.lane.b32.xlu0 %v1855, 2
        %v1906 = vpop.permute.xlu0 %1905
        %1907 = vrot.lane.b32.xlu0 %v1856, 2
        %v1908 = vpop.permute.xlu0 %1907
        %v1909 = vsel %vm633, %v1906, %v1908
        %v1910 = vsel %vm633, %v1908, %v1906
        %v1911 = vmul.f32 %v1910, %v637
        %v1912 = vmul.f32 %v1909, %v638
        %1913 = vset.pattern.permute.xlu0 80
        %1914 = vperm.xlu0 %1913, %v553
        %v1915 = vpop.permute.xlu0 %1914
        %v1917 = vmul.f32 %v1911, %v1915
        %v1918 = vmul.f32 %v1912, %v1915
        %v1919 = vadd.f32 %v1843, %v1917
        %v1920 = vadd.f32 %v1844, %v1918
        %1921 = vrot.lane.b32.xlu0 %v1855, 1
        %v1922 = vpop.permute.xlu0 %1921
        %1923 = vrot.lane.b32.xlu0 %v1856, 1
        %v1924 = vpop.permute.xlu0 %1923
        %v1925 = vsel %vm653, %v1922, %v1924
        %v1926 = vsel %vm653, %v1924, %v1922
        %v1927 = vmul.f32 %v1926, %v657
        %v1928 = vmul.f32 %v1925, %v658
        %1929 = vset.pattern.permute.xlu0 81
        %1930 = vperm.xlu0 %1929, %v553
        %v1931 = vpop.permute.xlu0 %1930
        %v1933 = vmul.f32 %v1927, %v1931
        %v1934 = vmul.f32 %v1928, %v1931
        %v1935 = vadd.f32 %v1871, %v1933
        %v1936 = vadd.f32 %v1872, %v1934
        %1937 = vset.pattern.permute.xlu0 82
        %1938 = vperm.xlu0 %1937, %v553
        %v1939 = vpop.permute.xlu0 %1938
        %v1941 = vmul.f32 %v1855, %v1939
        %v1942 = vmul.f32 %v1856, %v1939
        %v1943 = vadd.f32 %v1887, %v1941
        %v1944 = vadd.f32 %v1888, %v1942
        %1945 = vrot.lane.b32.xlu0 %v1855, 127
        %v1946 = vpop.permute.xlu0 %1945
        %1947 = vrot.lane.b32.xlu0 %v1856, 127
        %v1948 = vpop.permute.xlu0 %1947
        %v1949 = vsel %vm681, %v1946, %v1948
        %v1950 = vsel %vm681, %v1948, %v1946
        %v1951 = vmul.f32 %v1949, %v685
        %v1952 = vmul.f32 %v1950, %v686
        %1953 = vset.pattern.permute.xlu0 83
        %1954 = vperm.xlu0 %1953, %v553
        %v1955 = vpop.permute.xlu0 %1954
        %v1957 = vmul.f32 %v1951, %v1955
        %v1958 = vmul.f32 %v1952, %v1955
        %v1959 = vadd.f32 %v1903, %v1957
        %v1960 = vadd.f32 %v1904, %v1958
        %1961 = vrot.lane.b32.xlu0 %v1855, 126
        %v1962 = vpop.permute.xlu0 %1961
        %1963 = vrot.lane.b32.xlu0 %v1856, 126
        %v1964 = vpop.permute.xlu0 %1963
        %v1965 = vsel %vm701, %v1962, %v1964
        %v1966 = vsel %vm701, %v1964, %v1962
        %v1967 = vmul.f32 %v1965, %v705
        %v1968 = vmul.f32 %v1966, %v706
        %1969 = vset.pattern.permute.xlu0 84
        %1970 = vperm.xlu0 %1969, %v553
        %v1971 = vpop.permute.xlu0 %1970
        %v1973 = vmul.f32 %v1967, %v1971
        %v1974 = vmul.f32 %v1968, %v1971
        %v1975 = vadd.f32 %v1919, %v1973
        %v1976 = vadd.f32 %v1920, %v1974
        %1977 = vrot.lane.b32.xlu0 %v1855, 125
        %v1978 = vpop.permute.xlu0 %1977
        %1979 = vrot.lane.b32.xlu0 %v1856, 125
        %v1980 = vpop.permute.xlu0 %1979
        %v1981 = vsel %vm721, %v1978, %v1980
        %v1982 = vsel %vm721, %v1980, %v1978
        %v1983 = vmul.f32 %v1981, %v725
        %v1984 = vmul.f32 %v1982, %v726
        %1985 = vset.pattern.permute.xlu0 85
        %1986 = vperm.xlu0 %1985, %v553
        %v1987 = vpop.permute.xlu0 %1986
        %v1989 = vmul.f32 %v1983, %v1987
        %v1990 = vmul.f32 %v1984, %v1987
        %v1991 = vadd.f32 %v1935, %v1989
        %v1992 = vadd.f32 %v1936, %v1990
        %1993 = vrot.lane.b32.xlu0 %v1855, 124
        %v1994 = vpop.permute.xlu0 %1993
        %1995 = vrot.lane.b32.xlu0 %v1856, 124
        %v1996 = vpop.permute.xlu0 %1995
        %v1997 = vsel %vm741, %v1994, %v1996
        %v1998 = vsel %vm741, %v1996, %v1994
        %v1999 = vmul.f32 %v1997, %v745
        %v2000 = vmul.f32 %v1998, %v746
        %2001 = vset.pattern.permute.xlu0 86
        %2002 = vperm.xlu0 %2001, %v553
        %v2003 = vpop.permute.xlu0 %2002
        %v2005 = vmul.f32 %v1999, %v2003
        %v2006 = vmul.f32 %v2000, %v2003
        %v2007 = vadd.f32 %v1943, %v2005
        %v2008 = vadd.f32 %v1944, %v2006
        %2009 = vrot.lane.b32.xlu0 %v1855, 123
        %v2010 = vpop.permute.xlu0 %2009
        %2011 = vrot.lane.b32.xlu0 %v1856, 123
        %v2012 = vpop.permute.xlu0 %2011
        %v2013 = vsel %vm761, %v2010, %v2012
        %v2014 = vsel %vm761, %v2012, %v2010
        %v2015 = vmul.f32 %v2013, %v765
        %v2016 = vmul.f32 %v2014, %v766
        %2017 = vset.pattern.permute.xlu0 87
        %2018 = vperm.xlu0 %2017, %v553
        %v2019 = vpop.permute.xlu0 %2018
        %v2021 = vmul.f32 %v2015, %v2019
        %v2022 = vmul.f32 %v2016, %v2019
        %v2023 = vadd.f32 %v1959, %v2021
        %v2024 = vadd.f32 %v1960, %v2022
        %s2025 = scalar_lea.vmem [#allocation5], 144
        %v2026 = vld [vmem:[%s2025] sm:$0xff]
        %v2027 = vld [vmem:[%s2025 + $0x8] sm:$0xff]
        %v2028 = vmul.f32 %v561, %v2026
        %v2029 = vmul.f32 %v562, %v2027
        %2030 = vrot.lane.b32.xlu0 %v2028, 5
        %v2031 = vpop.permute.xlu0 %2030
        %2032 = vrot.lane.b32.xlu0 %v2029, 5
        %v2033 = vpop.permute.xlu0 %2032
        %v2034 = vsel %vm572, %v2031, %v2033
        %v2035 = vsel %vm572, %v2033, %v2031
        %v2036 = vmul.f32 %v2035, %v576
        %v2037 = vmul.f32 %v2034, %v577
        %2038 = vset.pattern.permute.xlu0 88
        %2039 = vperm.xlu0 %2038, %v553
        %v2040 = vpop.permute.xlu0 %2039
        %v2042 = vmul.f32 %v2036, %v2040
        %v2043 = vmul.f32 %v2037, %v2040
        %v2044 = vadd.f32 %v1975, %v2042
        %v2045 = vadd.f32 %v1976, %v2043
        %2046 = vrot.lane.b32.xlu0 %v2028, 4
        %v2047 = vpop.permute.xlu0 %2046
        %2048 = vrot.lane.b32.xlu0 %v2029, 4
        %v2049 = vpop.permute.xlu0 %2048
        %v2050 = vsel %vm593, %v2047, %v2049
        %v2051 = vsel %vm593, %v2049, %v2047
        %v2052 = vmul.f32 %v2051, %v597
        %v2053 = vmul.f32 %v2050, %v598
        %2054 = vset.pattern.permute.xlu0 89
        %2055 = vperm.xlu0 %2054, %v553
        %v2056 = vpop.permute.xlu0 %2055
        %v2058 = vmul.f32 %v2052, %v2056
        %v2059 = vmul.f32 %v2053, %v2056
        %v2060 = vadd.f32 %v1991, %v2058
        %v2061 = vadd.f32 %v1992, %v2059
        %2062 = vrot.lane.b32.xlu0 %v2028, 3
        %v2063 = vpop.permute.xlu0 %2062
        %2064 = vrot.lane.b32.xlu0 %v2029, 3
        %v2065 = vpop.permute.xlu0 %2064
        %v2066 = vsel %vm613, %v2063, %v2065
        %v2067 = vsel %vm613, %v2065, %v2063
        %v2068 = vmul.f32 %v2067, %v617
        %v2069 = vmul.f32 %v2066, %v618
        %2070 = vset.pattern.permute.xlu0 90
        %2071 = vperm.xlu0 %2070, %v553
        %v2072 = vpop.permute.xlu0 %2071
        %v2074 = vmul.f32 %v2068, %v2072
        %v2075 = vmul.f32 %v2069, %v2072
        %v2076 = vadd.f32 %v2007, %v2074
        %v2077 = vadd.f32 %v2008, %v2075
        %2078 = vrot.lane.b32.xlu0 %v2028, 2
        %v2079 = vpop.permute.xlu0 %2078
        %2080 = vrot.lane.b32.xlu0 %v2029, 2
        %v2081 = vpop.permute.xlu0 %2080
        %v2082 = vsel %vm633, %v2079, %v2081
        %v2083 = vsel %vm633, %v2081, %v2079
        %v2084 = vmul.f32 %v2083, %v637
        %v2085 = vmul.f32 %v2082, %v638
        %2086 = vset.pattern.permute.xlu0 91
        %2087 = vperm.xlu0 %2086, %v553
        %v2088 = vpop.permute.xlu0 %2087
        %v2090 = vmul.f32 %v2084, %v2088
        %v2091 = vmul.f32 %v2085, %v2088
        %v2092 = vadd.f32 %v2023, %v2090
        %v2093 = vadd.f32 %v2024, %v2091
        %2094 = vrot.lane.b32.xlu0 %v2028, 1
        %v2095 = vpop.permute.xlu0 %2094
        %2096 = vrot.lane.b32.xlu0 %v2029, 1
        %v2097 = vpop.permute.xlu0 %2096
        %v2098 = vsel %vm653, %v2095, %v2097
        %v2099 = vsel %vm653, %v2097, %v2095
        %v2100 = vmul.f32 %v2099, %v657
        %v2101 = vmul.f32 %v2098, %v658
        %2102 = vset.pattern.permute.xlu0 92
        %2103 = vperm.xlu0 %2102, %v553
        %v2104 = vpop.permute.xlu0 %2103
        %v2106 = vmul.f32 %v2100, %v2104
        %v2107 = vmul.f32 %v2101, %v2104
        %v2108 = vadd.f32 %v2044, %v2106
        %v2109 = vadd.f32 %v2045, %v2107
        %2110 = vset.pattern.permute.xlu0 93
        %2111 = vperm.xlu0 %2110, %v553
        %v2112 = vpop.permute.xlu0 %2111
        %v2114 = vmul.f32 %v2028, %v2112
        %v2115 = vmul.f32 %v2029, %v2112
        %v2116 = vadd.f32 %v2060, %v2114
        %v2117 = vadd.f32 %v2061, %v2115
        %2118 = vrot.lane.b32.xlu0 %v2028, 127
        %v2119 = vpop.permute.xlu0 %2118
        %2120 = vrot.lane.b32.xlu0 %v2029, 127
        %v2121 = vpop.permute.xlu0 %2120
        %v2122 = vsel %vm681, %v2119, %v2121
        %v2123 = vsel %vm681, %v2121, %v2119
        %v2124 = vmul.f32 %v2122, %v685
        %v2125 = vmul.f32 %v2123, %v686
        %2126 = vset.pattern.permute.xlu0 94
        %2127 = vperm.xlu0 %2126, %v553
        %v2128 = vpop.permute.xlu0 %2127
        %v2130 = vmul.f32 %v2124, %v2128
        %v2131 = vmul.f32 %v2125, %v2128
        %v2132 = vadd.f32 %v2076, %v2130
        %v2133 = vadd.f32 %v2077, %v2131
        %2134 = vrot.lane.b32.xlu0 %v2028, 126
        %v2135 = vpop.permute.xlu0 %2134
        %2136 = vrot.lane.b32.xlu0 %v2029, 126
        %v2137 = vpop.permute.xlu0 %2136
        %v2138 = vsel %vm701, %v2135, %v2137
        %v2139 = vsel %vm701, %v2137, %v2135
        %v2140 = vmul.f32 %v2138, %v705
        %v2141 = vmul.f32 %v2139, %v706
        %2142 = vset.pattern.permute.xlu0 95
        %2143 = vperm.xlu0 %2142, %v553
        %v2144 = vpop.permute.xlu0 %2143
        %v2146 = vmul.f32 %v2140, %v2144
        %v2147 = vmul.f32 %v2141, %v2144
        %v2148 = vadd.f32 %v2092, %v2146
        %v2149 = vadd.f32 %v2093, %v2147
        %2150 = vrot.lane.b32.xlu0 %v2028, 125
        %v2151 = vpop.permute.xlu0 %2150
        %2152 = vrot.lane.b32.xlu0 %v2029, 125
        %v2153 = vpop.permute.xlu0 %2152
        %v2154 = vsel %vm721, %v2151, %v2153
        %v2155 = vsel %vm721, %v2153, %v2151
        %v2156 = vmul.f32 %v2154, %v725
        %v2157 = vmul.f32 %v2155, %v726
        %2158 = vset.pattern.permute.xlu0 96
        %2159 = vperm.xlu0 %2158, %v553
        %v2160 = vpop.permute.xlu0 %2159
        %v2162 = vmul.f32 %v2156, %v2160
        %v2163 = vmul.f32 %v2157, %v2160
        %v2164 = vadd.f32 %v2108, %v2162
        %v2165 = vadd.f32 %v2109, %v2163
        %2166 = vrot.lane.b32.xlu0 %v2028, 124
        %v2167 = vpop.permute.xlu0 %2166
        %2168 = vrot.lane.b32.xlu0 %v2029, 124
        %v2169 = vpop.permute.xlu0 %2168
        %v2170 = vsel %vm741, %v2167, %v2169
        %v2171 = vsel %vm741, %v2169, %v2167
        %v2172 = vmul.f32 %v2170, %v745
        %v2173 = vmul.f32 %v2171, %v746
        %2174 = vset.pattern.permute.xlu0 97
        %2175 = vperm.xlu0 %2174, %v553
        %v2176 = vpop.permute.xlu0 %2175
        %v2178 = vmul.f32 %v2172, %v2176
        %v2179 = vmul.f32 %v2173, %v2176
        %v2180 = vadd.f32 %v2116, %v2178
        %v2181 = vadd.f32 %v2117, %v2179
        %2182 = vrot.lane.b32.xlu0 %v2028, 123
        %v2183 = vpop.permute.xlu0 %2182
        %2184 = vrot.lane.b32.xlu0 %v2029, 123
        %v2185 = vpop.permute.xlu0 %2184
        %v2186 = vsel %vm761, %v2183, %v2185
        %v2187 = vsel %vm761, %v2185, %v2183
        %v2188 = vmul.f32 %v2186, %v765
        %v2189 = vmul.f32 %v2187, %v766
        %2190 = vset.pattern.permute.xlu0 98
        %2191 = vperm.xlu0 %2190, %v553
        %v2192 = vpop.permute.xlu0 %2191
        %v2194 = vmul.f32 %v2188, %v2192
        %v2195 = vmul.f32 %v2189, %v2192
        %v2196 = vadd.f32 %v2132, %v2194
        %v2197 = vadd.f32 %v2133, %v2195
        %s2198 = scalar_lea.vmem [#allocation5], 160
        %v2199 = vld [vmem:[%s2198] sm:$0xff]
        %v2200 = vld [vmem:[%s2198 + $0x8] sm:$0xff]
        %v2201 = vmul.f32 %v782, %v2199
        %v2202 = vmul.f32 %v783, %v2200
        %2203 = vrot.lane.b32.xlu0 %v2201, 5
        %v2204 = vpop.permute.xlu0 %2203
        %2205 = vrot.lane.b32.xlu0 %v2202, 5
        %v2206 = vpop.permute.xlu0 %2205
        %v2207 = vsel %vm572, %v2204, %v2206
        %v2208 = vsel %vm572, %v2206, %v2204
        %v2209 = vmul.f32 %v2208, %v576
        %v2210 = vmul.f32 %v2207, %v577
        %2211 = vset.pattern.permute.xlu0 99
        %2212 = vperm.xlu0 %2211, %v553
        %v2213 = vpop.permute.xlu0 %2212
        %v2215 = vmul.f32 %v2209, %v2213
        %v2216 = vmul.f32 %v2210, %v2213
        %v2217 = vadd.f32 %v2148, %v2215
        %v2218 = vadd.f32 %v2149, %v2216
        %2219 = vrot.lane.b32.xlu0 %v2201, 4
        %v2220 = vpop.permute.xlu0 %2219
        %2221 = vrot.lane.b32.xlu0 %v2202, 4
        %v2222 = vpop.permute.xlu0 %2221
        %v2223 = vsel %vm593, %v2220, %v2222
        %v2224 = vsel %vm593, %v2222, %v2220
        %v2225 = vmul.f32 %v2224, %v597
        %v2226 = vmul.f32 %v2223, %v598
        %2227 = vset.pattern.permute.xlu0 100
        %2228 = vperm.xlu0 %2227, %v553
        %v2229 = vpop.permute.xlu0 %2228
        %v2231 = vmul.f32 %v2225, %v2229
        %v2232 = vmul.f32 %v2226, %v2229
        %v2233 = vadd.f32 %v2164, %v2231
        %v2234 = vadd.f32 %v2165, %v2232
        %2235 = vrot.lane.b32.xlu0 %v2201, 3
        %v2236 = vpop.permute.xlu0 %2235
        %2237 = vrot.lane.b32.xlu0 %v2202, 3
        %v2238 = vpop.permute.xlu0 %2237
        %v2239 = vsel %vm613, %v2236, %v2238
        %v2240 = vsel %vm613, %v2238, %v2236
        %v2241 = vmul.f32 %v2240, %v617
        %v2242 = vmul.f32 %v2239, %v618
        %2243 = vset.pattern.permute.xlu0 101
        %2244 = vperm.xlu0 %2243, %v553
        %v2245 = vpop.permute.xlu0 %2244
        %v2247 = vmul.f32 %v2241, %v2245
        %v2248 = vmul.f32 %v2242, %v2245
        %v2249 = vadd.f32 %v2180, %v2247
        %v2250 = vadd.f32 %v2181, %v2248
        %2251 = vrot.lane.b32.xlu0 %v2201, 2
        %v2252 = vpop.permute.xlu0 %2251
        %2253 = vrot.lane.b32.xlu0 %v2202, 2
        %v2254 = vpop.permute.xlu0 %2253
        %v2255 = vsel %vm633, %v2252, %v2254
        %v2256 = vsel %vm633, %v2254, %v2252
        %v2257 = vmul.f32 %v2256, %v637
        %v2258 = vmul.f32 %v2255, %v638
        %2259 = vset.pattern.permute.xlu0 102
        %2260 = vperm.xlu0 %2259, %v553
        %v2261 = vpop.permute.xlu0 %2260
        %v2263 = vmul.f32 %v2257, %v2261
        %v2264 = vmul.f32 %v2258, %v2261
        %v2265 = vadd.f32 %v2196, %v2263
        %v2266 = vadd.f32 %v2197, %v2264
        %2267 = vrot.lane.b32.xlu0 %v2201, 1
        %v2268 = vpop.permute.xlu0 %2267
        %2269 = vrot.lane.b32.xlu0 %v2202, 1
        %v2270 = vpop.permute.xlu0 %2269
        %v2271 = vsel %vm653, %v2268, %v2270
        %v2272 = vsel %vm653, %v2270, %v2268
        %v2273 = vmul.f32 %v2272, %v657
        %v2274 = vmul.f32 %v2271, %v658
        %2275 = vset.pattern.permute.xlu0 103
        %2276 = vperm.xlu0 %2275, %v553
        %v2277 = vpop.permute.xlu0 %2276
        %v2279 = vmul.f32 %v2273, %v2277
        %v2280 = vmul.f32 %v2274, %v2277
        %v2281 = vadd.f32 %v2217, %v2279
        %v2282 = vadd.f32 %v2218, %v2280
        %2283 = vset.pattern.permute.xlu0 104
        %2284 = vperm.xlu0 %2283, %v553
        %v2285 = vpop.permute.xlu0 %2284
        %v2287 = vmul.f32 %v2201, %v2285
        %v2288 = vmul.f32 %v2202, %v2285
        %v2289 = vadd.f32 %v2233, %v2287
        %v2290 = vadd.f32 %v2234, %v2288
        %2291 = vrot.lane.b32.xlu0 %v2201, 127
        %v2292 = vpop.permute.xlu0 %2291
        %2293 = vrot.lane.b32.xlu0 %v2202, 127
        %v2294 = vpop.permute.xlu0 %2293
        %v2295 = vsel %vm681, %v2292, %v2294
        %v2296 = vsel %vm681, %v2294, %v2292
        %v2297 = vmul.f32 %v2295, %v685
        %v2298 = vmul.f32 %v2296, %v686
        %2299 = vset.pattern.permute.xlu0 105
        %2300 = vperm.xlu0 %2299, %v553
        %v2301 = vpop.permute.xlu0 %2300
        %v2303 = vmul.f32 %v2297, %v2301
        %v2304 = vmul.f32 %v2298, %v2301
        %v2305 = vadd.f32 %v2249, %v2303
        %v2306 = vadd.f32 %v2250, %v2304
        %2307 = vrot.lane.b32.xlu0 %v2201, 126
        %v2308 = vpop.permute.xlu0 %2307
        %2309 = vrot.lane.b32.xlu0 %v2202, 126
        %v2310 = vpop.permute.xlu0 %2309
        %v2311 = vsel %vm701, %v2308, %v2310
        %v2312 = vsel %vm701, %v2310, %v2308
        %v2313 = vmul.f32 %v2311, %v705
        %v2314 = vmul.f32 %v2312, %v706
        %2315 = vset.pattern.permute.xlu0 106
        %2316 = vperm.xlu0 %2315, %v553
        %v2317 = vpop.permute.xlu0 %2316
        %v2319 = vmul.f32 %v2313, %v2317
        %v2320 = vmul.f32 %v2314, %v2317
        %v2321 = vadd.f32 %v2265, %v2319
        %v2322 = vadd.f32 %v2266, %v2320
        %2323 = vrot.lane.b32.xlu0 %v2201, 125
        %v2324 = vpop.permute.xlu0 %2323
        %2325 = vrot.lane.b32.xlu0 %v2202, 125
        %v2326 = vpop.permute.xlu0 %2325
        %v2327 = vsel %vm721, %v2324, %v2326
        %v2328 = vsel %vm721, %v2326, %v2324
        %v2329 = vmul.f32 %v2327, %v725
        %v2330 = vmul.f32 %v2328, %v726
        %2331 = vset.pattern.permute.xlu0 107
        %2332 = vperm.xlu0 %2331, %v553
        %v2333 = vpop.permute.xlu0 %2332
        %v2335 = vmul.f32 %v2329, %v2333
        %v2336 = vmul.f32 %v2330, %v2333
        %v2337 = vadd.f32 %v2281, %v2335
        %v2338 = vadd.f32 %v2282, %v2336
        %2339 = vrot.lane.b32.xlu0 %v2201, 124
        %v2340 = vpop.permute.xlu0 %2339
        %2341 = vrot.lane.b32.xlu0 %v2202, 124
        %v2342 = vpop.permute.xlu0 %2341
        %v2343 = vsel %vm741, %v2340, %v2342
        %v2344 = vsel %vm741, %v2342, %v2340
        %v2345 = vmul.f32 %v2343, %v745
        %v2346 = vmul.f32 %v2344, %v746
        %2347 = vset.pattern.permute.xlu0 108
        %2348 = vperm.xlu0 %2347, %v553
        %v2349 = vpop.permute.xlu0 %2348
        %v2351 = vmul.f32 %v2345, %v2349
        %v2352 = vmul.f32 %v2346, %v2349
        %v2353 = vadd.f32 %v2289, %v2351
        %v2354 = vadd.f32 %v2290, %v2352
        %2355 = vrot.lane.b32.xlu0 %v2201, 123
        %v2356 = vpop.permute.xlu0 %2355
        %2357 = vrot.lane.b32.xlu0 %v2202, 123
        %v2358 = vpop.permute.xlu0 %2357
        %v2359 = vsel %vm761, %v2356, %v2358
        %v2360 = vsel %vm761, %v2358, %v2356
        %v2361 = vmul.f32 %v2359, %v765
        %v2362 = vmul.f32 %v2360, %v766
        %2363 = vset.pattern.permute.xlu0 109
        %2364 = vperm.xlu0 %2363, %v553
        %v2365 = vpop.permute.xlu0 %2364
        %v2367 = vmul.f32 %v2361, %v2365
        %v2368 = vmul.f32 %v2362, %v2365
        %v2369 = vadd.f32 %v2305, %v2367
        %v2370 = vadd.f32 %v2306, %v2368
        %s2371 = scalar_lea.vmem [#allocation5], 176
        %v2372 = vld [vmem:[%s2371] sm:$0xff]
        %v2373 = vld [vmem:[%s2371 + $0x8] sm:$0xff]
        %v2374 = vmul.f32 %v962, %v2372
        %v2375 = vmul.f32 %v963, %v2373
        %2376 = vrot.lane.b32.xlu0 %v2374, 5
        %v2377 = vpop.permute.xlu0 %2376
        %2378 = vrot.lane.b32.xlu0 %v2375, 5
        %v2379 = vpop.permute.xlu0 %2378
        %v2380 = vsel %vm572, %v2377, %v2379
        %v2381 = vsel %vm572, %v2379, %v2377
        %v2382 = vmul.f32 %v2381, %v576
        %v2383 = vmul.f32 %v2380, %v577
        %2384 = vset.pattern.permute.xlu0 110
        %2385 = vperm.xlu0 %2384, %v553
        %v2386 = vpop.permute.xlu0 %2385
        %v2388 = vmul.f32 %v2382, %v2386
        %v2389 = vmul.f32 %v2383, %v2386
        %v2390 = vadd.f32 %v2321, %v2388
        %v2391 = vadd.f32 %v2322, %v2389
        %2392 = vrot.lane.b32.xlu0 %v2374, 4
        %v2393 = vpop.permute.xlu0 %2392
        %2394 = vrot.lane.b32.xlu0 %v2375, 4
        %v2395 = vpop.permute.xlu0 %2394
        %v2396 = vsel %vm593, %v2393, %v2395
        %v2397 = vsel %vm593, %v2395, %v2393
        %v2398 = vmul.f32 %v2397, %v597
        %v2399 = vmul.f32 %v2396, %v598
        %2400 = vset.pattern.permute.xlu0 111
        %2401 = vperm.xlu0 %2400, %v553
        %v2402 = vpop.permute.xlu0 %2401
        %v2404 = vmul.f32 %v2398, %v2402
        %v2405 = vmul.f32 %v2399, %v2402
        %v2406 = vadd.f32 %v2337, %v2404
        %v2407 = vadd.f32 %v2338, %v2405
        %2408 = vrot.lane.b32.xlu0 %v2374, 3
        %v2409 = vpop.permute.xlu0 %2408
        %2410 = vrot.lane.b32.xlu0 %v2375, 3
        %v2411 = vpop.permute.xlu0 %2410
        %v2412 = vsel %vm613, %v2409, %v2411
        %v2413 = vsel %vm613, %v2411, %v2409
        %v2414 = vmul.f32 %v2413, %v617
        %v2415 = vmul.f32 %v2412, %v618
        %2416 = vset.pattern.permute.xlu0 112
        %2417 = vperm.xlu0 %2416, %v553
        %v2418 = vpop.permute.xlu0 %2417
        %v2420 = vmul.f32 %v2414, %v2418
        %v2421 = vmul.f32 %v2415, %v2418
        %v2422 = vadd.f32 %v2353, %v2420
        %v2423 = vadd.f32 %v2354, %v2421
        %2424 = vrot.lane.b32.xlu0 %v2374, 2
        %v2425 = vpop.permute.xlu0 %2424
        %2426 = vrot.lane.b32.xlu0 %v2375, 2
        %v2427 = vpop.permute.xlu0 %2426
        %v2428 = vsel %vm633, %v2425, %v2427
        %v2429 = vsel %vm633, %v2427, %v2425
        %v2430 = vmul.f32 %v2429, %v637
        %v2431 = vmul.f32 %v2428, %v638
        %2432 = vset.pattern.permute.xlu0 113
        %2433 = vperm.xlu0 %2432, %v553
        %v2434 = vpop.permute.xlu0 %2433
        %v2436 = vmul.f32 %v2430, %v2434
        %v2437 = vmul.f32 %v2431, %v2434
        %v2438 = vadd.f32 %v2369, %v2436
        %v2439 = vadd.f32 %v2370, %v2437
        %2440 = vrot.lane.b32.xlu0 %v2374, 1
        %v2441 = vpop.permute.xlu0 %2440
        %2442 = vrot.lane.b32.xlu0 %v2375, 1
        %v2443 = vpop.permute.xlu0 %2442
        %v2444 = vsel %vm653, %v2441, %v2443
        %v2445 = vsel %vm653, %v2443, %v2441
        %v2446 = vmul.f32 %v2445, %v657
        %v2447 = vmul.f32 %v2444, %v658
        %2448 = vset.pattern.permute.xlu0 114
        %2449 = vperm.xlu0 %2448, %v553
        %v2450 = vpop.permute.xlu0 %2449
        %v2452 = vmul.f32 %v2446, %v2450
        %v2453 = vmul.f32 %v2447, %v2450
        %v2454 = vadd.f32 %v2390, %v2452
        %v2455 = vadd.f32 %v2391, %v2453
        %2456 = vset.pattern.permute.xlu0 115
        %2457 = vperm.xlu0 %2456, %v553
        %v2458 = vpop.permute.xlu0 %2457
        %v2460 = vmul.f32 %v2374, %v2458
        %v2461 = vmul.f32 %v2375, %v2458
        %v2462 = vadd.f32 %v2406, %v2460
        %v2463 = vadd.f32 %v2407, %v2461
        %2464 = vrot.lane.b32.xlu0 %v2374, 127
        %v2465 = vpop.permute.xlu0 %2464
        %2466 = vrot.lane.b32.xlu0 %v2375, 127
        %v2467 = vpop.permute.xlu0 %2466
        %v2468 = vsel %vm681, %v2465, %v2467
        %v2469 = vsel %vm681, %v2467, %v2465
        %v2470 = vmul.f32 %v2468, %v685
        %v2471 = vmul.f32 %v2469, %v686
        %2472 = vset.pattern.permute.xlu0 116
        %2473 = vperm.xlu0 %2472, %v553
        %v2474 = vpop.permute.xlu0 %2473
        %v2476 = vmul.f32 %v2470, %v2474
        %v2477 = vmul.f32 %v2471, %v2474
        %v2478 = vadd.f32 %v2422, %v2476
        %v2479 = vadd.f32 %v2423, %v2477
        %2480 = vrot.lane.b32.xlu0 %v2374, 126
        %v2481 = vpop.permute.xlu0 %2480
        %2482 = vrot.lane.b32.xlu0 %v2375, 126
        %v2483 = vpop.permute.xlu0 %2482
        %v2484 = vsel %vm701, %v2481, %v2483
        %v2485 = vsel %vm701, %v2483, %v2481
        %v2486 = vmul.f32 %v2484, %v705
        %v2487 = vmul.f32 %v2485, %v706
        %2488 = vset.pattern.permute.xlu0 117
        %2489 = vperm.xlu0 %2488, %v553
        %v2490 = vpop.permute.xlu0 %2489
        %v2492 = vmul.f32 %v2486, %v2490
        %v2493 = vmul.f32 %v2487, %v2490
        %v2494 = vadd.f32 %v2438, %v2492
        %v2495 = vadd.f32 %v2439, %v2493
        %2496 = vrot.lane.b32.xlu0 %v2374, 125
        %v2497 = vpop.permute.xlu0 %2496
        %2498 = vrot.lane.b32.xlu0 %v2375, 125
        %v2499 = vpop.permute.xlu0 %2498
        %v2500 = vsel %vm721, %v2497, %v2499
        %v2501 = vsel %vm721, %v2499, %v2497
        %v2502 = vmul.f32 %v2500, %v725
        %v2503 = vmul.f32 %v2501, %v726
        %2504 = vset.pattern.permute.xlu0 118
        %2505 = vperm.xlu0 %2504, %v553
        %v2506 = vpop.permute.xlu0 %2505
        %v2508 = vmul.f32 %v2502, %v2506
        %v2509 = vmul.f32 %v2503, %v2506
        %v2510 = vadd.f32 %v2454, %v2508
        %v2511 = vadd.f32 %v2455, %v2509
        %2512 = vrot.lane.b32.xlu0 %v2374, 124
        %v2513 = vpop.permute.xlu0 %2512
        %2514 = vrot.lane.b32.xlu0 %v2375, 124
        %v2515 = vpop.permute.xlu0 %2514
        %v2516 = vsel %vm741, %v2513, %v2515
        %v2517 = vsel %vm741, %v2515, %v2513
        %v2518 = vmul.f32 %v2516, %v745
        %v2519 = vmul.f32 %v2517, %v746
        %2520 = vset.pattern.permute.xlu0 119
        %2521 = vperm.xlu0 %2520, %v553
        %v2522 = vpop.permute.xlu0 %2521
        %v2524 = vmul.f32 %v2518, %v2522
        %v2525 = vmul.f32 %v2519, %v2522
        %v2526 = vadd.f32 %v2462, %v2524
        %v2527 = vadd.f32 %v2463, %v2525
        %2528 = vrot.lane.b32.xlu0 %v2374, 123
        %v2529 = vpop.permute.xlu0 %2528
        %2530 = vrot.lane.b32.xlu0 %v2375, 123
        %v2531 = vpop.permute.xlu0 %2530
        %v2532 = vsel %vm761, %v2529, %v2531
        %v2533 = vsel %vm761, %v2531, %v2529
        %v2534 = vmul.f32 %v2532, %v765
        %v2535 = vmul.f32 %v2533, %v766
        %2536 = vset.pattern.permute.xlu0 120
        %2537 = vperm.xlu0 %2536, %v553
        %v2538 = vpop.permute.xlu0 %2537
        %v2540 = vmul.f32 %v2534, %v2538
        %v2541 = vmul.f32 %v2535, %v2538
        %v2542 = vadd.f32 %v2478, %v2540
        %v2543 = vadd.f32 %v2479, %v2541
        %v2544 = vadd.f32 %v2542, %v2494
        %v2545 = vadd.f32 %v2543, %v2495
        %v2546 = vadd.f32 %v2544, %v2510
        %v2547 = vadd.f32 %v2545, %v2511
        %v2548 = vadd.f32 %v2546, %v2526
        %v2549 = vadd.f32 %v2547, %v2527
        %v2550 = vld [vmem:[%s5] sm:$0xff]
        %2552 = vset.pattern.permute.xlu0 0
        %2553 = vperm.xlu0 %2552, %v2550
        %v2554 = vpop.permute.xlu0 %2553
        %v2556 = vadd.f32 %v2548, %v2554
        %v2557 = vadd.f32 %v2549, %v2554
        %v2558 = vmax.f32 %v2556, 0.0
        %v2559 = vmax.f32 %v2557, 0.0
        %v2560 = vld [vmem:[%s6] sm:$0xff]
        %v2561 = vpack.c.bf16 %v2560, %v2560
        %v2562 = vpack.c.bf16 %v2558, %v2558
        %v2563 = vpack.c.bf16 %v2559, %v2559
        %v2564 = vld [vmem:[%s7] sm:$0xff]
        %2566 = vset.pattern.permute.xlu0 0
        %2567 = vperm.xlu0 %2566, %v2564
        %v2568 = vpop.permute.xlu0 %2567
        %v2571 = vsel %vm516, %v2561, 0
        %v2574 = vsel %vm520, %v2562, 0
        %v2577 = vsel %vm520, %v2563, 0
        %2579 = vmatpush.bf16.msra.mxu0 0
        %2580 = vmatpush.bf16.msra.mxu0 0
        %2581 = vmatpush.bf16.msra.mxu0 0
        %2582 = vmatpush.bf16.msra.mxu0 0
        %2583 = vmatpush.bf16.msra.mxu0 0
        %2584 = vmatpush.bf16.msra.mxu0 0
        %2585 = vmatpush.bf16.msra.mxu0 0
        %2586 = vmatpush.bf16.msra.mxu0 %v2574
        %2587 = vmatmul.bf16.gmra.mxu0 %v2571
        %v2588 = vpop.f32.mrf.mxu0
        %v2589 = vadd.f32 %v2568, %v2588
        %v2590 = vpop.f32.mrf.mxu0
        %2591 = vdwg.mxu0
        %2592 = vmatpush.bf16.msra.mxu0 0
        %2593 = vmatpush.bf16.msra.mxu0 0
        %2594 = vmatpush.bf16.msra.mxu0 0
        %2595 = vmatpush.bf16.msra.mxu0 0
        %2596 = vmatpush.bf16.msra.mxu0 0
        %2597 = vmatpush.bf16.msra.mxu0 0
        %2598 = vmatpush.bf16.msra.mxu0 0
        %2599 = vmatpush.bf16.msra.mxu0 %v2577
        %2600 = vmatmul.bf16.gmra.mxu0 %v2571
        %v2601 = vpop.f32.mrf.mxu0
        %v2602 = vadd.f32 %v2568, %v2601
        %v2603 = vpop.f32.mrf.mxu0
        %2604 = vdwg.mxu0
        %v2605 = vmax.f32 %v2589, 0.0
        %v2606 = vmax.f32 %v2602, 0.0
        %v2607 = vadd.f32 %v510, %v2605
        %v2608 = vadd.f32 %v511, %v2606
        %v2609 = vld [vmem:[%s8] sm:$0xff]
        %v2610 = vpack.c.bf16 %v2609, %v2609
        %v2611 = vpack.c.bf16 %v2607, %v2607
        %v2612 = vpack.c.bf16 %v2608, %v2608
        %v2614 = vsel %vm516, %v2610, 0
        %v2617 = vsel %vm520, %v2611, 0
        %v2620 = vsel %vm520, %v2612, 0
        %2622 = vmatpush.bf16.msra.mxu0 0
        %2623 = vmatpush.bf16.msra.mxu0 0
        %2624 = vmatpush.bf16.msra.mxu0 0
        %2625 = vmatpush.bf16.msra.mxu0 0
        %2626 = vmatpush.bf16.msra.mxu0 0
        %2627 = vmatpush.bf16.msra.mxu0 0
        %2628 = vmatpush.bf16.msra.mxu0 0
        %2629 = vmatpush.bf16.msra.mxu0 %v2617
        %2630 = vmatmul.bf16.gmra.mxu0 %v2614
        %v2631 = vpop.f32.mrf.mxu0
        %v2632 = vadd.f32 0.0, %v2631
        %v2633 = vpop.f32.mrf.mxu0
        %2634 = vdwg.mxu0
        %2635 = vmatpush.bf16.msra.mxu0 0
        %2636 = vmatpush.bf16.msra.mxu0 0
        %2637 = vmatpush.bf16.msra.mxu0 0
        %2638 = vmatpush.bf16.msra.mxu0 0
        %2639 = vmatpush.bf16.msra.mxu0 0
        %2640 = vmatpush.bf16.msra.mxu0 0
        %2641 = vmatpush.bf16.msra.mxu0 0
        %2642 = vmatpush.bf16.msra.mxu0 %v2620
        %2643 = vmatmul.bf16.gmra.mxu0 %v2614
        %v2644 = vpop.f32.mrf.mxu0
        %v2645 = vadd.f32 0.0, %v2644
        %v2646 = vpop.f32.mrf.mxu0
        %2647 = vdwg.mxu0
        %v2648 = vld [vmem:[#allocation8] sm:$0xff]
        %2649 = vrot.lane.b32.xlu0 %v2632, 48
        %v2650 = vpop.permute.xlu0 %2649
        %2651 = vrot.lane.b32.xlu0 %v2645, 48
        %v2652 = vpop.permute.xlu0 %2651
        %v2653 = vsel %vm961, %v2650, %v2652
        %v2654 = vsel %vm961, %v2652, %v2650
        %v2655 = vld [vmem:[#allocation5] sm:$0xff]
        %v2656 = vld [vmem:[#allocation5 + $0x8] sm:$0xff]
        %v2657 = vmul.f32 %v2653, %v2655
        %v2658 = vmul.f32 %v2654, %v2656
        %2659 = vrot.lane.b32.xlu0 %v2657, 11
        %v2660 = vpop.permute.xlu0 %2659
        %2661 = vrot.lane.b32.xlu0 %v2658, 11
        %v2662 = vpop.permute.xlu0 %2661
        %vm2663 = vcmp.lt.s32.totalorder %v559, 11
        %v2664 = vsel %vm2663, %v2660, %v2662
        %v2665 = vsel %vm2663, %v2662, %v2660
        %v2666 = vld [vmem:[#allocation7] sm:$0xff]
        %v2667 = vld [vmem:[#allocation7 + $0x8] sm:$0xff]
        %v2668 = vmul.f32 %v2665, %v2666
        %v2669 = vmul.f32 %v2664, %v2667
        %2671 = vset.pattern.permute.xlu0 0
        %2672 = vperm.xlu0 %2671, %v2648
        %v2673 = vpop.permute.xlu0 %2672
        %v2675 = vmul.f32 %v2668, %v2673
        %v2676 = vmul.f32 %v2669, %v2673
        %v2677 = vadd.f32 %v2675, 0.0
        %v2678 = vadd.f32 %v2676, 0.0
        %2679 = vset.pattern.permute.xlu0 1
        %2680 = vperm.xlu0 %2679, %v2648
        %v2681 = vpop.permute.xlu0 %2680
        %v2683 = vmul.f32 %v2657, %v2681
        %v2684 = vmul.f32 %v2658, %v2681
        %v2685 = vadd.f32 %v2683, 0.0
        %v2686 = vadd.f32 %v2684, 0.0
        %2687 = vrot.lane.b32.xlu0 %v2657, 117
        %v2688 = vpop.permute.xlu0 %2687
        %2689 = vrot.lane.b32.xlu0 %v2658, 117
        %v2690 = vpop.permute.xlu0 %2689
        %vm2691 = vcmp.lt.s32.totalorder %v559, 117
        %v2692 = vsel %vm2691, %v2688, %v2690
        %v2693 = vsel %vm2691, %v2690, %v2688
        %s2694 = scalar_lea.vmem [#allocation7], 208
        %v2695 = vld [vmem:[%s2694] sm:$0xff]
        %v2696 = vld [vmem:[%s2694 + $0x8] sm:$0xff]
        %v2697 = vmul.f32 %v2692, %v2695
        %v2698 = vmul.f32 %v2693, %v2696
        %2699 = vset.pattern.permute.xlu0 2
        %2700 = vperm.xlu0 %2699, %v2648
        %v2701 = vpop.permute.xlu0 %2700
        %v2703 = vmul.f32 %v2697, %v2701
        %v2704 = vmul.f32 %v2698, %v2701
        %v2705 = vadd.f32 %v2703, 0.0
        %v2706 = vadd.f32 %v2704, 0.0
        %2707 = vrot.lane.b32.xlu0 %v2632, 112
        %v2708 = vpop.permute.xlu0 %2707
        %2709 = vrot.lane.b32.xlu0 %v2645, 112
        %v2710 = vpop.permute.xlu0 %2709
        %v2711 = vsel %vm1669, %v2708, %v2710
        %v2712 = vsel %vm1669, %v2710, %v2708
        %s2713 = scalar_lea.vmem [#allocation5], 16
        %v2714 = vld [vmem:[%s2713] sm:$0xff]
        %v2715 = vld [vmem:[%s2713 + $0x8] sm:$0xff]
        %v2716 = vmul.f32 %v2712, %v2714
        %v2717 = vmul.f32 %v2711, %v2715
        %2718 = vrot.lane.b32.xlu0 %v2716, 7
        %v2719 = vpop.permute.xlu0 %2718
        %2720 = vrot.lane.b32.xlu0 %v2717, 7
        %v2721 = vpop.permute.xlu0 %2720
        %vm2722 = vcmp.lt.s32.totalorder %v559, 7
        %v2723 = vsel %vm2722, %v2719, %v2721
        %v2724 = vsel %vm2722, %v2721, %v2719
        %s2725 = scalar_lea.vmem [#allocation7], 16
        %v2726 = vld [vmem:[%s2725] sm:$0xff]
        %v2727 = vld [vmem:[%s2725 + $0x8] sm:$0xff]
        %v2728 = vmul.f32 %v2724, %v2726
        %v2729 = vmul.f32 %v2723, %v2727
        %2730 = vset.pattern.permute.xlu0 3
        %2731 = vperm.xlu0 %2730, %v2648
        %v2732 = vpop.permute.xlu0 %2731
        %v2734 = vmul.f32 %v2728, %v2732
        %v2735 = vmul.f32 %v2729, %v2732
        %v2736 = vadd.f32 %v2734, 0.0
        %v2737 = vadd.f32 %v2735, 0.0
        %2738 = vset.pattern.permute.xlu0 4
        %2739 = vperm.xlu0 %2738, %v2648
        %v2740 = vpop.permute.xlu0 %2739
        %v2742 = vmul.f32 %v2716, %v2740
        %v2743 = vmul.f32 %v2717, %v2740
        %v2744 = vadd.f32 %v2677, %v2742
        %v2745 = vadd.f32 %v2678, %v2743
        %2746 = vrot.lane.b32.xlu0 %v2716, 121
        %v2747 = vpop.permute.xlu0 %2746
        %2748 = vrot.lane.b32.xlu0 %v2717, 121
        %v2749 = vpop.permute.xlu0 %2748
        %vm2750 = vcmp.lt.s32.totalorder %v559, 121
        %v2751 = vsel %vm2750, %v2747, %v2749
        %v2752 = vsel %vm2750, %v2749, %v2747
        %s2753 = scalar_lea.vmem [#allocation7], 192
        %v2754 = vld [vmem:[%s2753] sm:$0xff]
        %v2755 = vld [vmem:[%s2753 + $0x8] sm:$0xff]
        %v2756 = vmul.f32 %v2751, %v2754
        %v2757 = vmul.f32 %v2752, %v2755
        %2758 = vset.pattern.permute.xlu0 5
        %2759 = vperm.xlu0 %2758, %v2648
        %v2760 = vpop.permute.xlu0 %2759
        %v2762 = vmul.f32 %v2756, %v2760
        %v2763 = vmul.f32 %v2757, %v2760
        %v2764 = vadd.f32 %v2685, %v2762
        %v2765 = vadd.f32 %v2686, %v2763
        %v2766 = vmul.f32 %v2654, %v965
        %v2767 = vmul.f32 %v2653, %v966
        %2768 = vrot.lane.b32.xlu0 %v2766, 3
        %v2769 = vpop.permute.xlu0 %2768
        %2770 = vrot.lane.b32.xlu0 %v2767, 3
        %v2771 = vpop.permute.xlu0 %2770
        %v2772 = vsel %vm613, %v2769, %v2771
        %v2773 = vsel %vm613, %v2771, %v2769
        %v2774 = vmul.f32 %v2773, %v617
        %v2775 = vmul.f32 %v2772, %v618
        %2776 = vset.pattern.permute.xlu0 6
        %2777 = vperm.xlu0 %2776, %v2648
        %v2778 = vpop.permute.xlu0 %2777
        %v2780 = vmul.f32 %v2774, %v2778
        %v2781 = vmul.f32 %v2775, %v2778
        %v2782 = vadd.f32 %v2705, %v2780
        %v2783 = vadd.f32 %v2706, %v2781
        %2784 = vset.pattern.permute.xlu0 7
        %2785 = vperm.xlu0 %2784, %v2648
        %v2786 = vpop.permute.xlu0 %2785
        %v2788 = vmul.f32 %v2766, %v2786
        %v2789 = vmul.f32 %v2767, %v2786
        %v2790 = vadd.f32 %v2736, %v2788
        %v2791 = vadd.f32 %v2737, %v2789
        %2792 = vrot.lane.b32.xlu0 %v2766, 125
        %v2793 = vpop.permute.xlu0 %2792
        %2794 = vrot.lane.b32.xlu0 %v2767, 125
        %v2795 = vpop.permute.xlu0 %2794
        %v2796 = vsel %vm721, %v2793, %v2795
        %v2797 = vsel %vm721, %v2795, %v2793
        %v2798 = vmul.f32 %v2796, %v725
        %v2799 = vmul.f32 %v2797, %v726
        %2800 = vset.pattern.permute.xlu0 8
        %2801 = vperm.xlu0 %2800, %v2648
        %v2802 = vpop.permute.xlu0 %2801
        %v2804 = vmul.f32 %v2798, %v2802
        %v2805 = vmul.f32 %v2799, %v2802
        %v2806 = vadd.f32 %v2744, %v2804
        %v2807 = vadd.f32 %v2745, %v2805
        %2808 = vrot.lane.b32.xlu0 %v2632, 16
        %v2809 = vpop.permute.xlu0 %2808
        %2810 = vrot.lane.b32.xlu0 %v2645, 16
        %v2811 = vpop.permute.xlu0 %2810
        %v2812 = vsel %vm1321, %v2809, %v2811
        %v2813 = vsel %vm1321, %v2811, %v2809
        %v2814 = vmul.f32 %v2813, %v1325
        %v2815 = vmul.f32 %v2812, %v1326
        %2816 = vrot.lane.b32.xlu0 %v2814, 1
        %v2817 = vpop.permute.xlu0 %2816
        %2818 = vrot.lane.b32.xlu0 %v2815, 1
        %v2819 = vpop.permute.xlu0 %2818
        %v2820 = vsel %vm653, %v2817, %v2819
        %v2821 = vsel %vm653, %v2819, %v2817
        %v2822 = vmul.f32 %v2821, %v657
        %v2823 = vmul.f32 %v2820, %v658
        %2824 = vset.pattern.permute.xlu0 9
        %2825 = vperm.xlu0 %2824, %v2648
        %v2826 = vpop.permute.xlu0 %2825
        %v2828 = vmul.f32 %v2822, %v2826
        %v2829 = vmul.f32 %v2823, %v2826
        %v2830 = vadd.f32 %v2764, %v2828
        %v2831 = vadd.f32 %v2765, %v2829
        %2832 = vset.pattern.permute.xlu0 10
        %2833 = vperm.xlu0 %2832, %v2648
        %v2834 = vpop.permute.xlu0 %2833
        %v2836 = vmul.f32 %v2814, %v2834
        %v2837 = vmul.f32 %v2815, %v2834
        %v2838 = vadd.f32 %v2782, %v2836
        %v2839 = vadd.f32 %v2783, %v2837
        %2840 = vrot.lane.b32.xlu0 %v2814, 127
        %v2841 = vpop.permute.xlu0 %2840
        %2842 = vrot.lane.b32.xlu0 %v2815, 127
        %v2843 = vpop.permute.xlu0 %2842
        %v2844 = vsel %vm681, %v2841, %v2843
        %v2845 = vsel %vm681, %v2843, %v2841
        %v2846 = vmul.f32 %v2844, %v685
        %v2847 = vmul.f32 %v2845, %v686
        %2848 = vset.pattern.permute.xlu0 11
        %2849 = vperm.xlu0 %2848, %v2648
        %v2850 = vpop.permute.xlu0 %2849
        %v2852 = vmul.f32 %v2846, %v2850
        %v2853 = vmul.f32 %v2847, %v2850
        %v2854 = vadd.f32 %v2790, %v2852
        %v2855 = vadd.f32 %v2791, %v2853
        %2856 = vrot.lane.b32.xlu0 %v2632, 11
        %v2857 = vpop.permute.xlu0 %2856
        %2858 = vrot.lane.b32.xlu0 %v2645, 11
        %v2859 = vpop.permute.xlu0 %2858
        %v2860 = vsel %vm2663, %v2857, %v2859
        %v2861 = vsel %vm2663, %v2859, %v2857
        %v2862 = vmul.f32 %v2861, %v2666
        %v2863 = vmul.f32 %v2860, %v2667
        %2864 = vset.pattern.permute.xlu0 12
        %2865 = vperm.xlu0 %2864, %v2648
        %v2866 = vpop.permute.xlu0 %2865
        %v2868 = vmul.f32 %v2862, %v2866
        %v2869 = vmul.f32 %v2863, %v2866
        %v2870 = vadd.f32 %v2806, %v2868
        %v2871 = vadd.f32 %v2807, %v2869
        %2872 = vrot.lane.b32.xlu0 %v2632, 7
        %v2873 = vpop.permute.xlu0 %2872
        %2874 = vrot.lane.b32.xlu0 %v2645, 7
        %v2875 = vpop.permute.xlu0 %2874
        %v2876 = vsel %vm2722, %v2873, %v2875
        %v2877 = vsel %vm2722, %v2875, %v2873
        %v2878 = vmul.f32 %v2877, %v2726
        %v2879 = vmul.f32 %v2876, %v2727
        %2880 = vset.pattern.permute.xlu0 13
        %2881 = vperm.xlu0 %2880, %v2648
        %v2882 = vpop.permute.xlu0 %2881
        %v2884 = vmul.f32 %v2878, %v2882
        %v2885 = vmul.f32 %v2879, %v2882
        %v2886 = vadd.f32 %v2830, %v2884
        %v2887 = vadd.f32 %v2831, %v2885
        %2888 = vrot.lane.b32.xlu0 %v2632, 3
        %v2889 = vpop.permute.xlu0 %2888
        %2890 = vrot.lane.b32.xlu0 %v2645, 3
        %v2891 = vpop.permute.xlu0 %2890
        %v2892 = vsel %vm613, %v2889, %v2891
        %v2893 = vsel %vm613, %v2891, %v2889
        %v2894 = vmul.f32 %v2893, %v617
        %v2895 = vmul.f32 %v2892, %v618
        %2896 = vset.pattern.permute.xlu0 14
        %2897 = vperm.xlu0 %2896, %v2648
        %v2898 = vpop.permute.xlu0 %2897
        %v2900 = vmul.f32 %v2894, %v2898
        %v2901 = vmul.f32 %v2895, %v2898
        %v2902 = vadd.f32 %v2838, %v2900
        %v2903 = vadd.f32 %v2839, %v2901
        %2904 = vrot.lane.b32.xlu0 %v2632, 1
        %v2905 = vpop.permute.xlu0 %2904
        %2906 = vrot.lane.b32.xlu0 %v2645, 1
        %v2907 = vpop.permute.xlu0 %2906
        %v2908 = vsel %vm653, %v2905, %v2907
        %v2909 = vsel %vm653, %v2907, %v2905
        %v2910 = vmul.f32 %v2909, %v657
        %v2911 = vmul.f32 %v2908, %v658
        %2912 = vset.pattern.permute.xlu0 15
        %2913 = vperm.xlu0 %2912, %v2648
        %v2914 = vpop.permute.xlu0 %2913
        %v2916 = vmul.f32 %v2910, %v2914
        %v2917 = vmul.f32 %v2911, %v2914
        %v2918 = vadd.f32 %v2854, %v2916
        %v2919 = vadd.f32 %v2855, %v2917
        %2920 = vset.pattern.permute.xlu0 16
        %2921 = vperm.xlu0 %2920, %v2648
        %v2922 = vpop.permute.xlu0 %2921
        %v2924 = vmul.f32 %v2632, %v2922
        %v2925 = vmul.f32 %v2645, %v2922
        %v2926 = vadd.f32 %v2870, %v2924
        %v2927 = vadd.f32 %v2871, %v2925
        %2928 = vrot.lane.b32.xlu0 %v2632, 127
        %v2929 = vpop.permute.xlu0 %2928
        %2930 = vrot.lane.b32.xlu0 %v2645, 127
        %v2931 = vpop.permute.xlu0 %2930
        %v2932 = vsel %vm681, %v2929, %v2931
        %v2933 = vsel %vm681, %v2931, %v2929
        %v2934 = vmul.f32 %v2932, %v685
        %v2935 = vmul.f32 %v2933, %v686
        %2936 = vset.pattern.permute.xlu0 17
        %2937 = vperm.xlu0 %2936, %v2648
        %v2938 = vpop.permute.xlu0 %2937
        %v2940 = vmul.f32 %v2934, %v2938
        %v2941 = vmul.f32 %v2935, %v2938
        %v2942 = vadd.f32 %v2886, %v2940
        %v2943 = vadd.f32 %v2887, %v2941
        %2944 = vrot.lane.b32.xlu0 %v2632, 125
        %v2945 = vpop.permute.xlu0 %2944
        %2946 = vrot.lane.b32.xlu0 %v2645, 125
        %v2947 = vpop.permute.xlu0 %2946
        %v2948 = vsel %vm721, %v2945, %v2947
        %v2949 = vsel %vm721, %v2947, %v2945
        %v2950 = vmul.f32 %v2948, %v725
        %v2951 = vmul.f32 %v2949, %v726
        %2952 = vset.pattern.permute.xlu0 18
        %2953 = vperm.xlu0 %2952, %v2648
        %v2954 = vpop.permute.xlu0 %2953
        %v2956 = vmul.f32 %v2950, %v2954
        %v2957 = vmul.f32 %v2951, %v2954
        %v2958 = vadd.f32 %v2902, %v2956
        %v2959 = vadd.f32 %v2903, %v2957
        %2960 = vrot.lane.b32.xlu0 %v2632, 121
        %v2961 = vpop.permute.xlu0 %2960
        %2962 = vrot.lane.b32.xlu0 %v2645, 121
        %v2963 = vpop.permute.xlu0 %2962
        %v2964 = vsel %vm2750, %v2961, %v2963
        %v2965 = vsel %vm2750, %v2963, %v2961
        %v2966 = vmul.f32 %v2964, %v2754
        %v2967 = vmul.f32 %v2965, %v2755
        %2968 = vset.pattern.permute.xlu0 19
        %2969 = vperm.xlu0 %2968, %v2648
        %v2970 = vpop.permute.xlu0 %2969
        %v2972 = vmul.f32 %v2966, %v2970
        %v2973 = vmul.f32 %v2967, %v2970
        %v2974 = vadd.f32 %v2918, %v2972
        %v2975 = vadd.f32 %v2919, %v2973
        %2976 = vrot.lane.b32.xlu0 %v2632, 117
        %v2977 = vpop.permute.xlu0 %2976
        %2978 = vrot.lane.b32.xlu0 %v2645, 117
        %v2979 = vpop.permute.xlu0 %2978
        %v2980 = vsel %vm2691, %v2977, %v2979
        %v2981 = vsel %vm2691, %v2979, %v2977
        %v2982 = vmul.f32 %v2980, %v2695
        %v2983 = vmul.f32 %v2981, %v2696
        %2984 = vset.pattern.permute.xlu0 20
        %2985 = vperm.xlu0 %2984, %v2648
        %v2986 = vpop.permute.xlu0 %2985
        %v2988 = vmul.f32 %v2982, %v2986
        %v2989 = vmul.f32 %v2983, %v2986
        %v2990 = vadd.f32 %v2926, %v2988
        %v2991 = vadd.f32 %v2927, %v2989
        %v2992 = vmul.f32 %v2711, %v1673
        %v2993 = vmul.f32 %v2712, %v1674
        %2994 = vrot.lane.b32.xlu0 %v2992, 1
        %v2995 = vpop.permute.xlu0 %2994
        %2996 = vrot.lane.b32.xlu0 %v2993, 1
        %v2997 = vpop.permute.xlu0 %2996
        %v2998 = vsel %vm653, %v2995, %v2997
        %v2999 = vsel %vm653, %v2997, %v2995
        %v3000 = vmul.f32 %v2999, %v657
        %v3001 = vmul.f32 %v2998, %v658
        %3002 = vset.pattern.permute.xlu0 21
        %3003 = vperm.xlu0 %3002, %v2648
        %v3004 = vpop.permute.xlu0 %3003
        %v3006 = vmul.f32 %v3000, %v3004
        %v3007 = vmul.f32 %v3001, %v3004
        %v3008 = vadd.f32 %v2942, %v3006
        %v3009 = vadd.f32 %v2943, %v3007
        %3010 = vset.pattern.permute.xlu0 22
        %3011 = vperm.xlu0 %3010, %v2648
        %v3012 = vpop.permute.xlu0 %3011
        %v3014 = vmul.f32 %v2992, %v3012
        %v3015 = vmul.f32 %v2993, %v3012
        %v3016 = vadd.f32 %v2958, %v3014
        %v3017 = vadd.f32 %v2959, %v3015
        %3018 = vrot.lane.b32.xlu0 %v2992, 127
        %v3019 = vpop.permute.xlu0 %3018
        %3020 = vrot.lane.b32.xlu0 %v2993, 127
        %v3021 = vpop.permute.xlu0 %3020
        %v3022 = vsel %vm681, %v3019, %v3021
        %v3023 = vsel %vm681, %v3021, %v3019
        %v3024 = vmul.f32 %v3022, %v685
        %v3025 = vmul.f32 %v3023, %v686
        %3026 = vset.pattern.permute.xlu0 23
        %3027 = vperm.xlu0 %3026, %v2648
        %v3028 = vpop.permute.xlu0 %3027
        %v3030 = vmul.f32 %v3024, %v3028
        %v3031 = vmul.f32 %v3025, %v3028
        %v3032 = vadd.f32 %v2974, %v3030
        %v3033 = vadd.f32 %v2975, %v3031
        %3034 = vrot.lane.b32.xlu0 %v2632, 80
        %v3035 = vpop.permute.xlu0 %3034
        %3036 = vrot.lane.b32.xlu0 %v2645, 80
        %v3037 = vpop.permute.xlu0 %3036
        %v3038 = vsel %vm560, %v3035, %v3037
        %v3039 = vsel %vm560, %v3037, %v3035
        %v3040 = vmul.f32 %v3038, %v2026
        %v3041 = vmul.f32 %v3039, %v2027
        %3042 = vrot.lane.b32.xlu0 %v3040, 3
        %v3043 = vpop.permute.xlu0 %3042
        %3044 = vrot.lane.b32.xlu0 %v3041, 3
        %v3045 = vpop.permute.xlu0 %3044
        %v3046 = vsel %vm613, %v3043, %v3045
        %v3047 = vsel %vm613, %v3045, %v3043
        %v3048 = vmul.f32 %v3047, %v617
        %v3049 = vmul.f32 %v3046, %v618
        %3050 = vset.pattern.permute.xlu0 24
        %3051 = vperm.xlu0 %3050, %v2648
        %v3052 = vpop.permute.xlu0 %3051
        %v3054 = vmul.f32 %v3048, %v3052
        %v3055 = vmul.f32 %v3049, %v3052
        %v3056 = vadd.f32 %v2990, %v3054
        %v3057 = vadd.f32 %v2991, %v3055
        %3058 = vset.pattern.permute.xlu0 25
        %3059 = vperm.xlu0 %3058, %v2648
        %v3060 = vpop.permute.xlu0 %3059
        %v3062 = vmul.f32 %v3040, %v3060
        %v3063 = vmul.f32 %v3041, %v3060
        %v3064 = vadd.f32 %v3008, %v3062
        %v3065 = vadd.f32 %v3009, %v3063
        %3066 = vrot.lane.b32.xlu0 %v3040, 125
        %v3067 = vpop.permute.xlu0 %3066
        %3068 = vrot.lane.b32.xlu0 %v3041, 125
        %v3069 = vpop.permute.xlu0 %3068
        %v3070 = vsel %vm721, %v3067, %v3069
        %v3071 = vsel %vm721, %v3069, %v3067
        %v3072 = vmul.f32 %v3070, %v725
        %v3073 = vmul.f32 %v3071, %v726
        %3074 = vset.pattern.permute.xlu0 26
        %3075 = vperm.xlu0 %3074, %v2648
        %v3076 = vpop.permute.xlu0 %3075
        %v3078 = vmul.f32 %v3072, %v3076
        %v3079 = vmul.f32 %v3073, %v3076
        %v3080 = vadd.f32 %v3016, %v3078
        %v3081 = vadd.f32 %v3017, %v3079
        %s3082 = scalar_lea.vmem [#allocation5], 192
        %v3083 = vld [vmem:[%s3082] sm:$0xff]
        %v3084 = vld [vmem:[%s3082 + $0x8] sm:$0xff]
        %v3085 = vmul.f32 %v2812, %v3083
        %v3086 = vmul.f32 %v2813, %v3084
        %3087 = vrot.lane.b32.xlu0 %v3085, 7
        %v3088 = vpop.permute.xlu0 %3087
        %3089 = vrot.lane.b32.xlu0 %v3086, 7
        %v3090 = vpop.permute.xlu0 %3089
        %v3091 = vsel %vm2722, %v3088, %v3090
        %v3092 = vsel %vm2722, %v3090, %v3088
        %v3093 = vmul.f32 %v3092, %v2726
        %v3094 = vmul.f32 %v3091, %v2727
        %3095 = vset.pattern.permute.xlu0 27
        %3096 = vperm.xlu0 %3095, %v2648
        %v3097 = vpop.permute.xlu0 %3096
        %v3099 = vmul.f32 %v3093, %v3097
        %v3100 = vmul.f32 %v3094, %v3097
        %v3101 = vadd.f32 %v3032, %v3099
        %v3102 = vadd.f32 %v3033, %v3100
        %3103 = vset.pattern.permute.xlu0 28
        %3104 = vperm.xlu0 %3103, %v2648
        %v3105 = vpop.permute.xlu0 %3104
        %v3107 = vmul.f32 %v3085, %v3105
        %v3108 = vmul.f32 %v3086, %v3105
        %v3109 = vadd.f32 %v3056, %v3107
        %v3110 = vadd.f32 %v3057, %v3108
        %3111 = vrot.lane.b32.xlu0 %v3085, 121
        %v3112 = vpop.permute.xlu0 %3111
        %3113 = vrot.lane.b32.xlu0 %v3086, 121
        %v3114 = vpop.permute.xlu0 %3113
        %v3115 = vsel %vm2750, %v3112, %v3114
        %v3116 = vsel %vm2750, %v3114, %v3112
        %v3117 = vmul.f32 %v3115, %v2754
        %v3118 = vmul.f32 %v3116, %v2755
        %3119 = vset.pattern.permute.xlu0 29
        %3120 = vperm.xlu0 %3119, %v2648
        %v3121 = vpop.permute.xlu0 %3120
        %v3123 = vmul.f32 %v3117, %v3121
        %v3124 = vmul.f32 %v3118, %v3121
        %v3125 = vadd.f32 %v3064, %v3123
        %v3126 = vadd.f32 %v3065, %v3124
        %s3127 = scalar_lea.vmem [#allocation5], 208
        %v3128 = vld [vmem:[%s3127] sm:$0xff]
        %v3129 = vld [vmem:[%s3127 + $0x8] sm:$0xff]
        %v3130 = vmul.f32 %v3039, %v3128
        %v3131 = vmul.f32 %v3038, %v3129
        %3132 = vrot.lane.b32.xlu0 %v3130, 11
        %v3133 = vpop.permute.xlu0 %3132
        %3134 = vrot.lane.b32.xlu0 %v3131, 11
        %v3135 = vpop.permute.xlu0 %3134
        %v3136 = vsel %vm2663, %v3133, %v3135
        %v3137 = vsel %vm2663, %v3135, %v3133
        %v3138 = vmul.f32 %v3137, %v2666
        %v3139 = vmul.f32 %v3136, %v2667
        %3140 = vset.pattern.permute.xlu0 30
        %3141 = vperm.xlu0 %3140, %v2648
        %v3142 = vpop.permute.xlu0 %3141
        %v3144 = vmul.f32 %v3138, %v3142
        %v3145 = vmul.f32 %v3139, %v3142
        %v3146 = vadd.f32 %v3080, %v3144
        %v3147 = vadd.f32 %v3081, %v3145
        %3148 = vset.pattern.permute.xlu0 31
        %3149 = vperm.xlu0 %3148, %v2648
        %v3150 = vpop.permute.xlu0 %3149
        %v3152 = vmul.f32 %v3130, %v3150
        %v3153 = vmul.f32 %v3131, %v3150
        %v3154 = vadd.f32 %v3101, %v3152
        %v3155 = vadd.f32 %v3102, %v3153
        %3156 = vrot.lane.b32.xlu0 %v3130, 117
        %v3157 = vpop.permute.xlu0 %3156
        %3158 = vrot.lane.b32.xlu0 %v3131, 117
        %v3159 = vpop.permute.xlu0 %3158
        %v3160 = vsel %vm2691, %v3157, %v3159
        %v3161 = vsel %vm2691, %v3159, %v3157
        %v3162 = vmul.f32 %v3160, %v2695
        %v3163 = vmul.f32 %v3161, %v2696
        %3164 = vset.pattern.permute.xlu0 32
        %3165 = vperm.xlu0 %3164, %v2648
        %v3166 = vpop.permute.xlu0 %3165
        %v3168 = vmul.f32 %v3162, %v3166
        %v3169 = vmul.f32 %v3163, %v3166
        %v3170 = vadd.f32 %v3109, %v3168
        %v3171 = vadd.f32 %v3110, %v3169
        %v3172 = vadd.f32 %v3170, %v3125
        %v3173 = vadd.f32 %v3171, %v3126
        %v3174 = vadd.f32 %v3172, %v3146
        %v3175 = vadd.f32 %v3173, %v3147
        %v3176 = vadd.f32 %v3174, %v3154
        %v3177 = vadd.f32 %v3175, %v3155
        %v3178 = vld [vmem:[%s10] sm:$0xff]
        %3180 = vset.pattern.permute.xlu0 0
        %3181 = vperm.xlu0 %3180, %v3178
        %v3182 = vpop.permute.xlu0 %3181
        %v3184 = vadd.f32 %v3176, %v3182
        %v3185 = vadd.f32 %v3177, %v3182
        %v3186 = vmax.f32 %v3184, 0.0
        %v3187 = vmax.f32 %v3185, 0.0
        %v3188 = vld [vmem:[%s11] sm:$0xff]
        %v3189 = vpack.c.bf16 %v3188, %v3188
        %v3190 = vpack.c.bf16 %v3186, %v3186
        %v3191 = vpack.c.bf16 %v3187, %v3187
        %v3192 = vld [vmem:[%s12] sm:$0xff]
        %3194 = vset.pattern.permute.xlu0 0
        %3195 = vperm.xlu0 %3194, %v3192
        %v3196 = vpop.permute.xlu0 %3195
        %v3199 = vsel %vm516, %v3189, 0
        %v3202 = vsel %vm520, %v3190, 0
        %v3205 = vsel %vm520, %v3191, 0
        %3207 = vmatpush.bf16.msra.mxu0 0
        %3208 = vmatpush.bf16.msra.mxu0 0
        %3209 = vmatpush.bf16.msra.mxu0 0
        %3210 = vmatpush.bf16.msra.mxu0 0
        %3211 = vmatpush.bf16.msra.mxu0 0
        %3212 = vmatpush.bf16.msra.mxu0 0
        %3213 = vmatpush.bf16.msra.mxu0 0
        %3214 = vmatpush.bf16.msra.mxu0 %v3202
        %3215 = vmatmul.bf16.gmra.mxu0 %v3199
        %v3216 = vpop.f32.mrf.mxu0
        %v3217 = vadd.f32 %v3196, %v3216
        %v3218 = vpop.f32.mrf.mxu0
        %3219 = vdwg.mxu0
        %3220 = vmatpush.bf16.msra.mxu0 0
        %3221 = vmatpush.bf16.msra.mxu0 0
        %3222 = vmatpush.bf16.msra.mxu0 0
        %3223 = vmatpush.bf16.msra.mxu0 0
        %3224 = vmatpush.bf16.msra.mxu0 0
        %3225 = vmatpush.bf16.msra.mxu0 0
        %3226 = vmatpush.bf16.msra.mxu0 0
        %3227 = vmatpush.bf16.msra.mxu0 %v3205
        %3228 = vmatmul.bf16.gmra.mxu0 %v3199
        %v3229 = vpop.f32.mrf.mxu0
        %v3230 = vadd.f32 %v3196, %v3229
        %v3231 = vpop.f32.mrf.mxu0
        %3232 = vdwg.mxu0
        %v3233 = vadd.f32 %v2607, %v3217
        %v3234 = vadd.f32 %v2608, %v3230
        %3235 = vst [vmem:[%s506] sm:$0xff] %v3233
        %3236 = vst [vmem:[%s506 + $0x8] sm:$0xff] %v3234
        %s3237 = sand.u32 %s318, 1
        %s3238 = scalar_lea.sflag [#allocation4], %s3237
        %s3239 = sand.u32 %s318, 1
        %s3240 = smul.addr %s3239, 16
        %s3241 = scalar_lea.vmem [#allocation10], %s3240
        // Predicated region
        $region89: #{tpu_custom_call.1} parent=71 // pred_check
          %p3242 = pneg %p328
        $region90: #{tpu_custom_call.1} parent=71 // pred_check_branch
          %3244 = sbr.rel (%p3242) target = $region92
        $region91: #{tpu_custom_call.1} parent=71 // pred_region
          %s3245 = smul.u32 2, %s32
          %3247 = vsyncadd %s3238, 0
          %s3248 = smul.addr %s3245, 8
          %s3249 = scalar_lea.hbm %s13, %s3248
          %s3251 = sshll.u32 %s3241, 4
          %s3252 = int_to_ptr.vmem [resolvable:$true] %s3251
          %s3253 = sshll.u32 %s3249, 4
          %s3254 = int_to_ptr.hbm [resolvable:$true] %s3253
          %3256 = dma.vmem_to_hbm [thread:$0]  %s3252, 256, %s3254, %s3238
        $region92: #{tpu_custom_call.1} parent=71 // pred_fallthru
          _
      $region72: #{tpu_custom_call.1} parent=5 // pred_fallthru
        _
      %p3257 = scmp.le.s32.totalorder 2, %s27
      // Predicated region
      $region93: #{tpu_custom_call.1} parent=5 // pred_check
        %p3258 = pneg %p3257
      $region94: #{tpu_custom_call.1} parent=5 // pred_check_branch
        %3260 = sbr.rel (%p3258) target = $region96
      $region95: #{tpu_custom_call.1} parent=5 // pred_region
        %s3261 = ssub.s32 %s27, 2
        // Predicated region
        $region97: #{tpu_custom_call.1} parent=95 // pred_check
          %p3262 = pneg %p334
        $region98: #{tpu_custom_call.1} parent=95 // pred_check_branch
          %3264 = sbr.rel (%p3262) target = $region100
        $region99: #{tpu_custom_call.1} parent=95 // pred_region
          %s3265 = sand.u32 %s319, 1
          %s3266 = scalar_lea.sflag [#allocation4], %s3265
          %s3267 = sand.u32 %s319, 1
          %s3268 = smul.addr %s3267, 16
          %s3269 = scalar_lea.vmem [#allocation10], %s3268
          %3271 = dma.done %s3266, 256
        $region100: #{tpu_custom_call.1} parent=95 // pred_fallthru
          _
      $region96: #{tpu_custom_call.1} parent=5 // pred_fallthru
        _
    $region6: #{tpu_custom_call.1} parent=1 // loop_footer
      %s31 = sadd.s32 1, %s27
    $region7: #{tpu_custom_call.1} parent=1 // loop_footer_branch
      %26 = sbr.rel target = $region3
    $region8: #{tpu_custom_call.1} parent=1 // loop_exit
      _
    %3272 = vsyncpa [#allocation3], 1
    %s3273 = scalar_lea.sflag [#allocation3], 1
    %3274 = vsyncpa %s3273, 1
    %3275 = vsyncpa [#allocation6], 1
    %3276 = vsyncpa [#allocation9], 1
    %3277 = vsyncpa [#allocation4], 1
    %s3278 = scalar_lea.sflag [#allocation4], 1
    %3279 = vsyncpa %s3278, 1

</llo_original>
